<compile_context>
chip_gen: v6e
topology: v6e:2x2x1
jax: 0.10.0
libtpu: 0.0.40
codegen_flags: <defaults>
</compile_context>

<pallas_src>
import functools

import jax
import jax.numpy as jnp
from jax import lax
from jax.experimental import pallas as pl
from jax.experimental.pallas import tpu as pltpu


# ----------------------------- Pallas kernel ------------------------------- #

def _matmul_bias_kernel(a_ref, w_ref, b_ref, o_ref, acc_ref, *, apply_relu):
    """Tiled o = act(a @ w + bias); K is the innermost (reduction) grid axis."""
    @pl.when(pl.program_id(2) == 0)
    def _init():
        acc_ref[...] = jnp.zeros_like(acc_ref)

    acc_ref[...] += jnp.dot(a_ref[...], w_ref[...],
                            preferred_element_type=jnp.float32)

    @pl.when(pl.program_id(2) == pl.num_programs(2) - 1)
    def _finalize():
        y = acc_ref[...] + b_ref[...]          # f32 epilogue
        if apply_relu:
            y = jnp.maximum(y, 0.0)
        o_ref[...] = y.astype(o_ref.dtype)


def _round_up(x, m):
    return (x + m - 1) // m * m


def fused_matmul_bias(a, w, bias, *, apply_relu, out_dtype=jnp.float32,
                      tm=256, tn=512, tk=1024):
    """act((M,K) @ (K,N) + bias[N]) as a K/M/N-tiled Pallas TPU matmul.

    Operands are cast to bf16 (f32 accumulation on the MXU) and zero-padded to
    lane/sublane-aligned tile multiples; the result is sliced back to (M, N).
    """
    M, K = a.shape
    K2, N = w.shape
    assert K == K2, (K, K2)

    a = a.astype(jnp.bfloat16)
    w = w.astype(jnp.bfloat16)
    bias = bias.reshape(1, N).astype(jnp.float32)

    # Align: M -> 8 (sublanes), K/N -> 128 (lanes); then round up to tile grid.
    mp = _round_up(M, 8)
    kp = _round_up(K, 128)
    np_ = _round_up(N, 128)
    tm = min(tm, mp)
    tk = min(tk, kp)
    tn = min(tn, np_)
    mp = _round_up(mp, tm)
    kp = _round_up(kp, tk)
    np_ = _round_up(np_, tn)

    if (mp, kp) != (M, K):
        a = jnp.pad(a, ((0, mp - M), (0, kp - K)))
    if (kp, np_) != (K, N):
        w = jnp.pad(w, ((0, kp - K), (0, np_ - N)))
    if np_ != N:
        bias = jnp.pad(bias, ((0, 0), (0, np_ - N)))

    grid = (mp // tm, np_ // tn, kp // tk)
    kernel = functools.partial(_matmul_bias_kernel, apply_relu=apply_relu)
    out = pl.pallas_call(
        kernel,
        out_shape=jax.ShapeDtypeStruct((mp, np_), out_dtype),
        grid_spec=pltpu.PrefetchScalarGridSpec(
            num_scalar_prefetch=0,
            grid=grid,
            in_specs=[
                pl.BlockSpec((tm, tk), lambda i, j, k: (i, k)),
                pl.BlockSpec((tk, tn), lambda i, j, k: (k, j)),
                pl.BlockSpec((1, tn), lambda i, j, k: (0, j)),
            ],
            out_specs=pl.BlockSpec((tm, tn), lambda i, j, k: (i, j)),
            scratch_shapes=[pltpu.VMEM((tm, tn), jnp.float32)],
        ),
        compiler_params=pltpu.CompilerParams(
            dimension_semantics=("parallel", "parallel", "arbitrary"),
            vmem_limit_bytes=32 * 1024 * 1024,
        ),
    )(a, w, bias)
    return out[:M, :N]


# ------------------------------- JAX glue ---------------------------------- #

def _conv_out(s, k=5, stride=2):
    return (s - k) // stride + 1


def _im2col(x_nhwc, k, stride):
    """k x k patches with stride -> (N*Ho*Wo, k*k*C), (kh, kw, c) c-fastest."""
    N, H, W, C = x_nhwc.shape
    Ho = _conv_out(H, k, stride)
    Wo = _conv_out(W, k, stride)
    cols = []
    for kh in range(k):
        for kw in range(k):
            cols.append(x_nhwc[:, kh:kh + stride * (Ho - 1) + 1:stride,
                                  kw:kw + stride * (Wo - 1) + 1:stride, :])
    patches = jnp.concatenate(cols, axis=-1)           # (N, Ho, Wo, k*k*C) bf16
    return patches.reshape(N * Ho * Wo, k * k * C), Ho, Wo


def conv_bn_relu(x_nhwc, w_mat, bias, *, k=5, stride=2):
    """Conv2d(k=5, s=2, valid) + folded BatchNorm(eval) + ReLU as one matmul."""
    N = x_nhwc.shape[0]
    cout = w_mat.shape[1]
    patches, Ho, Wo = _im2col(x_nhwc, k, stride)
    y = fused_matmul_bias(patches, w_mat, bias, apply_relu=True,
                          out_dtype=jnp.bfloat16)
    return y.reshape(N, Ho, Wo, cout)


def convnet_forward(prep, x_nchw):
    x = jnp.transpose(x_nchw, (0, 2, 3, 1)).astype(jnp.bfloat16)   # NCHW->NHWC once
    x = conv_bn_relu(x, prep["conv1_w"], prep["conv1_b"])
    x = conv_bn_relu(x, prep["conv2_w"], prep["conv2_b"])
    x = conv_bn_relu(x, prep["conv3_w"], prep["conv3_b"])
    x = x.reshape(x.shape[0], -1)          # NHWC flatten; fc1 rows pre-permuted
    x = fused_matmul_bias(x, prep["fc1_w"], prep["fc1_b"], apply_relu=True,
                          out_dtype=jnp.bfloat16)
    x = fused_matmul_bias(x, prep["fc2_w"], prep["fc2_b"], apply_relu=False,
                          out_dtype=jnp.float32)
    return x


# --------------------------- one-time param prep ---------------------------- #

def _fold_conv_bn(w, b, gamma, beta, mean, var, eps=1e-5):
    """Fold eval-mode BN into the conv-as-matmul weight (bf16) and bias (f32)."""
    cout, cin, kh, kw = w.shape
    scale = gamma / jnp.sqrt(var + eps)                       # (Cout,)
    wm = jnp.transpose(w, (2, 3, 1, 0)).reshape(kh * kw * cin, cout)
    wm = wm * scale[None, :]
    bias = beta + scale * (b - mean)
    return wm.astype(jnp.bfloat16), bias.astype(jnp.float32)


def prepare_params(p, h3, w3, eps=1e-5):
    """Host-side one-time prep: BN fold, weight transposes/permutation, bf16."""
    prep = {}
    for i in (1, 2, 3):
        wm, bias = _fold_conv_bn(p[f"conv{i}_w"], p[f"conv{i}_b"],
                                 p[f"bn{i}_gamma"], p[f"bn{i}_beta"],
                                 p[f"bn{i}_mean"], p[f"bn{i}_var"], eps)
        prep[f"conv{i}_w"] = wm
        prep[f"conv{i}_b"] = bias
    # fc1: (512, C*H3*W3) over NCHW-flatten order -> (H3*W3*C, 512) rows in
    # NHWC-flatten order, removing the per-forward transpose before flatten.
    c3 = p["conv3_w"].shape[0]
    fc1_w = p["fc1_w"]
    out_dim = fc1_w.shape[0]
    fc1_w = fc1_w.reshape(out_dim, c3, h3, w3)
    fc1_w = jnp.transpose(fc1_w, (2, 3, 1, 0)).reshape(h3 * w3 * c3, out_dim)
    prep["fc1_w"] = fc1_w.astype(jnp.bfloat16)
    prep["fc1_b"] = p["fc1_b"].astype(jnp.float32)
    prep["fc2_w"] = jnp.transpose(p["fc2_w"], (1, 0)).astype(jnp.bfloat16)
    prep["fc2_b"] = p["fc2_b"].astype(jnp.float32)
    return prep


# ---------------------------- parameter init ------------------------------- #

def init_params(key, n_in, n_out, fc1_in):
    def uniform(k, shape, fan_in):
        bound = 1.0 / jnp.sqrt(float(fan_in))
        return jax.random.uniform(k, shape, jnp.float32, -bound, bound)

    keys = jax.random.split(key, 13)
    p = {}
    p["conv1_w"] = uniform(keys[0], (16, n_in, 5, 5), n_in * 25)
    p["conv1_b"] = uniform(keys[1], (16,), n_in * 25)
    p["conv2_w"] = uniform(keys[2], (32, 16, 5, 5), 16 * 25)
    p["conv2_b"] = uniform(keys[3], (32,), 16 * 25)
    p["conv3_w"] = uniform(keys[4], (32, 32, 5, 5), 32 * 25)
    p["conv3_b"] = uniform(keys[5], (32,), 32 * 25)
    p["fc1_w"] = uniform(keys[6], (512, fc1_in), fc1_in)
    p["fc1_b"] = uniform(keys[7], (512,), fc1_in)
    p["fc2_w"] = uniform(keys[8], (n_out, 512), 512)
    p["fc2_b"] = uniform(keys[9], (n_out,), 512)
    # Deterministic, non-trivial BatchNorm parameters / running stats.
    for i, c in zip((1, 2, 3), (16, 32, 32)):
        kk = jax.random.split(keys[9 + i], 4)
        p[f"bn{i}_gamma"] = 1.0 + 0.1 * jax.random.normal(kk[0], (c,), jnp.float32)
        p[f"bn{i}_beta"] = 0.1 * jax.random.normal(kk[1], (c,), jnp.float32)
        p[f"bn{i}_mean"] = 0.1 * jax.random.normal(kk[2], (c,), jnp.float32)
        p[f"bn{i}_var"] = 1.0 + 0.1 * jax.random.uniform(kk[3], (c,), jnp.float32)
    return p


# -------------------------- f32 XLA reference ------------------------------- #

def reference_forward(params, x_nchw, eps=1e-5):
    def conv_bn(h, i):
        w = params[f"conv{i}_w"]
        b = params[f"conv{i}_b"]
        y = lax.conv_general_dilated(h, w, window_strides=(2, 2), padding="VALID",
                                     dimension_numbers=("NCHW", "OIHW", "NCHW"))
        y = y + b[None, :, None, None]
        g = params[f"bn{i}_gamma"][None, :, None, None]
        bt = params[f"bn{i}_beta"][None, :, None, None]
        m = params[f"bn{i}_mean"][None, :, None, None]
        v = params[f"bn{i}_var"][None, :, None, None]
        y = g * (y - m) / jnp.sqrt(v + eps) + bt
        return jnp.maximum(y, 0.0)

    y = conv_bn(x_nchw, 1)
    y = conv_bn(y, 2)
    y = conv_bn(y, 3)
    y = y.reshape(y.shape[0], -1)                       # NCHW flatten (torch view)
    y = jnp.maximum(y @ params["fc1_w"].T + params["fc1_b"], 0.0)
    y = y @ params["fc2_w"].T + params["fc2_b"]
    return y


# --------------------------------- main ------------------------------------ #

if __name__ == "__main__":
    batch, n_in, n_out = 2, 4, 6
    H = W = 40                                    # small spatial size
    h1, w1 = _conv_out(H), _conv_out(W)
    h2, w2 = _conv_out(h1), _conv_out(w1)
    h3, w3 = _conv_out(h2), _conv_out(w2)
    fc1_in = 32 * h3 * w3                         # (29600 in the original module)

    key = jax.random.PRNGKey(0)
    k_x, k_p = jax.random.split(key)
    x = jax.random.normal(k_x, (batch, n_in, H, W), jnp.float32)   # NCHW input
    params = init_params(k_p, n_in, n_out, fc1_in)
    prep = prepare_params(params, h3, w3)         # one-time fold/transpose/cast

    fwd = jax.jit(convnet_forward)
    out = jax.block_until_ready(fwd(prep, x))

    assert out.shape == (batch, n_out), out.shape
    assert bool(jnp.all(jnp.isfinite(out)))

    # Loose sanity check vs. an f32 XLA reference (bf16 MXU operands drift a bit).
    ref = reference_forward(params, x)
    err = float(jnp.max(jnp.abs(out.astype(jnp.float32) - ref)))
    scale = float(jnp.max(jnp.abs(ref))) + 1e-6
    assert err / scale < 0.1, (err, scale)

    print("KERNEL_OK")
</pallas_src>

<mosaic_0001>
module attributes {stable_mosaic.version = 11 : i64} {
  func.func @_matmul_bias_kernel(%arg0: i32, %arg1: i32, %arg2: i32, %arg3: memref<256x128xbf16, #tpu.memory_space<vmem>>, %arg4: memref<128x128xbf16, #tpu.memory_space<vmem>>, %arg5: memref<1x128xf32, #tpu.memory_space<vmem>>, %arg6: memref<256x128xbf16, #tpu.memory_space<vmem>>, %arg7: memref<256x128xf32, #tpu.memory_space<vmem>>) attributes {dimension_semantics = [#tpu.dimension_semantics<parallel>, #tpu.dimension_semantics<parallel>, #tpu.dimension_semantics<arbitrary>], iteration_bounds = array<i64: 3, 1, 1>, scalar_prefetch = 0 : i64, scratch_operands = 1 : i64, tpu.core_type = #tpu.core_type<tc>, window_params = [{transform_indices = @transform_0, window_bounds = array<i64: 256, 128>}, {transform_indices = @transform_1, window_bounds = array<i64: 128, 128>}, {transform_indices = @transform_2, window_bounds = array<i64: 1, 128>}, {transform_indices = @transform_3, window_bounds = array<i64: 256, 128>}]} {
    %c0_i32 = arith.constant 0 : i32
    %0 = arith.cmpi eq, %arg2, %c0_i32 : i32
    %1 = arith.extui %0 : i1 to i32
    %c0_i32_0 = arith.constant 0 : i32
    %2 = arith.cmpi ne, %1, %c0_i32_0 : i32
    scf.if %2 {
      %cst_10 = arith.constant 0.000000e+00 : f32
      %12 = vector.broadcast %cst_10 : f32 to vector<256x128xf32>
      %c0_11 = arith.constant 0 : index
      %c0_12 = arith.constant 0 : index
      %13 = vector.load %arg7[%c0_11, %c0_12] : memref<256x128xf32, #tpu.memory_space<vmem>>, vector<256x128xf32>
      tpu.vector_store %arg7[%c0_11, %c0_12], %12 {strides = array<i32>} : memref<256x128xf32, #tpu.memory_space<vmem>>, vector<256x128xf32>,
    } else {
    }
    %c0 = arith.constant 0 : index
    %c0_1 = arith.constant 0 : index
    %3 = vector.load %arg7[%c0, %c0_1] : memref<256x128xf32, #tpu.memory_space<vmem>>, vector<256x128xf32>
    %c0_2 = arith.constant 0 : index
    %c0_3 = arith.constant 0 : index
    %4 = vector.load %arg3[%c0_2, %c0_3] : memref<256x128xbf16, #tpu.memory_space<vmem>>, vector<256x128xbf16>
    %c0_4 = arith.constant 0 : index
    %c0_5 = arith.constant 0 : index
    %5 = vector.load %arg4[%c0_4, %c0_5] : memref<128x128xbf16, #tpu.memory_space<vmem>>, vector<128x128xbf16>
    %cst = arith.constant dense<0.000000e+00> : vector<256x128xf32>
    %6 = tpu.matmul %4, %5, %cst {dimension_numbers = #tpu.dot_dimension_numbers<[1], [0], [0], [1], [0, 0, 1, 1], [], []>} : vector<256x128xbf16>, vector<128x128xbf16>, vector<256x128xf32> -> vector<256x128xf32>
    %7 = arith.addf %3, %6 : vector<256x128xf32>
    %c0_6 = arith.constant 0 : index
    %c0_7 = arith.constant 0 : index
    %8 = vector.load %arg7[%c0_6, %c0_7] : memref<256x128xf32, #tpu.memory_space<vmem>>, vector<256x128xf32>
    tpu.vector_store %arg7[%c0_6, %c0_7], %7 {strides = array<i32>} : memref<256x128xf32, #tpu.memory_space<vmem>>, vector<256x128xf32>,
    %c0_i32_8 = arith.constant 0 : i32
    %9 = arith.cmpi eq, %arg2, %c0_i32_8 : i32
    %10 = arith.extui %9 : i1 to i32
    %c0_i32_9 = arith.constant 0 : i32
    %11 = arith.cmpi ne, %10, %c0_i32_9 : i32
    scf.if %11 {
      %c0_10 = arith.constant 0 : index
      %c0_11 = arith.constant 0 : index
      %12 = vector.load %arg7[%c0_10, %c0_11] : memref<256x128xf32, #tpu.memory_space<vmem>>, vector<256x128xf32>
      %c0_12 = arith.constant 0 : index
      %c0_13 = arith.constant 0 : index
      %13 = vector.load %arg5[%c0_12, %c0_13] : memref<1x128xf32, #tpu.memory_space<vmem>>, vector<1x128xf32>
      %14 = vector.broadcast %13 : vector<1x128xf32> to vector<256x128xf32>
      %15 = arith.addf %12, %14 : vector<256x128xf32>
      %cst_14 = arith.constant 0.000000e+00 : f32
      %16 = vector.broadcast %cst_14 : f32 to vector<256x128xf32>
      %17 = arith.maximumf %15, %16 : vector<256x128xf32>
      %18 = arith.truncf %17 : vector<256x128xf32> to vector<256x128xbf16>
      %c0_15 = arith.constant 0 : index
      %c0_16 = arith.constant 0 : index
      %19 = vector.load %arg6[%c0_15, %c0_16] : memref<256x128xbf16, #tpu.memory_space<vmem>>, vector<256x128xbf16>
      tpu.vector_store %arg6[%c0_15, %c0_16], %18 {strides = array<i32>} : memref<256x128xbf16, #tpu.memory_space<vmem>>, vector<256x128xbf16>,
    } else {
    }
    return
  }
  func.func @transform_0(%arg0: i32, %arg1: i32, %arg2: i32) -> (i32, i32) {
    %c0_i32 = arith.constant 0 : i32
    return %arg0, %arg2 : i32, i32
  }
  func.func @transform_1(%arg0: i32, %arg1: i32, %arg2: i32) -> (i32, i32) {
    %c0_i32 = arith.constant 0 : i32
    return %arg2, %arg1 : i32, i32
  }
  func.func @transform_2(%arg0: i32, %arg1: i32, %arg2: i32) -> (i32, i32) {
    %c0_i32 = arith.constant 0 : i32
    %c0_i32_0 = arith.constant 0 : i32
    return %c0_i32, %arg1 : i32, i32
  }
  func.func @transform_3(%arg0: i32, %arg1: i32, %arg2: i32) -> (i32, i32) {
    %c0_i32 = arith.constant 0 : i32
    return %arg0, %arg1 : i32, i32
  }
}

module attributes {stable_mosaic.version = 11 : i64} {
  func.func @_matmul_bias_kernel(%arg0: i32, %arg1: i32, %arg2: i32, %arg3: memref<104x512xbf16, #tpu.memory_space<vmem>>, %arg4: memref<512x128xbf16, #tpu.memory_space<vmem>>, %arg5: memref<1x128xf32, #tpu.memory_space<vmem>>, %arg6: memref<104x128xbf16, #tpu.memory_space<vmem>>, %arg7: memref<104x128xf32, #tpu.memory_space<vmem>>) attributes {dimension_semantics = [#tpu.dimension_semantics<parallel>, #tpu.dimension_semantics<parallel>, #tpu.dimension_semantics<arbitrary>], iteration_bounds = array<i64: 1, 1, 1>, scalar_prefetch = 0 : i64, scratch_operands = 1 : i64, tpu.core_type = #tpu.core_type<tc>, window_params = [{transform_indices = @transform_0, window_bounds = array<i64: 104, 512>}, {transform_indices = @transform_1, window_bounds = array<i64: 512, 128>}, {transform_indices = @transform_2, window_bounds = array<i64: 1, 128>}, {transform_indices = @transform_3, window_bounds = array<i64: 104, 128>}]} {
    %c0_i32 = arith.constant 0 : i32
    %0 = arith.cmpi eq, %arg2, %c0_i32 : i32
    %1 = arith.extui %0 : i1 to i32
    %c0_i32_0 = arith.constant 0 : i32
    %2 = arith.cmpi ne, %1, %c0_i32_0 : i32
    scf.if %2 {
      %cst_10 = arith.constant 0.000000e+00 : f32
      %12 = vector.broadcast %cst_10 : f32 to vector<104x128xf32>
      %c0_11 = arith.constant 0 : index
      %c0_12 = arith.constant 0 : index
      %13 = vector.load %arg7[%c0_11, %c0_12] : memref<104x128xf32, #tpu.memory_space<vmem>>, vector<104x128xf32>
      tpu.vector_store %arg7[%c0_11, %c0_12], %12 {strides = array<i32>} : memref<104x128xf32, #tpu.memory_space<vmem>>, vector<104x128xf32>,
    } else {
    }
    %c0 = arith.constant 0 : index
    %c0_1 = arith.constant 0 : index
    %3 = vector.load %arg7[%c0, %c0_1] : memref<104x128xf32, #tpu.memory_space<vmem>>, vector<104x128xf32>
    %c0_2 = arith.constant 0 : index
    %c0_3 = arith.constant 0 : index
    %4 = vector.load %arg3[%c0_2, %c0_3] : memref<104x512xbf16, #tpu.memory_space<vmem>>, vector<104x512xbf16>
    %c0_4 = arith.constant 0 : index
    %c0_5 = arith.constant 0 : index
    %5 = vector.load %arg4[%c0_4, %c0_5] : memref<512x128xbf16, #tpu.memory_space<vmem>>, vector<512x128xbf16>
    %cst = arith.constant dense<0.000000e+00> : vector<104x128xf32>
    %6 = tpu.matmul %4, %5, %cst {dimension_numbers = #tpu.dot_dimension_numbers<[1], [0], [0], [1], [0, 0, 1, 1], [], []>} : vector<104x512xbf16>, vector<512x128xbf16>, vector<104x128xf32> -> vector<104x128xf32>
    %7 = arith.addf %3, %6 : vector<104x128xf32>
    %c0_6 = arith.constant 0 : index
    %c0_7 = arith.constant 0 : index
    %8 = vector.load %arg7[%c0_6, %c0_7] : memref<104x128xf32, #tpu.memory_space<vmem>>, vector<104x128xf32>
    tpu.vector_store %arg7[%c0_6, %c0_7], %7 {strides = array<i32>} : memref<104x128xf32, #tpu.memory_space<vmem>>, vector<104x128xf32>,
    %c0_i32_8 = arith.constant 0 : i32
    %9 = arith.cmpi eq, %arg2, %c0_i32_8 : i32
    %10 = arith.extui %9 : i1 to i32
    %c0_i32_9 = arith.constant 0 : i32
    %11 = arith.cmpi ne, %10, %c0_i32_9 : i32
    scf.if %11 {
      %c0_10 = arith.constant 0 : index
      %c0_11 = arith.constant 0 : index
      %12 = vector.load %arg7[%c0_10, %c0_11] : memref<104x128xf32, #tpu.memory_space<vmem>>, vector<104x128xf32>
      %c0_12 = arith.constant 0 : index
      %c0_13 = arith.constant 0 : index
      %13 = vector.load %arg5[%c0_12, %c0_13] : memref<1x128xf32, #tpu.memory_space<vmem>>, vector<1x128xf32>
      %14 = vector.broadcast %13 : vector<1x128xf32> to vector<104x128xf32>
      %15 = arith.addf %12, %14 : vector<104x128xf32>
      %cst_14 = arith.constant 0.000000e+00 : f32
      %16 = vector.broadcast %cst_14 : f32 to vector<104x128xf32>
      %17 = arith.maximumf %15, %16 : vector<104x128xf32>
      %18 = arith.truncf %17 : vector<104x128xf32> to vector<104x128xbf16>
      %c0_15 = arith.constant 0 : index
      %c0_16 = arith.constant 0 : index
      %19 = vector.load %arg6[%c0_15, %c0_16] : memref<104x128xbf16, #tpu.memory_space<vmem>>, vector<104x128xbf16>
      tpu.vector_store %arg6[%c0_15, %c0_16], %18 {strides = array<i32>} : memref<104x128xbf16, #tpu.memory_space<vmem>>, vector<104x128xbf16>,
    } else {
    }
    return
  }
  func.func @transform_0(%arg0: i32, %arg1: i32, %arg2: i32) -> (i32, i32) {
    %c0_i32 = arith.constant 0 : i32
    return %arg0, %arg2 : i32, i32
  }
  func.func @transform_1(%arg0: i32, %arg1: i32, %arg2: i32) -> (i32, i32) {
    %c0_i32 = arith.constant 0 : i32
    return %arg2, %arg1 : i32, i32
  }
  func.func @transform_2(%arg0: i32, %arg1: i32, %arg2: i32) -> (i32, i32) {
    %c0_i32 = arith.constant 0 : i32
    %c0_i32_0 = arith.constant 0 : i32
    return %c0_i32, %arg1 : i32, i32
  }
  func.func @transform_3(%arg0: i32, %arg1: i32, %arg2: i32) -> (i32, i32) {
    %c0_i32 = arith.constant 0 : i32
    return %arg0, %arg1 : i32, i32
  }
}

module attributes {stable_mosaic.version = 11 : i64} {
  func.func @_matmul_bias_kernel(%arg0: i32, %arg1: i32, %arg2: i32, %arg3: memref<8x896xbf16, #tpu.memory_space<vmem>>, %arg4: memref<896x128xbf16, #tpu.memory_space<vmem>>, %arg5: memref<1x128xf32, #tpu.memory_space<vmem>>, %arg6: memref<8x128xbf16, #tpu.memory_space<vmem>>, %arg7: memref<8x128xf32, #tpu.memory_space<vmem>>) attributes {dimension_semantics = [#tpu.dimension_semantics<parallel>, #tpu.dimension_semantics<parallel>, #tpu.dimension_semantics<arbitrary>], iteration_bounds = array<i64: 1, 1, 1>, scalar_prefetch = 0 : i64, scratch_operands = 1 : i64, tpu.core_type = #tpu.core_type<tc>, window_params = [{transform_indices = @transform_0, window_bounds = array<i64: 8, 896>}, {transform_indices = @transform_1, window_bounds = array<i64: 896, 128>}, {transform_indices = @transform_2, window_bounds = array<i64: 1, 128>}, {transform_indices = @transform_3, window_bounds = array<i64: 8, 128>}]} {
    %c0_i32 = arith.constant 0 : i32
    %0 = arith.cmpi eq, %arg2, %c0_i32 : i32
    %1 = arith.extui %0 : i1 to i32
    %c0_i32_0 = arith.constant 0 : i32
    %2 = arith.cmpi ne, %1, %c0_i32_0 : i32
    scf.if %2 {
      %cst_10 = arith.constant 0.000000e+00 : f32
      %12 = vector.broadcast %cst_10 : f32 to vector<8x128xf32>
      %c0_11 = arith.constant 0 : index
      %c0_12 = arith.constant 0 : index
      %13 = vector.load %arg7[%c0_11, %c0_12] : memref<8x128xf32, #tpu.memory_space<vmem>>, vector<8x128xf32>
      tpu.vector_store %arg7[%c0_11, %c0_12], %12 {strides = array<i32>} : memref<8x128xf32, #tpu.memory_space<vmem>>, vector<8x128xf32>,
    } else {
    }
    %c0 = arith.constant 0 : index
    %c0_1 = arith.constant 0 : index
    %3 = vector.load %arg7[%c0, %c0_1] : memref<8x128xf32, #tpu.memory_space<vmem>>, vector<8x128xf32>
    %c0_2 = arith.constant 0 : index
    %c0_3 = arith.constant 0 : index
    %4 = vector.load %arg3[%c0_2, %c0_3] : memref<8x896xbf16, #tpu.memory_space<vmem>>, vector<8x896xbf16>
    %c0_4 = arith.constant 0 : index
    %c0_5 = arith.constant 0 : index
    %5 = vector.load %arg4[%c0_4, %c0_5] : memref<896x128xbf16, #tpu.memory_space<vmem>>, vector<896x128xbf16>
    %cst = arith.constant dense<0.000000e+00> : vector<8x128xf32>
    %6 = tpu.matmul %4, %5, %cst {dimension_numbers = #tpu.dot_dimension_numbers<[1], [0], [0], [1], [0, 0, 1, 1], [], []>} : vector<8x896xbf16>, vector<896x128xbf16>, vector<8x128xf32> -> vector<8x128xf32>
    %7 = arith.addf %3, %6 : vector<8x128xf32>
    %c0_6 = arith.constant 0 : index
    %c0_7 = arith.constant 0 : index
    %8 = vector.load %arg7[%c0_6, %c0_7] : memref<8x128xf32, #tpu.memory_space<vmem>>, vector<8x128xf32>
    tpu.vector_store %arg7[%c0_6, %c0_7], %7 {strides = array<i32>} : memref<8x128xf32, #tpu.memory_space<vmem>>, vector<8x128xf32>,
    %c0_i32_8 = arith.constant 0 : i32
    %9 = arith.cmpi eq, %arg2, %c0_i32_8 : i32
    %10 = arith.extui %9 : i1 to i32
    %c0_i32_9 = arith.constant 0 : i32
    %11 = arith.cmpi ne, %10, %c0_i32_9 : i32
    scf.if %11 {
      %c0_10 = arith.constant 0 : index
      %c0_11 = arith.constant 0 : index
      %12 = vector.load %arg7[%c0_10, %c0_11] : memref<8x128xf32, #tpu.memory_space<vmem>>, vector<8x128xf32>
      %c0_12 = arith.constant 0 : index
      %c0_13 = arith.constant 0 : index
      %13 = vector.load %arg5[%c0_12, %c0_13] : memref<1x128xf32, #tpu.memory_space<vmem>>, vector<1x128xf32>
      %14 = vector.broadcast %13 : vector<1x128xf32> to vector<8x128xf32>
      %15 = arith.addf %12, %14 : vector<8x128xf32>
      %cst_14 = arith.constant 0.000000e+00 : f32
      %16 = vector.broadcast %cst_14 : f32 to vector<8x128xf32>
      %17 = arith.maximumf %15, %16 : vector<8x128xf32>
      %18 = arith.truncf %17 : vector<8x128xf32> to vector<8x128xbf16>
      %c0_15 = arith.constant 0 : index
      %c0_16 = arith.constant 0 : index
      %19 = vector.load %arg6[%c0_15, %c0_16] : memref<8x128xbf16, #tpu.memory_space<vmem>>, vector<8x128xbf16>
      tpu.vector_store %arg6[%c0_15, %c0_16], %18 {strides = array<i32>} : memref<8x128xbf16, #tpu.memory_space<vmem>>, vector<8x128xbf16>,
    } else {
    }
    return
  }
  func.func @transform_0(%arg0: i32, %arg1: i32, %arg2: i32) -> (i32, i32) {
    %c0_i32 = arith.constant 0 : i32
    return %arg0, %arg2 : i32, i32
  }
  func.func @transform_1(%arg0: i32, %arg1: i32, %arg2: i32) -> (i32, i32) {
    %c0_i32 = arith.constant 0 : i32
    return %arg2, %arg1 : i32, i32
  }
  func.func @transform_2(%arg0: i32, %arg1: i32, %arg2: i32) -> (i32, i32) {
    %c0_i32 = arith.constant 0 : i32
    %c0_i32_0 = arith.constant 0 : i32
    return %c0_i32, %arg1 : i32, i32
  }
  func.func @transform_3(%arg0: i32, %arg1: i32, %arg2: i32) -> (i32, i32) {
    %c0_i32 = arith.constant 0 : i32
    return %arg0, %arg1 : i32, i32
  }
}

module attributes {stable_mosaic.version = 11 : i64} {
  func.func @_matmul_bias_kernel(%arg0: i32, %arg1: i32, %arg2: i32, %arg3: memref<8x128xbf16, #tpu.memory_space<vmem>>, %arg4: memref<128x512xbf16, #tpu.memory_space<vmem>>, %arg5: memref<1x512xf32, #tpu.memory_space<vmem>>, %arg6: memref<8x512xbf16, #tpu.memory_space<vmem>>, %arg7: memref<8x512xf32, #tpu.memory_space<vmem>>) attributes {dimension_semantics = [#tpu.dimension_semantics<parallel>, #tpu.dimension_semantics<parallel>, #tpu.dimension_semantics<arbitrary>], iteration_bounds = array<i64: 1, 1, 1>, scalar_prefetch = 0 : i64, scratch_operands = 1 : i64, tpu.core_type = #tpu.core_type<tc>, window_params = [{transform_indices = @transform_0, window_bounds = array<i64: 8, 128>}, {transform_indices = @transform_1, window_bounds = array<i64: 128, 512>}, {transform_indices = @transform_2, window_bounds = array<i64: 1, 512>}, {transform_indices = @transform_3, window_bounds = array<i64: 8, 512>}]} {
    %c0_i32 = arith.constant 0 : i32
    %0 = arith.cmpi eq, %arg2, %c0_i32 : i32
    %1 = arith.extui %0 : i1 to i32
    %c0_i32_0 = arith.constant 0 : i32
    %2 = arith.cmpi ne, %1, %c0_i32_0 : i32
    scf.if %2 {
      %cst_10 = arith.constant 0.000000e+00 : f32
      %12 = vector.broadcast %cst_10 : f32 to vector<8x512xf32>
      %c0_11 = arith.constant 0 : index
      %c0_12 = arith.constant 0 : index
      %13 = vector.load %arg7[%c0_11, %c0_12] : memref<8x512xf32, #tpu.memory_space<vmem>>, vector<8x512xf32>
      tpu.vector_store %arg7[%c0_11, %c0_12], %12 {strides = array<i32>} : memref<8x512xf32, #tpu.memory_space<vmem>>, vector<8x512xf32>,
    } else {
    }
    %c0 = arith.constant 0 : index
    %c0_1 = arith.constant 0 : index
    %3 = vector.load %arg7[%c0, %c0_1] : memref<8x512xf32, #tpu.memory_space<vmem>>, vector<8x512xf32>
    %c0_2 = arith.constant 0 : index
    %c0_3 = arith.constant 0 : index
    %4 = vector.load %arg3[%c0_2, %c0_3] : memref<8x128xbf16, #tpu.memory_space<vmem>>, vector<8x128xbf16>
    %c0_4 = arith.constant 0 : index
    %c0_5 = arith.constant 0 : index
    %5 = vector.load %arg4[%c0_4, %c0_5] : memref<128x512xbf16, #tpu.memory_space<vmem>>, vector<128x512xbf16>
    %cst = arith.constant dense<0.000000e+00> : vector<8x512xf32>
    %6 = tpu.matmul %4, %5, %cst {dimension_numbers = #tpu.dot_dimension_numbers<[1], [0], [0], [1], [0, 0, 1, 1], [], []>} : vector<8x128xbf16>, vector<128x512xbf16>, vector<8x512xf32> -> vector<8x512xf32>
    %7 = arith.addf %3, %6 : vector<8x512xf32>
    %c0_6 = arith.constant 0 : index
    %c0_7 = arith.constant 0 : index
    %8 = vector.load %arg7[%c0_6, %c0_7] : memref<8x512xf32, #tpu.memory_space<vmem>>, vector<8x512xf32>
    tpu.vector_store %arg7[%c0_6, %c0_7], %7 {strides = array<i32>} : memref<8x512xf32, #tpu.memory_space<vmem>>, vector<8x512xf32>,
    %c0_i32_8 = arith.constant 0 : i32
    %9 = arith.cmpi eq, %arg2, %c0_i32_8 : i32
    %10 = arith.extui %9 : i1 to i32
    %c0_i32_9 = arith.constant 0 : i32
    %11 = arith.cmpi ne, %10, %c0_i32_9 : i32
    scf.if %11 {
      %c0_10 = arith.constant 0 : index
      %c0_11 = arith.constant 0 : index
      %12 = vector.load %arg7[%c0_10, %c0_11] : memref<8x512xf32, #tpu.memory_space<vmem>>, vector<8x512xf32>
      %c0_12 = arith.constant 0 : index
      %c0_13 = arith.constant 0 : index
      %13 = vector.load %arg5[%c0_12, %c0_13] : memref<1x512xf32, #tpu.memory_space<vmem>>, vector<1x512xf32>
      %14 = vector.broadcast %13 : vector<1x512xf32> to vector<8x512xf32>
      %15 = arith.addf %12, %14 : vector<8x512xf32>
      %cst_14 = arith.constant 0.000000e+00 : f32
      %16 = vector.broadcast %cst_14 : f32 to vector<8x512xf32>
      %17 = arith.maximumf %15, %16 : vector<8x512xf32>
      %18 = arith.truncf %17 : vector<8x512xf32> to vector<8x512xbf16>
      %c0_15 = arith.constant 0 : index
      %c0_16 = arith.constant 0 : index
      %19 = vector.load %arg6[%c0_15, %c0_16] : memref<8x512xbf16, #tpu.memory_space<vmem>>, vector<8x512xbf16>
      tpu.vector_store %arg6[%c0_15, %c0_16], %18 {strides = array<i32>} : memref<8x512xbf16, #tpu.memory_space<vmem>>, vector<8x512xbf16>,
    } else {
    }
    return
  }
  func.func @transform_0(%arg0: i32, %arg1: i32, %arg2: i32) -> (i32, i32) {
    %c0_i32 = arith.constant 0 : i32
    return %arg0, %arg2 : i32, i32
  }
  func.func @transform_1(%arg0: i32, %arg1: i32, %arg2: i32) -> (i32, i32) {
    %c0_i32 = arith.constant 0 : i32
    return %arg2, %arg1 : i32, i32
  }
  func.func @transform_2(%arg0: i32, %arg1: i32, %arg2: i32) -> (i32, i32) {
    %c0_i32 = arith.constant 0 : i32
    %c0_i32_0 = arith.constant 0 : i32
    return %c0_i32, %arg1 : i32, i32
  }
  func.func @transform_3(%arg0: i32, %arg1: i32, %arg2: i32) -> (i32, i32) {
    %c0_i32 = arith.constant 0 : i32
    return %arg0, %arg1 : i32, i32
  }
}

module attributes {stable_mosaic.version = 11 : i64} {
  func.func @_matmul_bias_kernel(%arg0: i32, %arg1: i32, %arg2: i32, %arg3: memref<8x512xbf16, #tpu.memory_space<vmem>>, %arg4: memref<512x128xbf16, #tpu.memory_space<vmem>>, %arg5: memref<1x128xf32, #tpu.memory_space<vmem>>, %arg6: memref<8x128xf32, #tpu.memory_space<vmem>>, %arg7: memref<8x128xf32, #tpu.memory_space<vmem>>) attributes {dimension_semantics = [#tpu.dimension_semantics<parallel>, #tpu.dimension_semantics<parallel>, #tpu.dimension_semantics<arbitrary>], iteration_bounds = array<i64: 1, 1, 1>, scalar_prefetch = 0 : i64, scratch_operands = 1 : i64, tpu.core_type = #tpu.core_type<tc>, window_params = [{transform_indices = @transform_0, window_bounds = array<i64: 8, 512>}, {transform_indices = @transform_1, window_bounds = array<i64: 512, 128>}, {transform_indices = @transform_2, window_bounds = array<i64: 1, 128>}, {transform_indices = @transform_3, window_bounds = array<i64: 8, 128>}]} {
    %c0_i32 = arith.constant 0 : i32
    %0 = arith.cmpi eq, %arg2, %c0_i32 : i32
    %1 = arith.extui %0 : i1 to i32
    %c0_i32_0 = arith.constant 0 : i32
    %2 = arith.cmpi ne, %1, %c0_i32_0 : i32
    scf.if %2 {
      %cst_10 = arith.constant 0.000000e+00 : f32
      %12 = vector.broadcast %cst_10 : f32 to vector<8x128xf32>
      %c0_11 = arith.constant 0 : index
      %c0_12 = arith.constant 0 : index
      %13 = vector.load %arg7[%c0_11, %c0_12] : memref<8x128xf32, #tpu.memory_space<vmem>>, vector<8x128xf32>
      tpu.vector_store %arg7[%c0_11, %c0_12], %12 {strides = array<i32>} : memref<8x128xf32, #tpu.memory_space<vmem>>, vector<8x128xf32>,
    } else {
    }
    %c0 = arith.constant 0 : index
    %c0_1 = arith.constant 0 : index
    %3 = vector.load %arg7[%c0, %c0_1] : memref<8x128xf32, #tpu.memory_space<vmem>>, vector<8x128xf32>
    %c0_2 = arith.constant 0 : index
    %c0_3 = arith.constant 0 : index
    %4 = vector.load %arg3[%c0_2, %c0_3] : memref<8x512xbf16, #tpu.memory_space<vmem>>, vector<8x512xbf16>
    %c0_4 = arith.constant 0 : index
    %c0_5 = arith.constant 0 : index
    %5 = vector.load %arg4[%c0_4, %c0_5] : memref<512x128xbf16, #tpu.memory_space<vmem>>, vector<512x128xbf16>
    %cst = arith.constant dense<0.000000e+00> : vector<8x128xf32>
    %6 = tpu.matmul %4, %5, %cst {dimension_numbers = #tpu.dot_dimension_numbers<[1], [0], [0], [1], [0, 0, 1, 1], [], []>} : vector<8x512xbf16>, vector<512x128xbf16>, vector<8x128xf32> -> vector<8x128xf32>
    %7 = arith.addf %3, %6 : vector<8x128xf32>
    %c0_6 = arith.constant 0 : index
    %c0_7 = arith.constant 0 : index
    %8 = vector.load %arg7[%c0_6, %c0_7] : memref<8x128xf32, #tpu.memory_space<vmem>>, vector<8x128xf32>
    tpu.vector_store %arg7[%c0_6, %c0_7], %7 {strides = array<i32>} : memref<8x128xf32, #tpu.memory_space<vmem>>, vector<8x128xf32>,
    %c0_i32_8 = arith.constant 0 : i32
    %9 = arith.cmpi eq, %arg2, %c0_i32_8 : i32
    %10 = arith.extui %9 : i1 to i32
    %c0_i32_9 = arith.constant 0 : i32
    %11 = arith.cmpi ne, %10, %c0_i32_9 : i32
    scf.if %11 {
      %c0_10 = arith.constant 0 : index
      %c0_11 = arith.constant 0 : index
      %12 = vector.load %arg7[%c0_10, %c0_11] : memref<8x128xf32, #tpu.memory_space<vmem>>, vector<8x128xf32>
      %c0_12 = arith.constant 0 : index
      %c0_13 = arith.constant 0 : index
      %13 = vector.load %arg5[%c0_12, %c0_13] : memref<1x128xf32, #tpu.memory_space<vmem>>, vector<1x128xf32>
      %14 = vector.broadcast %13 : vector<1x128xf32> to vector<8x128xf32>
      %15 = arith.addf %12, %14 : vector<8x128xf32>
      %c0_14 = arith.constant 0 : index
      %c0_15 = arith.constant 0 : index
      %16 = vector.load %arg6[%c0_14, %c0_15] : memref<8x128xf32, #tpu.memory_space<vmem>>, vector<8x128xf32>
      tpu.vector_store %arg6[%c0_14, %c0_15], %15 {strides = array<i32>} : memref<8x128xf32, #tpu.memory_space<vmem>>, vector<8x128xf32>,
    } else {
    }
    return
  }
  func.func @transform_0(%arg0: i32, %arg1: i32, %arg2: i32) -> (i32, i32) {
    %c0_i32 = arith.constant 0 : i32
    return %arg0, %arg2 : i32, i32
  }
  func.func @transform_1(%arg0: i32, %arg1: i32, %arg2: i32) -> (i32, i32) {
    %c0_i32 = arith.constant 0 : i32
    return %arg2, %arg1 : i32, i32
  }
  func.func @transform_2(%arg0: i32, %arg1: i32, %arg2: i32) -> (i32, i32) {
    %c0_i32 = arith.constant 0 : i32
    %c0_i32_0 = arith.constant 0 : i32
    return %c0_i32, %arg1 : i32, i32
  }
  func.func @transform_3(%arg0: i32, %arg1: i32, %arg2: i32) -> (i32, i32) {
    %c0_i32 = arith.constant 0 : i32
    return %arg0, %arg1 : i32, i32
  }
}

</mosaic_0001>

<llo_original>
// kernel: convnet_forward.5
$region0: #{convnet_forward.5}
  #allocation0 [shape = 'u32[]', space=smem, size = 0x4, offset = 0x4, fixed_abs, tag = 'smem constant byte address 0x4 - core index']
  #allocation1 [shape = 'u32[144,128]{1,0:T(1,128)}', space=vmem, size = 0x12000, scoped, tag = 'internal scratch']
  #allocation2 [shape = 'f32[256,128]{1,0:T(8,128)}', space=vmem, size = 0x20000, scoped, tag = 'scratch operand']
  %s0 = inlined_call_operand.vmem [shape: bf16[768,128], index: 0, kind: input, shape index: {}]
  %s1 = inlined_call_operand.vmem [shape: bf16[128,128], index: 1, kind: input, shape index: {}]
  %s2 = inlined_call_operand.vmem [shape: f32[1,128], index: 2, kind: input, shape index: {}]
  %s3 = inlined_call_operand.vmem [shape: bf16[768,128], index: 3, kind: output, shape index: {}]
  %s4 = sld [smem:[#allocation0]]
  $region53: #{convnet_forward.5} parent=0
    _
  %s6 = ssub.s32 1, %s4
  %s7 = scalar_select 0, %s6, %s4
  loop: start=0, step=1, limit=5
  $region2: #{convnet_forward.5} parent=0 // loop_pre_header
    _
  $region3: #{convnet_forward.5} parent=0 // loop_header
    %s9 = sphi 0, %s13
    %p10 = scmp.ge.s32.totalorder %s9, 5
    %s16 = sphi 0, %s35
    %s17 = sphi 0, %s31
    %s18 = sphi 0, %s27
    %s19 = sphi 0, %s16
    %s20 = sphi 0, %s17
    %s21 = sphi 0, %s18
    %s22 = sphi 0, %s19
    %s23 = sphi 0, %s20
    %s24 = sphi 0, %s21
    %s40 = sphi 0, %s42
    %s43 = sphi 0, %s40
    %s44 = sphi 0, %s43
    %s60 = sphi 0, %s44
    %s68 = sphi 0, %s70
    %s71 = sphi 0, %s68
    %s72 = sphi 0, %s71
    %s88 = sphi 0, %s72
    %s94 = sphi 0, %s96
    %s97 = sphi 0, %s94
    %s98 = sphi 0, %s97
    %s114 = sphi 0, %s98
    %s122 = sphi 0, %s124
    %s125 = sphi 0, %s122
    %s126 = sphi 0, %s125
    %s142 = sphi 0, %s126
  $region4: #{convnet_forward.5} parent=0 // loop_header_branch
    %12 = sbr.rel (%p10) target = $region8
  $region5: #{convnet_forward.5} parent=0 // loop_body
    %s14 = ssub.s32 %s9, 1
    %s15 = ssub.s32 %s9, 2
    %s25 = sadd.s32 1, %s18
    %p26 = scmp.ge.s32.totalorder %s25, 1
    %s27 = scalar_select %p26, 0, %s25
    %s28 = sadd.s32 1, %s17
    %s29 = scalar_select %p26, %s28, %s17
    %p30 = scmp.ge.s32.totalorder %s29, 1
    %s31 = scalar_select %p30, 0, %s29
    %s32 = sadd.s32 1, %s16
    %s33 = scalar_select %p30, %s32, %s16
    %p34 = scmp.ge.s32.totalorder %s33, 3
    %s35 = scalar_select %p34, 0, %s33
    %s36 = ssub.s32 %s16, %s35
    %s37 = ssub.s32 %s18, %s27
    %s38 = sor.u32 %s36, %s37
    %p39 = scmp.eq.s32.totalorder %s38, 0
    %s41 = sadd.s32 %s40, 1
    %s42 = scalar_select %p39, %s40, %s41
    %p45 = pneg %p39
    %p46 = scmp.eq.s32.totalorder %s9, 2
    %p47 = por %p45, %p46
    %p48 = scmp.ne.s32.totalorder %s40, %s43
    %p49 = scmp.eq.s32.totalorder %s9, 0
    %p50 = por %p48, %p49
    %p51 = scmp.ne.s32.totalorder %s40, %s43
    %p52 = scmp.eq.s32.totalorder %s14, 2
    %p53 = por %p51, %p52
    %p54 = scmp.ne.s32.totalorder %s43, %s44
    %p55 = scmp.eq.s32.totalorder %s14, 0
    %p56 = por %p54, %p55
    %p57 = scmp.ne.s32.totalorder %s43, %s44
    %p58 = scmp.eq.s32.totalorder %s15, 2
    %p59 = por %p57, %p58
    %p61 = scmp.ne.s32.totalorder %s44, %s60
    %p62 = scmp.eq.s32.totalorder %s15, 0
    %p63 = por %p61, %p62
    %s64 = ssub.s32 %s18, %s27
    %s65 = ssub.s32 %s17, %s31
    %s66 = sor.u32 %s64, %s65
    %p67 = scmp.eq.s32.totalorder %s66, 0
    %s69 = sadd.s32 %s68, 1
    %s70 = scalar_select %p67, %s68, %s69
    %p73 = pneg %p67
    %p74 = scmp.eq.s32.totalorder %s9, 2
    %p75 = por %p73, %p74
    %p76 = scmp.ne.s32.totalorder %s68, %s71
    %p77 = scmp.eq.s32.totalorder %s9, 0
    %p78 = por %p76, %p77
    %p79 = scmp.ne.s32.totalorder %s68, %s71
    %p80 = scmp.eq.s32.totalorder %s14, 2
    %p81 = por %p79, %p80
    %p82 = scmp.ne.s32.totalorder %s71, %s72
    %p83 = scmp.eq.s32.totalorder %s14, 0
    %p84 = por %p82, %p83
    %p85 = scmp.ne.s32.totalorder %s71, %s72
    %p86 = scmp.eq.s32.totalorder %s15, 2
    %p87 = por %p85, %p86
    %p89 = scmp.ne.s32.totalorder %s72, %s88
    %p90 = scmp.eq.s32.totalorder %s15, 0
    %p91 = por %p89, %p90
    %s92 = ssub.s32 %s17, %s31
    %p93 = scmp.eq.s32.totalorder %s92, 0
    %s95 = sadd.s32 %s94, 1
    %s96 = scalar_select %p93, %s94, %s95
    %p99 = pneg %p93
    %p100 = scmp.eq.s32.totalorder %s9, 2
    %p101 = por %p99, %p100
    %p102 = scmp.ne.s32.totalorder %s94, %s97
    %p103 = scmp.eq.s32.totalorder %s9, 0
    %p104 = por %p102, %p103
    %p105 = scmp.ne.s32.totalorder %s94, %s97
    %p106 = scmp.eq.s32.totalorder %s14, 2
    %p107 = por %p105, %p106
    %p108 = scmp.ne.s32.totalorder %s97, %s98
    %p109 = scmp.eq.s32.totalorder %s14, 0
    %p110 = por %p108, %p109
    %p111 = scmp.ne.s32.totalorder %s97, %s98
    %p112 = scmp.eq.s32.totalorder %s15, 2
    %p113 = por %p111, %p112
    %p115 = scmp.ne.s32.totalorder %s98, %s114
    %p116 = scmp.eq.s32.totalorder %s15, 0
    %p117 = por %p115, %p116
    %s118 = ssub.s32 %s16, %s35
    %s119 = ssub.s32 %s17, %s31
    %s120 = sor.u32 %s118, %s119
    %p121 = scmp.eq.s32.totalorder %s120, 0
    %s123 = sadd.s32 %s122, 1
    %s124 = scalar_select %p121, %s122, %s123
    %p127 = pneg %p121
    %p128 = scmp.eq.s32.totalorder %s9, 2
    %p129 = por %p127, %p128
    %p130 = scmp.ne.s32.totalorder %s122, %s125
    %p131 = scmp.eq.s32.totalorder %s9, 0
    %p132 = por %p130, %p131
    %p133 = scmp.ne.s32.totalorder %s122, %s125
    %p134 = scmp.eq.s32.totalorder %s14, 2
    %p135 = por %p133, %p134
    %p136 = scmp.ne.s32.totalorder %s125, %s126
    %p137 = scmp.eq.s32.totalorder %s14, 0
    %p138 = por %p136, %p137
    %p139 = scmp.ne.s32.totalorder %s125, %s126
    %p140 = scmp.eq.s32.totalorder %s15, 2
    %p141 = por %p139, %p140
    %p143 = scmp.ne.s32.totalorder %s126, %s142
    %p144 = scmp.eq.s32.totalorder %s15, 0
    %p145 = por %p143, %p144
    %p146 = scmp.le.s32.totalorder 1, %s9
    %p147 = scmp.lt.s32.totalorder %s9, 4
    %p148 = pnand %p146, %p147
    %p149 = pneg %p148
    // Predicated region
    $region9: #{convnet_forward.5} parent=5 // pred_check
      _
    $region10: #{convnet_forward.5} parent=5 // pred_check_branch
      %151 = sbr.rel (%p148) target = $region12
    $region11: #{convnet_forward.5} parent=5 // pred_region
      %s152 = ssub.s32 %s9, 1
      // Predicated region
      $region13: #{convnet_forward.5} parent=11 // pred_check
        %p153 = pneg %p84
      $region14: #{convnet_forward.5} parent=11 // pred_check_branch
        %155 = sbr.rel (%p153) target = $region16
      $region15: #{convnet_forward.5} parent=11 // pred_region
        %s156 = smul.u32 16, %s21
        %p157 = scmp.lt.s32.totalorder %s156, 15
        %s158 = scalar_select %p157, %s156, 15
        %p159 = scmp.lt.s32.totalorder %s20, 0
        %s160 = scalar_select %p159, %s20, 0
        %s161 = sadd.s32 %s160, %s158
        %s162 = smul.addr %s161, 4
        %s163 = scalar_lea.vmem %s1, %s162
        %s164 = smul.u32 16, %s21
      $region16: #{convnet_forward.5} parent=11 // pred_fallthru
        _
      // Predicated region
      $region17: #{convnet_forward.5} parent=11 // pred_check
        %p165 = pneg %p110
      $region18: #{convnet_forward.5} parent=11 // pred_check_branch
        %167 = sbr.rel (%p165) target = $region20
      $region19: #{convnet_forward.5} parent=11 // pred_region
        %p168 = scmp.lt.s32.totalorder %s20, 0
        %s169 = scalar_select %p168, %s20, 0
        %s170 = scalar_lea.vmem %s2, %s169
      $region20: #{convnet_forward.5} parent=11 // pred_fallthru
        _
    $region12: #{convnet_forward.5} parent=5 // pred_fallthru
      _
    %p171 = scmp.lt.s32.totalorder %s9, 3
    // Predicated region
    $region21: #{convnet_forward.5} parent=5 // pred_check
      %p172 = pneg %p171
    $region22: #{convnet_forward.5} parent=5 // pred_check_branch
      %174 = sbr.rel (%p172) target = $region24
    $region23: #{convnet_forward.5} parent=5 // pred_region
      // Predicated region
      $region25: #{convnet_forward.5} parent=23 // pred_check
        %p175 = pneg %p50
      $region26: #{convnet_forward.5} parent=23 // pred_check_branch
        %177 = sbr.rel (%p175) target = $region28
      $region27: #{convnet_forward.5} parent=23 // pred_region
        %s178 = smul.u32 32, %s16
        %p179 = scmp.lt.s32.totalorder %s178, 95
        %s180 = scalar_select %p179, %s178, 95
        %p181 = scmp.lt.s32.totalorder %s18, 0
        %s182 = scalar_select %p181, %s18, 0
        %s183 = sadd.s32 %s182, %s180
        %s184 = smul.addr %s183, 4
        %s185 = scalar_lea.vmem %s0, %s184
        %s186 = smul.u32 32, %s16
      $region28: #{convnet_forward.5} parent=23 // pred_fallthru
        _
    $region24: #{convnet_forward.5} parent=5 // pred_fallthru
      _
    %p187 = scmp.le.s32.totalorder 1, %s9
    %p188 = scmp.lt.s32.totalorder %s9, 4
    %p189 = pnand %p187, %p188
    %p190 = pneg %p189
    // Predicated region
    $region29: #{convnet_forward.5} parent=5 // pred_check
      _
    $region30: #{convnet_forward.5} parent=5 // pred_check_branch
      %192 = sbr.rel (%p189) target = $region32
    $region31: #{convnet_forward.5} parent=5 // pred_region
      %s193 = ssub.s32 %s9, 1
      %s194 = smul.u32 32, %s19
      %p195 = scmp.lt.s32.totalorder %s194, 95
      %s196 = scalar_select %p195, %s194, 95
      %p197 = scmp.lt.s32.totalorder %s21, 0
      %s198 = scalar_select %p197, %s21, 0
      %s199 = sadd.s32 %s198, %s196
      %s200 = smul.addr %s199, 4
      %s201 = scalar_lea.vmem %s0, %s200
      %p202 = pneg %p56
      %p203 = pneg %p53
      %s204 = smul.u32 16, %s21
      %p205 = scmp.lt.s32.totalorder %s204, 15
      %s206 = scalar_select %p205, %s204, 15
      %p207 = scmp.lt.s32.totalorder %s20, 0
      %s208 = scalar_select %p207, %s20, 0
      %s209 = sadd.s32 %s208, %s206
      %s210 = smul.addr %s209, 4
      %s211 = scalar_lea.vmem %s1, %s210
      %p212 = pneg %p84
      %p213 = pneg %p81
      %p214 = scmp.lt.s32.totalorder %s20, 0
      %s215 = scalar_select %p214, %s20, 0
      %s216 = scalar_lea.vmem %s2, %s215
      %p217 = pneg %p110
      %p218 = pneg %p107
      %p219 = pneg %p138
      %p220 = pneg %p135
      %s221 = smul.u32 32, %s19
      %p222 = scmp.lt.s32.totalorder %s221, 95
      %s223 = scalar_select %p222, %s221, 95
      %p224 = scmp.lt.s32.totalorder %s20, 0
      %s225 = scalar_select %p224, %s20, 0
      %s226 = sadd.s32 %s225, %s223
      %s227 = smul.addr %s226, 4
      %s228 = scalar_lea.vmem %s3, %s227
      %s229 = smul.u32 32, %s19
      %p230 = scmp.lt.s32.totalorder %s229, 95
      %s231 = scalar_select %p230, %s229, 95
      %p232 = scmp.lt.s32.totalorder %s21, 0
      %s233 = scalar_select %p232, %s21, 0
      %s234 = sadd.s32 %s233, %s231
      %s235 = smul.addr %s234, 4
      %s236 = scalar_lea.vmem %s0, %s235
      %s237 = smul.u32 32, %s19
      %s238 = smul.u32 16, %s21
      %p239 = scmp.lt.s32.totalorder %s238, 15
      %s240 = scalar_select %p239, %s238, 15
      %p241 = scmp.lt.s32.totalorder %s20, 0
      %s242 = scalar_select %p241, %s20, 0
      %s243 = sadd.s32 %s242, %s240
      %s244 = smul.addr %s243, 4
      %s245 = scalar_lea.vmem %s1, %s244
      %s246 = smul.u32 16, %s21
      %p247 = scmp.lt.s32.totalorder %s20, 0
      %s248 = scalar_select %p247, %s20, 0
      %s249 = scalar_lea.vmem %s2, %s248
      %s250 = smul.u32 32, %s19
      %p251 = scmp.lt.s32.totalorder %s250, 95
      %s252 = scalar_select %p251, %s250, 95
      %p253 = scmp.lt.s32.totalorder %s20, 0
      %s254 = scalar_select %p253, %s20, 0
      %s255 = sadd.s32 %s254, %s252
      %s256 = smul.addr %s255, 4
      %s257 = scalar_lea.vmem %s3, %s256
      %s258 = smul.u32 32, %s19
      %p260 = scmp.eq.s32.totalorder %s21, 0
      // Predicated region
      $region33: #{convnet_forward.5} parent=31 // pred_check
        %p261 = pneg %p260
      $region34: #{convnet_forward.5} parent=31 // pred_check_branch
        %263 = sbr.rel (%p261) target = $region36
      $region35: #{convnet_forward.5} parent=31 // pred_region
        %264 = vst [vmem:[#allocation2] sm:$0xff] 0.0
        %265 = vst [vmem:[#allocation2 + $0x8] sm:$0xff] 0.0
        %266 = vst [vmem:[#allocation2 + $0x10] sm:$0xff] 0.0
        %267 = vst [vmem:[#allocation2 + $0x18] sm:$0xff] 0.0
        %268 = vst [vmem:[#allocation2 + $0x20] sm:$0xff] 0.0
        %269 = vst [vmem:[#allocation2 + $0x28] sm:$0xff] 0.0
        %270 = vst [vmem:[#allocation2 + $0x30] sm:$0xff] 0.0
        %271 = vst [vmem:[#allocation2 + $0x38] sm:$0xff] 0.0
        %272 = vst [vmem:[#allocation2 + $0x40] sm:$0xff] 0.0
        %273 = vst [vmem:[#allocation2 + $0x48] sm:$0xff] 0.0
        %274 = vst [vmem:[#allocation2 + $0x50] sm:$0xff] 0.0
        %275 = vst [vmem:[#allocation2 + $0x58] sm:$0xff] 0.0
        %276 = vst [vmem:[#allocation2 + $0x60] sm:$0xff] 0.0
        %277 = vst [vmem:[#allocation2 + $0x68] sm:$0xff] 0.0
        %278 = vst [vmem:[#allocation2 + $0x70] sm:$0xff] 0.0
        %279 = vst [vmem:[#allocation2 + $0x78] sm:$0xff] 0.0
        %280 = vst [vmem:[#allocation2 + $0x80] sm:$0xff] 0.0
        %281 = vst [vmem:[#allocation2 + $0x88] sm:$0xff] 0.0
        %282 = vst [vmem:[#allocation2 + $0x90] sm:$0xff] 0.0
        %283 = vst [vmem:[#allocation2 + $0x98] sm:$0xff] 0.0
        %284 = vst [vmem:[#allocation2 + $0xa0] sm:$0xff] 0.0
        %285 = vst [vmem:[#allocation2 + $0xa8] sm:$0xff] 0.0
        %286 = vst [vmem:[#allocation2 + $0xb0] sm:$0xff] 0.0
        %287 = vst [vmem:[#allocation2 + $0xb8] sm:$0xff] 0.0
        %288 = vst [vmem:[#allocation2 + $0xc0] sm:$0xff] 0.0
        %289 = vst [vmem:[#allocation2 + $0xc8] sm:$0xff] 0.0
        %290 = vst [vmem:[#allocation2 + $0xd0] sm:$0xff] 0.0
        %291 = vst [vmem:[#allocation2 + $0xd8] sm:$0xff] 0.0
        %292 = vst [vmem:[#allocation2 + $0xe0] sm:$0xff] 0.0
        %293 = vst [vmem:[#allocation2 + $0xe8] sm:$0xff] 0.0
        %294 = vst [vmem:[#allocation2 + $0xf0] sm:$0xff] 0.0
        %295 = vst [vmem:[#allocation2 + $0xf8] sm:$0xff] 0.0
      $region36: #{convnet_forward.5} parent=31 // pred_fallthru
        _
      %v296 = vld [vmem:[#allocation2] sm:$0xff]
      %v297 = vld [vmem:[#allocation2 + $0x8] sm:$0xff]
      %v298 = vld [vmem:[#allocation2 + $0x10] sm:$0xff]
      %v299 = vld [vmem:[#allocation2 + $0x18] sm:$0xff]
      %v300 = vld [vmem:[#allocation2 + $0x20] sm:$0xff]
      %v301 = vld [vmem:[#allocation2 + $0x28] sm:$0xff]
      %v302 = vld [vmem:[#allocation2 + $0x30] sm:$0xff]
      %v303 = vld [vmem:[#allocation2 + $0x38] sm:$0xff]
      %v304 = vld [vmem:[#allocation2 + $0x40] sm:$0xff]
      %v305 = vld [vmem:[#allocation2 + $0x48] sm:$0xff]
      %v306 = vld [vmem:[#allocation2 + $0x50] sm:$0xff]
      %v307 = vld [vmem:[#allocation2 + $0x58] sm:$0xff]
      %v308 = vld [vmem:[#allocation2 + $0x60] sm:$0xff]
      %v309 = vld [vmem:[#allocation2 + $0x68] sm:$0xff]
      %v310 = vld [vmem:[#allocation2 + $0x70] sm:$0xff]
      %v311 = vld [vmem:[#allocation2 + $0x78] sm:$0xff]
      %v312 = vld [vmem:[#allocation2 + $0x80] sm:$0xff]
      %v313 = vld [vmem:[#allocation2 + $0x88] sm:$0xff]
      %v314 = vld [vmem:[#allocation2 + $0x90] sm:$0xff]
      %v315 = vld [vmem:[#allocation2 + $0x98] sm:$0xff]
      %v316 = vld [vmem:[#allocation2 + $0xa0] sm:$0xff]
      %v317 = vld [vmem:[#allocation2 + $0xa8] sm:$0xff]
      %v318 = vld [vmem:[#allocation2 + $0xb0] sm:$0xff]
      %v319 = vld [vmem:[#allocation2 + $0xb8] sm:$0xff]
      %v320 = vld [vmem:[#allocation2 + $0xc0] sm:$0xff]
      %v321 = vld [vmem:[#allocation2 + $0xc8] sm:$0xff]
      %v322 = vld [vmem:[#allocation2 + $0xd0] sm:$0xff]
      %v323 = vld [vmem:[#allocation2 + $0xd8] sm:$0xff]
      %v324 = vld [vmem:[#allocation2 + $0xe0] sm:$0xff]
      %v325 = vld [vmem:[#allocation2 + $0xe8] sm:$0xff]
      %v326 = vld [vmem:[#allocation2 + $0xf0] sm:$0xff]
      %v327 = vld [vmem:[#allocation2 + $0xf8] sm:$0xff]
      %v328 = vld [vmem:[%s236] sm:$0xf]
      %v329 = vld [vmem:[%s236 + $0x4] sm:$0xf]
      %v330 = vld [vmem:[%s236 + $0x8] sm:$0xf]
      %v331 = vld [vmem:[%s236 + $0xc] sm:$0xf]
      %v332 = vld [vmem:[%s236 + $0x10] sm:$0xf]
      %v333 = vld [vmem:[%s236 + $0x14] sm:$0xf]
      %v334 = vld [vmem:[%s236 + $0x18] sm:$0xf]
      %v335 = vld [vmem:[%s236 + $0x1c] sm:$0xf]
      %v336 = vld [vmem:[%s236 + $0x20] sm:$0xf]
      %v337 = vld [vmem:[%s236 + $0x24] sm:$0xf]
      %v338 = vld [vmem:[%s236 + $0x28] sm:$0xf]
      %v339 = vld [vmem:[%s236 + $0x2c] sm:$0xf]
      %v340 = vld [vmem:[%s236 + $0x30] sm:$0xf]
      %v341 = vld [vmem:[%s236 + $0x34] sm:$0xf]
      %v342 = vld [vmem:[%s236 + $0x38] sm:$0xf]
      %v343 = vld [vmem:[%s236 + $0x3c] sm:$0xf]
      %v344 = vld [vmem:[%s236 + $0x40] sm:$0xf]
      %v345 = vld [vmem:[%s236 + $0x44] sm:$0xf]
      %v346 = vld [vmem:[%s236 + $0x48] sm:$0xf]
      %v347 = vld [vmem:[%s236 + $0x4c] sm:$0xf]
      %v348 = vld [vmem:[%s236 + $0x50] sm:$0xf]
      %v349 = vld [vmem:[%s236 + $0x54] sm:$0xf]
      %v350 = vld [vmem:[%s236 + $0x58] sm:$0xf]
      %v351 = vld [vmem:[%s236 + $0x5c] sm:$0xf]
      %v352 = vld [vmem:[%s236 + $0x60] sm:$0xf]
      %v353 = vld [vmem:[%s236 + $0x64] sm:$0xf]
      %v354 = vld [vmem:[%s236 + $0x68] sm:$0xf]
      %v355 = vld [vmem:[%s236 + $0x6c] sm:$0xf]
      %v356 = vld [vmem:[%s236 + $0x70] sm:$0xf]
      %v357 = vld [vmem:[%s236 + $0x74] sm:$0xf]
      %v358 = vld [vmem:[%s236 + $0x78] sm:$0xf]
      %v359 = vld [vmem:[%s236 + $0x7c] sm:$0xf]
      %v360 = vld [vmem:[%s245] sm:$0xf]
      %v361 = vld [vmem:[%s245 + $0x4] sm:$0xf]
      %v362 = vld [vmem:[%s245 + $0x8] sm:$0xf]
      %v363 = vld [vmem:[%s245 + $0xc] sm:$0xf]
      %v364 = vld [vmem:[%s245 + $0x10] sm:$0xf]
      %v365 = vld [vmem:[%s245 + $0x14] sm:$0xf]
      %v366 = vld [vmem:[%s245 + $0x18] sm:$0xf]
      %v367 = vld [vmem:[%s245 + $0x1c] sm:$0xf]
      %v368 = vld [vmem:[%s245 + $0x20] sm:$0xf]
      %v369 = vld [vmem:[%s245 + $0x24] sm:$0xf]
      %v370 = vld [vmem:[%s245 + $0x28] sm:$0xf]
      %v371 = vld [vmem:[%s245 + $0x2c] sm:$0xf]
      %v372 = vld [vmem:[%s245 + $0x30] sm:$0xf]
      %v373 = vld [vmem:[%s245 + $0x34] sm:$0xf]
      %v374 = vld [vmem:[%s245 + $0x38] sm:$0xf]
      %v375 = vld [vmem:[%s245 + $0x3c] sm:$0xf]
      %v408 = vunpack.c.l.b16 %v328
      %v409 = vunpack.c.l.b16 %v329
      %v410 = vunpack.c.l.b16 %v330
      %v411 = vunpack.c.l.b16 %v331
      %v412 = vunpack.c.l.b16 %v332
      %v413 = vunpack.c.l.b16 %v333
      %v414 = vunpack.c.l.b16 %v334
      %v415 = vunpack.c.l.b16 %v335
      %v416 = vunpack.c.l.b16 %v336
      %v417 = vunpack.c.l.b16 %v337
      %v418 = vunpack.c.l.b16 %v338
      %v419 = vunpack.c.l.b16 %v339
      %v420 = vunpack.c.l.b16 %v340
      %v421 = vunpack.c.l.b16 %v341
      %v422 = vunpack.c.l.b16 %v342
      %v423 = vunpack.c.l.b16 %v343
      %v424 = vunpack.c.l.b16 %v344
      %v425 = vunpack.c.l.b16 %v345
      %v426 = vunpack.c.l.b16 %v346
      %v427 = vunpack.c.l.b16 %v347
      %v428 = vunpack.c.l.b16 %v348
      %v429 = vunpack.c.l.b16 %v349
      %v430 = vunpack.c.l.b16 %v350
      %v431 = vunpack.c.l.b16 %v351
      %v432 = vunpack.c.l.b16 %v352
      %v433 = vunpack.c.l.b16 %v353
      %v434 = vunpack.c.l.b16 %v354
      %v435 = vunpack.c.l.b16 %v355
      %v436 = vunpack.c.l.b16 %v356
      %v437 = vunpack.c.l.b16 %v357
      %v438 = vunpack.c.l.b16 %v358
      %v439 = vunpack.c.l.b16 %v359
      %v440 = vpack.c.b16 %v409, %v408
      %v441 = vpack.c.b16 %v411, %v410
      %v442 = vpack.c.b16 %v413, %v412
      %v443 = vpack.c.b16 %v415, %v414
      %v444 = vpack.c.b16 %v417, %v416
      %v445 = vpack.c.b16 %v419, %v418
      %v446 = vpack.c.b16 %v421, %v420
      %v447 = vpack.c.b16 %v423, %v422
      %v448 = vpack.c.b16 %v425, %v424
      %v449 = vpack.c.b16 %v427, %v426
      %v450 = vpack.c.b16 %v429, %v428
      %v451 = vpack.c.b16 %v431, %v430
      %v452 = vpack.c.b16 %v433, %v432
      %v453 = vpack.c.b16 %v435, %v434
      %v454 = vpack.c.b16 %v437, %v436
      %v455 = vpack.c.b16 %v439, %v438
      %v488 = vunpack.c.l.b16 %v360
      %v489 = vunpack.c.l.b16 %v361
      %v490 = vunpack.c.l.b16 %v362
      %v491 = vunpack.c.l.b16 %v363
      %v492 = vunpack.c.l.b16 %v364
      %v493 = vunpack.c.l.b16 %v365
      %v494 = vunpack.c.l.b16 %v366
      %v495 = vunpack.c.l.b16 %v367
      %v496 = vunpack.c.l.b16 %v368
      %v497 = vunpack.c.l.b16 %v369
      %v498 = vunpack.c.l.b16 %v370
      %v499 = vunpack.c.l.b16 %v371
      %v500 = vunpack.c.l.b16 %v372
      %v501 = vunpack.c.l.b16 %v373
      %v502 = vunpack.c.l.b16 %v374
      %v503 = vunpack.c.l.b16 %v375
      %v504 = vpack.c.b16 %v489, %v488
      %v505 = vpack.c.b16 %v491, %v490
      %v506 = vpack.c.b16 %v493, %v492
      %v507 = vpack.c.b16 %v495, %v494
      %v508 = vpack.c.b16 %v497, %v496
      %v509 = vpack.c.b16 %v499, %v498
      %v510 = vpack.c.b16 %v501, %v500
      %v511 = vpack.c.b16 %v503, %v502
      %520 = vmatprep.subr.bf16.mxu0 0
      %521 = vmatpush1.bf16.msra.mxu0 %v511
      %522 = vmatprep.subr.bf16.mxu0 0
      %523 = vmatpush1.bf16.msra.mxu0 %v510
      %524 = vmatprep.subr.bf16.mxu0 0
      %525 = vmatpush1.bf16.msra.mxu0 %v509
      %526 = vmatprep.subr.bf16.mxu0 0
      %527 = vmatpush1.bf16.msra.mxu0 %v508
      %528 = vmatprep.subr.bf16.mxu0 0
      %529 = vmatpush1.bf16.msra.mxu0 %v507
      %530 = vmatprep.subr.bf16.mxu0 0
      %531 = vmatpush1.bf16.msra.mxu0 %v506
      %532 = vmatprep.subr.bf16.mxu0 0
      %533 = vmatpush1.bf16.msra.mxu0 %v505
      %534 = vmatprep.subr.bf16.mxu0 0
      %535 = vmatpush1.bf16.msra.mxu0 %v504
      %536 = vmatprep.subr.bf16.mxu0 0
      %537 = vmatpush2.bf16.msra.mxu0 0
      %538 = vmatprep.subr.bf16.mxu0 0
      %539 = vmatpush2.bf16.msra.mxu0 0
      %540 = vmatprep.subr.bf16.mxu0 0
      %541 = vmatpush2.bf16.msra.mxu0 0
      %542 = vmatprep.subr.bf16.mxu0 0
      %543 = vmatpush2.bf16.msra.mxu0 0
      %544 = vmatprep.subr.bf16.mxu0 0
      %545 = vmatpush2.bf16.msra.mxu0 0
      %546 = vmatprep.subr.bf16.mxu0 0
      %547 = vmatpush2.bf16.msra.mxu0 0
      %548 = vmatprep.subr.bf16.mxu0 0
      %549 = vmatpush2.bf16.msra.mxu0 0
      %550 = vmatprep.subr.bf16.mxu0 0
      %551 = vmatpush2.bf16.msra.mxu0 0
      %552 = vmatprep.mubr.bf16.mxu0 0
      %553 = vmatmul.mubr.bf16.gmra.mxu0 %v440
      %v554 = vpop.f32.mrf.mxu0
      %v555 = vadd.f32 0.0, %v554
      %v556 = vpop.f32.mrf.mxu0
      %v557 = vpop.f32.mrf.mxu0
      %v558 = vadd.f32 0.0, %v557
      %v559 = vpop.f32.mrf.mxu0
      %560 = vmatprep.mubr.bf16.mxu0 0
      %561 = vmatmul.mubr.bf16.gmra.mxu0 %v441
      %v562 = vpop.f32.mrf.mxu0
      %v563 = vadd.f32 0.0, %v562
      %v564 = vpop.f32.mrf.mxu0
      %v565 = vpop.f32.mrf.mxu0
      %v566 = vadd.f32 0.0, %v565
      %v567 = vpop.f32.mrf.mxu0
      %568 = vmatprep.mubr.bf16.mxu0 0
      %569 = vmatmul.mubr.bf16.gmra.mxu0 %v442
      %v570 = vpop.f32.mrf.mxu0
      %v571 = vadd.f32 0.0, %v570
      %v572 = vpop.f32.mrf.mxu0
      %v573 = vpop.f32.mrf.mxu0
      %v574 = vadd.f32 0.0, %v573
      %v575 = vpop.f32.mrf.mxu0
      %576 = vmatprep.mubr.bf16.mxu0 0
      %577 = vmatmul.mubr.bf16.gmra.mxu0 %v443
      %v578 = vpop.f32.mrf.mxu0
      %v579 = vadd.f32 0.0, %v578
      %v580 = vpop.f32.mrf.mxu0
      %v581 = vpop.f32.mrf.mxu0
      %v582 = vadd.f32 0.0, %v581
      %v583 = vpop.f32.mrf.mxu0
      %584 = vmatprep.mubr.bf16.mxu0 0
      %585 = vmatmul.mubr.bf16.gmra.mxu0 %v444
      %v586 = vpop.f32.mrf.mxu0
      %v587 = vadd.f32 0.0, %v586
      %v588 = vpop.f32.mrf.mxu0
      %v589 = vpop.f32.mrf.mxu0
      %v590 = vadd.f32 0.0, %v589
      %v591 = vpop.f32.mrf.mxu0
      %592 = vmatprep.mubr.bf16.mxu0 0
      %593 = vmatmul.mubr.bf16.gmra.mxu0 %v445
      %v594 = vpop.f32.mrf.mxu0
      %v595 = vadd.f32 0.0, %v594
      %v596 = vpop.f32.mrf.mxu0
      %v597 = vpop.f32.mrf.mxu0
      %v598 = vadd.f32 0.0, %v597
      %v599 = vpop.f32.mrf.mxu0
      %600 = vmatprep.mubr.bf16.mxu0 0
      %601 = vmatmul.mubr.bf16.gmra.mxu0 %v446
      %v602 = vpop.f32.mrf.mxu0
      %v603 = vadd.f32 0.0, %v602
      %v604 = vpop.f32.mrf.mxu0
      %v605 = vpop.f32.mrf.mxu0
      %v606 = vadd.f32 0.0, %v605
      %v607 = vpop.f32.mrf.mxu0
      %608 = vmatprep.mubr.bf16.mxu0 0
      %609 = vmatmul.mubr.bf16.gmra.mxu0 %v447
      %v610 = vpop.f32.mrf.mxu0
      %v611 = vadd.f32 0.0, %v610
      %v612 = vpop.f32.mrf.mxu0
      %v613 = vpop.f32.mrf.mxu0
      %v614 = vadd.f32 0.0, %v613
      %v615 = vpop.f32.mrf.mxu0
      %616 = vmatprep.mubr.bf16.mxu0 0
      %617 = vmatmul.mubr.bf16.gmra.mxu0 %v448
      %v618 = vpop.f32.mrf.mxu0
      %v619 = vadd.f32 0.0, %v618
      %v620 = vpop.f32.mrf.mxu0
      %v621 = vpop.f32.mrf.mxu0
      %v622 = vadd.f32 0.0, %v621
      %v623 = vpop.f32.mrf.mxu0
      %624 = vmatprep.mubr.bf16.mxu0 0
      %625 = vmatmul.mubr.bf16.gmra.mxu0 %v449
      %v626 = vpop.f32.mrf.mxu0
      %v627 = vadd.f32 0.0, %v626
      %v628 = vpop.f32.mrf.mxu0
      %v629 = vpop.f32.mrf.mxu0
      %v630 = vadd.f32 0.0, %v629
      %v631 = vpop.f32.mrf.mxu0
      %632 = vmatprep.mubr.bf16.mxu0 0
      %633 = vmatmul.mubr.bf16.gmra.mxu0 %v450
      %v634 = vpop.f32.mrf.mxu0
      %v635 = vadd.f32 0.0, %v634
      %v636 = vpop.f32.mrf.mxu0
      %v637 = vpop.f32.mrf.mxu0
      %v638 = vadd.f32 0.0, %v637
      %v639 = vpop.f32.mrf.mxu0
      %640 = vmatprep.mubr.bf16.mxu0 0
      %641 = vmatmul.mubr.bf16.gmra.mxu0 %v451
      %v642 = vpop.f32.mrf.mxu0
      %v643 = vadd.f32 0.0, %v642
      %v644 = vpop.f32.mrf.mxu0
      %v645 = vpop.f32.mrf.mxu0
      %v646 = vadd.f32 0.0, %v645
      %v647 = vpop.f32.mrf.mxu0
      %648 = vmatprep.mubr.bf16.mxu0 0
      %649 = vmatmul.mubr.bf16.gmra.mxu0 %v452
      %v650 = vpop.f32.mrf.mxu0
      %v651 = vadd.f32 0.0, %v650
      %v652 = vpop.f32.mrf.mxu0
      %v653 = vpop.f32.mrf.mxu0
      %v654 = vadd.f32 0.0, %v653
      %v655 = vpop.f32.mrf.mxu0
      %656 = vmatprep.mubr.bf16.mxu0 0
      %657 = vmatmul.mubr.bf16.gmra.mxu0 %v453
      %v658 = vpop.f32.mrf.mxu0
      %v659 = vadd.f32 0.0, %v658
      %v660 = vpop.f32.mrf.mxu0
      %v661 = vpop.f32.mrf.mxu0
      %v662 = vadd.f32 0.0, %v661
      %v663 = vpop.f32.mrf.mxu0
      %664 = vmatprep.mubr.bf16.mxu0 0
      %665 = vmatmul.mubr.bf16.gmra.mxu0 %v454
      %v666 = vpop.f32.mrf.mxu0
      %v667 = vadd.f32 0.0, %v666
      %v668 = vpop.f32.mrf.mxu0
      %v669 = vpop.f32.mrf.mxu0
      %v670 = vadd.f32 0.0, %v669
      %v671 = vpop.f32.mrf.mxu0
      %672 = vmatprep.mubr.bf16.mxu0 0
      %673 = vmatmul.mubr.bf16.gmra.mxu0 %v455
      %v674 = vpop.f32.mrf.mxu0
      %v675 = vadd.f32 0.0, %v674
      %v676 = vpop.f32.mrf.mxu0
      %v677 = vpop.f32.mrf.mxu0
      %v678 = vadd.f32 0.0, %v677
      %v679 = vpop.f32.mrf.mxu0
      %680 = vdwg.mxu0
      %v681 = vadd.f32 %v296, %v555
      %v682 = vadd.f32 %v297, %v558
      %v683 = vadd.f32 %v298, %v563
      %v684 = vadd.f32 %v299, %v566
      %v685 = vadd.f32 %v300, %v571
      %v686 = vadd.f32 %v301, %v574
      %v687 = vadd.f32 %v302, %v579
      %v688 = vadd.f32 %v303, %v582
      %v689 = vadd.f32 %v304, %v587
      %v690 = vadd.f32 %v305, %v590
      %v691 = vadd.f32 %v306, %v595
      %v692 = vadd.f32 %v307, %v598
      %v693 = vadd.f32 %v308, %v603
      %v694 = vadd.f32 %v309, %v606
      %v695 = vadd.f32 %v310, %v611
      %v696 = vadd.f32 %v311, %v614
      %v697 = vadd.f32 %v312, %v619
      %v698 = vadd.f32 %v313, %v622
      %v699 = vadd.f32 %v314, %v627
      %v700 = vadd.f32 %v315, %v630
      %v701 = vadd.f32 %v316, %v635
      %v702 = vadd.f32 %v317, %v638
      %v703 = vadd.f32 %v318, %v643
      %v704 = vadd.f32 %v319, %v646
      %v705 = vadd.f32 %v320, %v651
      %v706 = vadd.f32 %v321, %v654
      %v707 = vadd.f32 %v322, %v659
      %v708 = vadd.f32 %v323, %v662
      %v709 = vadd.f32 %v324, %v667
      %v710 = vadd.f32 %v325, %v670
      %v711 = vadd.f32 %v326, %v675
      %v712 = vadd.f32 %v327, %v678
      %713 = vst [vmem:[#allocation2] sm:$0xff] %v681
      %714 = vst [vmem:[#allocation2 + $0x8] sm:$0xff] %v682
      %715 = vst [vmem:[#allocation2 + $0x10] sm:$0xff] %v683
      %716 = vst [vmem:[#allocation2 + $0x18] sm:$0xff] %v684
      %717 = vst [vmem:[#allocation2 + $0x20] sm:$0xff] %v685
      %718 = vst [vmem:[#allocation2 + $0x28] sm:$0xff] %v686
      %719 = vst [vmem:[#allocation2 + $0x30] sm:$0xff] %v687
      %720 = vst [vmem:[#allocation2 + $0x38] sm:$0xff] %v688
      %721 = vst [vmem:[#allocation2 + $0x40] sm:$0xff] %v689
      %722 = vst [vmem:[#allocation2 + $0x48] sm:$0xff] %v690
      %723 = vst [vmem:[#allocation2 + $0x50] sm:$0xff] %v691
      %724 = vst [vmem:[#allocation2 + $0x58] sm:$0xff] %v692
      %725 = vst [vmem:[#allocation2 + $0x60] sm:$0xff] %v693
      %726 = vst [vmem:[#allocation2 + $0x68] sm:$0xff] %v694
      %727 = vst [vmem:[#allocation2 + $0x70] sm:$0xff] %v695
      %728 = vst [vmem:[#allocation2 + $0x78] sm:$0xff] %v696
      %729 = vst [vmem:[#allocation2 + $0x80] sm:$0xff] %v697
      %730 = vst [vmem:[#allocation2 + $0x88] sm:$0xff] %v698
      %731 = vst [vmem:[#allocation2 + $0x90] sm:$0xff] %v699
      %732 = vst [vmem:[#allocation2 + $0x98] sm:$0xff] %v700
      %733 = vst [vmem:[#allocation2 + $0xa0] sm:$0xff] %v701
      %734 = vst [vmem:[#allocation2 + $0xa8] sm:$0xff] %v702
      %735 = vst [vmem:[#allocation2 + $0xb0] sm:$0xff] %v703
      %736 = vst [vmem:[#allocation2 + $0xb8] sm:$0xff] %v704
      %737 = vst [vmem:[#allocation2 + $0xc0] sm:$0xff] %v705
      %738 = vst [vmem:[#allocation2 + $0xc8] sm:$0xff] %v706
      %739 = vst [vmem:[#allocation2 + $0xd0] sm:$0xff] %v707
      %740 = vst [vmem:[#allocation2 + $0xd8] sm:$0xff] %v708
      %741 = vst [vmem:[#allocation2 + $0xe0] sm:$0xff] %v709
      %742 = vst [vmem:[#allocation2 + $0xe8] sm:$0xff] %v710
      %743 = vst [vmem:[#allocation2 + $0xf0] sm:$0xff] %v711
      %744 = vst [vmem:[#allocation2 + $0xf8] sm:$0xff] %v712
      // Predicated region
      $region37: #{convnet_forward.5} parent=31 // pred_check
        %p745 = pneg %p260
      $region38: #{convnet_forward.5} parent=31 // pred_check_branch
        %747 = sbr.rel (%p745) target = $region40
      $region39: #{convnet_forward.5} parent=31 // pred_region
        %v748 = vld [vmem:[#allocation2] sm:$0xff]
        %v749 = vld [vmem:[#allocation2 + $0x8] sm:$0xff]
        %v750 = vld [vmem:[#allocation2 + $0x10] sm:$0xff]
        %v751 = vld [vmem:[#allocation2 + $0x18] sm:$0xff]
        %v752 = vld [vmem:[#allocation2 + $0x20] sm:$0xff]
        %v753 = vld [vmem:[#allocation2 + $0x28] sm:$0xff]
        %v754 = vld [vmem:[#allocation2 + $0x30] sm:$0xff]
        %v755 = vld [vmem:[#allocation2 + $0x38] sm:$0xff]
        %v756 = vld [vmem:[#allocation2 + $0x40] sm:$0xff]
        %v757 = vld [vmem:[#allocation2 + $0x48] sm:$0xff]
        %v758 = vld [vmem:[#allocation2 + $0x50] sm:$0xff]
        %v759 = vld [vmem:[#allocation2 + $0x58] sm:$0xff]
        %v760 = vld [vmem:[#allocation2 + $0x60] sm:$0xff]
        %v761 = vld [vmem:[#allocation2 + $0x68] sm:$0xff]
        %v762 = vld [vmem:[#allocation2 + $0x70] sm:$0xff]
        %v763 = vld [vmem:[#allocation2 + $0x78] sm:$0xff]
        %v764 = vld [vmem:[#allocation2 + $0x80] sm:$0xff]
        %v765 = vld [vmem:[#allocation2 + $0x88] sm:$0xff]
        %v766 = vld [vmem:[#allocation2 + $0x90] sm:$0xff]
        %v767 = vld [vmem:[#allocation2 + $0x98] sm:$0xff]
        %v768 = vld [vmem:[#allocation2 + $0xa0] sm:$0xff]
        %v769 = vld [vmem:[#allocation2 + $0xa8] sm:$0xff]
        %v770 = vld [vmem:[#allocation2 + $0xb0] sm:$0xff]
        %v771 = vld [vmem:[#allocation2 + $0xb8] sm:$0xff]
        %v772 = vld [vmem:[#allocation2 + $0xc0] sm:$0xff]
        %v773 = vld [vmem:[#allocation2 + $0xc8] sm:$0xff]
        %v774 = vld [vmem:[#allocation2 + $0xd0] sm:$0xff]
        %v775 = vld [vmem:[#allocation2 + $0xd8] sm:$0xff]
        %v776 = vld [vmem:[#allocation2 + $0xe0] sm:$0xff]
        %v777 = vld [vmem:[#allocation2 + $0xe8] sm:$0xff]
        %v778 = vld [vmem:[#allocation2 + $0xf0] sm:$0xff]
        %v779 = vld [vmem:[#allocation2 + $0xf8] sm:$0xff]
        %v780 = vld [vmem:[%s249] sm:$0x1]
        %v782 = vlaneseq
        %v783 = vshrl.u32 %v782, 7
        %v784 = vsub.s32 0, %v783
        %v785 = vrot.slane %v780, %v784
        %v787 = vadd.f32 %v748, %v785
        %v788 = vadd.f32 %v749, %v785
        %v789 = vadd.f32 %v750, %v785
        %v790 = vadd.f32 %v751, %v785
        %v791 = vadd.f32 %v752, %v785
        %v792 = vadd.f32 %v753, %v785
        %v793 = vadd.f32 %v754, %v785
        %v794 = vadd.f32 %v755, %v785
        %v795 = vadd.f32 %v756, %v785
        %v796 = vadd.f32 %v757, %v785
        %v797 = vadd.f32 %v758, %v785
        %v798 = vadd.f32 %v759, %v785
        %v799 = vadd.f32 %v760, %v785
        %v800 = vadd.f32 %v761, %v785
        %v801 = vadd.f32 %v762, %v785
        %v802 = vadd.f32 %v763, %v785
        %v803 = vadd.f32 %v764, %v785
        %v804 = vadd.f32 %v765, %v785
        %v805 = vadd.f32 %v766, %v785
        %v806 = vadd.f32 %v767, %v785
        %v807 = vadd.f32 %v768, %v785
        %v808 = vadd.f32 %v769, %v785
        %v809 = vadd.f32 %v770, %v785
        %v810 = vadd.f32 %v771, %v785
        %v811 = vadd.f32 %v772, %v785
        %v812 = vadd.f32 %v773, %v785
        %v813 = vadd.f32 %v774, %v785
        %v814 = vadd.f32 %v775, %v785
        %v815 = vadd.f32 %v776, %v785
        %v816 = vadd.f32 %v777, %v785
        %v817 = vadd.f32 %v778, %v785
        %v818 = vadd.f32 %v779, %v785
        %v819 = vmax.f32 %v787, 0.0
        %v820 = vmax.f32 %v788, 0.0
        %v821 = vmax.f32 %v789, 0.0
        %v822 = vmax.f32 %v790, 0.0
        %v823 = vmax.f32 %v791, 0.0
        %v824 = vmax.f32 %v792, 0.0
        %v825 = vmax.f32 %v793, 0.0
        %v826 = vmax.f32 %v794, 0.0
        %v827 = vmax.f32 %v795, 0.0
        %v828 = vmax.f32 %v796, 0.0
        %v829 = vmax.f32 %v797, 0.0
        %v830 = vmax.f32 %v798, 0.0
        %v831 = vmax.f32 %v799, 0.0
        %v832 = vmax.f32 %v800, 0.0
        %v833 = vmax.f32 %v801, 0.0
        %v834 = vmax.f32 %v802, 0.0
        %v835 = vmax.f32 %v803, 0.0
        %v836 = vmax.f32 %v804, 0.0
        %v837 = vmax.f32 %v805, 0.0
        %v838 = vmax.f32 %v806, 0.0
        %v839 = vmax.f32 %v807, 0.0
        %v840 = vmax.f32 %v808, 0.0
        %v841 = vmax.f32 %v809, 0.0
        %v842 = vmax.f32 %v810, 0.0
        %v843 = vmax.f32 %v811, 0.0
        %v844 = vmax.f32 %v812, 0.0
        %v845 = vmax.f32 %v813, 0.0
        %v846 = vmax.f32 %v814, 0.0
        %v847 = vmax.f32 %v815, 0.0
        %v848 = vmax.f32 %v816, 0.0
        %v849 = vmax.f32 %v817, 0.0
        %v850 = vmax.f32 %v818, 0.0
        %v851 = vpack.c.bf16 %v820, %v819
        %v852 = vpack.c.bf16 %v822, %v821
        %v853 = vpack.c.bf16 %v824, %v823
        %v854 = vpack.c.bf16 %v826, %v825
        %v855 = vpack.c.bf16 %v828, %v827
        %v856 = vpack.c.bf16 %v830, %v829
        %v857 = vpack.c.bf16 %v832, %v831
        %v858 = vpack.c.bf16 %v834, %v833
        %v859 = vpack.c.bf16 %v836, %v835
        %v860 = vpack.c.bf16 %v838, %v837
        %v861 = vpack.c.bf16 %v840, %v839
        %v862 = vpack.c.bf16 %v842, %v841
        %v863 = vpack.c.bf16 %v844, %v843
        %v864 = vpack.c.bf16 %v846, %v845
        %v865 = vpack.c.bf16 %v848, %v847
        %v866 = vpack.c.bf16 %v850, %v849
        %v883 = vunpack.c.l.b16 %v851
        %v884 = vunpack.c.h.b16 %v851
        %v885 = vunpack.c.l.b16 %v852
        %v886 = vunpack.c.h.b16 %v852
        %v887 = vunpack.c.l.b16 %v853
        %v888 = vunpack.c.h.b16 %v853
        %v889 = vunpack.c.l.b16 %v854
        %v890 = vunpack.c.h.b16 %v854
        %v891 = vunpack.c.l.b16 %v855
        %v892 = vunpack.c.h.b16 %v855
        %v893 = vunpack.c.l.b16 %v856
        %v894 = vunpack.c.h.b16 %v856
        %v895 = vunpack.c.l.b16 %v857
        %v896 = vunpack.c.h.b16 %v857
        %v897 = vunpack.c.l.b16 %v858
        %v898 = vunpack.c.h.b16 %v858
        %v899 = vunpack.c.l.b16 %v859
        %v900 = vunpack.c.h.b16 %v859
        %v901 = vunpack.c.l.b16 %v860
        %v902 = vunpack.c.h.b16 %v860
        %v903 = vunpack.c.l.b16 %v861
        %v904 = vunpack.c.h.b16 %v861
        %v905 = vunpack.c.l.b16 %v862
        %v906 = vunpack.c.h.b16 %v862
        %v907 = vunpack.c.l.b16 %v863
        %v908 = vunpack.c.h.b16 %v863
        %v909 = vunpack.c.l.b16 %v864
        %v910 = vunpack.c.h.b16 %v864
        %v911 = vunpack.c.l.b16 %v865
        %v912 = vunpack.c.h.b16 %v865
        %v913 = vunpack.c.l.b16 %v866
        %v914 = vunpack.c.h.b16 %v866
        %v915 = vpack.c.b16 %v883, %v883
        %v916 = vpack.c.b16 %v884, %v884
        %v917 = vpack.c.b16 %v885, %v885
        %v918 = vpack.c.b16 %v886, %v886
        %v919 = vpack.c.b16 %v887, %v887
        %v920 = vpack.c.b16 %v888, %v888
        %v921 = vpack.c.b16 %v889, %v889
        %v922 = vpack.c.b16 %v890, %v890
        %v923 = vpack.c.b16 %v891, %v891
        %v924 = vpack.c.b16 %v892, %v892
        %v925 = vpack.c.b16 %v893, %v893
        %v926 = vpack.c.b16 %v894, %v894
        %v927 = vpack.c.b16 %v895, %v895
        %v928 = vpack.c.b16 %v896, %v896
        %v929 = vpack.c.b16 %v897, %v897
        %v930 = vpack.c.b16 %v898, %v898
        %v931 = vpack.c.b16 %v899, %v899
        %v932 = vpack.c.b16 %v900, %v900
        %v933 = vpack.c.b16 %v901, %v901
        %v934 = vpack.c.b16 %v902, %v902
        %v935 = vpack.c.b16 %v903, %v903
        %v936 = vpack.c.b16 %v904, %v904
        %v937 = vpack.c.b16 %v905, %v905
        %v938 = vpack.c.b16 %v906, %v906
        %v939 = vpack.c.b16 %v907, %v907
        %v940 = vpack.c.b16 %v908, %v908
        %v941 = vpack.c.b16 %v909, %v909
        %v942 = vpack.c.b16 %v910, %v910
        %v943 = vpack.c.b16 %v911, %v911
        %v944 = vpack.c.b16 %v912, %v912
        %v945 = vpack.c.b16 %v913, %v913
        %v946 = vpack.c.b16 %v914, %v914
        %979 = vst [vmem:[%s257] sm:$0xf] %v915
        %980 = vst [vmem:[%s257 + $0x4] sm:$0xf] %v916
        %981 = vst [vmem:[%s257 + $0x8] sm:$0xf] %v917
        %982 = vst [vmem:[%s257 + $0xc] sm:$0xf] %v918
        %983 = vst [vmem:[%s257 + $0x10] sm:$0xf] %v919
        %984 = vst [vmem:[%s257 + $0x14] sm:$0xf] %v920
        %985 = vst [vmem:[%s257 + $0x18] sm:$0xf] %v921
        %986 = vst [vmem:[%s257 + $0x1c] sm:$0xf] %v922
        %987 = vst [vmem:[%s257 + $0x20] sm:$0xf] %v923
        %988 = vst [vmem:[%s257 + $0x24] sm:$0xf] %v924
        %989 = vst [vmem:[%s257 + $0x28] sm:$0xf] %v925
        %990 = vst [vmem:[%s257 + $0x2c] sm:$0xf] %v926
        %991 = vst [vmem:[%s257 + $0x30] sm:$0xf] %v927
        %992 = vst [vmem:[%s257 + $0x34] sm:$0xf] %v928
        %993 = vst [vmem:[%s257 + $0x38] sm:$0xf] %v929
        %994 = vst [vmem:[%s257 + $0x3c] sm:$0xf] %v930
        %995 = vst [vmem:[%s257 + $0x40] sm:$0xf] %v931
        %996 = vst [vmem:[%s257 + $0x44] sm:$0xf] %v932
        %997 = vst [vmem:[%s257 + $0x48] sm:$0xf] %v933
        %998 = vst [vmem:[%s257 + $0x4c] sm:$0xf] %v934
        %999 = vst [vmem:[%s257 + $0x50] sm:$0xf] %v935
        %1000 = vst [vmem:[%s257 + $0x54] sm:$0xf] %v936
        %1001 = vst [vmem:[%s257 + $0x58] sm:$0xf] %v937
        %1002 = vst [vmem:[%s257 + $0x5c] sm:$0xf] %v938
        %1003 = vst [vmem:[%s257 + $0x60] sm:$0xf] %v939
        %1004 = vst [vmem:[%s257 + $0x64] sm:$0xf] %v940
        %1005 = vst [vmem:[%s257 + $0x68] sm:$0xf] %v941
        %1006 = vst [vmem:[%s257 + $0x6c] sm:$0xf] %v942
        %1007 = vst [vmem:[%s257 + $0x70] sm:$0xf] %v943
        %1008 = vst [vmem:[%s257 + $0x74] sm:$0xf] %v944
        %1009 = vst [vmem:[%s257 + $0x78] sm:$0xf] %v945
        %1010 = vst [vmem:[%s257 + $0x7c] sm:$0xf] %v946
      $region40: #{convnet_forward.5} parent=31 // pred_fallthru
        _
      %s1011 = smul.u32 32, %s19
      %p1012 = scmp.lt.s32.totalorder %s1011, 95
      %s1013 = scalar_select %p1012, %s1011, 95
      %p1014 = scmp.lt.s32.totalorder %s20, 0
      %s1015 = scalar_select %p1014, %s20, 0
      %s1016 = sadd.s32 %s1015, %s1013
      %s1017 = smul.addr %s1016, 4
      %s1018 = scalar_lea.vmem %s3, %s1017
      // Predicated region
      $region41: #{convnet_forward.5} parent=31 // pred_check
        %p1019 = pneg %p135
      $region42: #{convnet_forward.5} parent=31 // pred_check_branch
        %1021 = sbr.rel (%p1019) target = $region44
      $region43: #{convnet_forward.5} parent=31 // pred_region
        %s1022 = smul.u32 32, %s19
      $region44: #{convnet_forward.5} parent=31 // pred_fallthru
        _
    $region32: #{convnet_forward.5} parent=5 // pred_fallthru
      _
    %p1023 = scmp.le.s32.totalorder 2, %s9
    // Predicated region
    $region45: #{convnet_forward.5} parent=5 // pred_check
      %p1024 = pneg %p1023
    $region46: #{convnet_forward.5} parent=5 // pred_check_branch
      %1026 = sbr.rel (%p1024) target = $region48
    $region47: #{convnet_forward.5} parent=5 // pred_region
      %s1027 = ssub.s32 %s9, 2
      // Predicated region
      $region49: #{convnet_forward.5} parent=47 // pred_check
        %p1028 = pneg %p141
      $region50: #{convnet_forward.5} parent=47 // pred_check_branch
        %1030 = sbr.rel (%p1028) target = $region52
      $region51: #{convnet_forward.5} parent=47 // pred_region
        %s1031 = smul.u32 32, %s22
        %p1032 = scmp.lt.s32.totalorder %s1031, 95
        %s1033 = scalar_select %p1032, %s1031, 95
        %p1034 = scmp.lt.s32.totalorder %s23, 0
        %s1035 = scalar_select %p1034, %s23, 0
        %s1036 = sadd.s32 %s1035, %s1033
        %s1037 = smul.addr %s1036, 4
        %s1038 = scalar_lea.vmem %s3, %s1037
      $region52: #{convnet_forward.5} parent=47 // pred_fallthru
        _
    $region48: #{convnet_forward.5} parent=5 // pred_fallthru
      _
  $region6: #{convnet_forward.5} parent=0 // loop_footer
    %s13 = sadd.s32 1, %s9
  $region7: #{convnet_forward.5} parent=0 // loop_footer_branch
    %8 = sbr.rel target = $region3
  $region8: #{convnet_forward.5} parent=0 // loop_exit
    _

// kernel: convnet_forward.6
$region0: #{convnet_forward.6}
  #allocation0 [shape = 'u32[]', space=smem, size = 0x4, offset = 0x4, fixed_abs, tag = 'smem constant byte address 0x4 - core index']
  #allocation1 [shape = 'u32[144,128]{1,0:T(1,128)}', space=vmem, size = 0x12000, scoped, tag = 'internal scratch']
  #allocation2 [shape = 'f32[104,128]{1,0:T(8,128)}', space=vmem, size = 0xd000, scoped, tag = 'scratch operand']
  %s0 = inlined_call_operand.vmem [shape: bf16[104,512], index: 0, kind: input, shape index: {}]
  %s1 = inlined_call_operand.vmem [shape: bf16[512,128], index: 1, kind: input, shape index: {}]
  %s2 = inlined_call_operand.vmem [shape: f32[1,128], index: 2, kind: input, shape index: {}]
  %s3 = inlined_call_operand.vmem [shape: bf16[104,128], index: 3, kind: output, shape index: {}]
  %s4 = sld [smem:[#allocation0]]
  $region30: #{convnet_forward.6} parent=0
    _
  %s6 = ssub.s32 1, %s4
  %s7 = scalar_select 0, %s6, %s4
  // Predicated region
  $region2: #{convnet_forward.6} parent=0 // pred_check
    _
  $region3: #{convnet_forward.6} parent=0 // pred_check_branch
    %9 = sbr.rel (0) target = $region5
  $region4: #{convnet_forward.6} parent=0 // pred_region
    _
  $region5: #{convnet_forward.6} parent=0 // pred_fallthru
    _
  // Predicated region
  $region6: #{convnet_forward.6} parent=0 // pred_check
    _
  $region7: #{convnet_forward.6} parent=0 // pred_check_branch
    %11 = sbr.rel (0) target = $region9
  $region8: #{convnet_forward.6} parent=0 // pred_region
    _
  $region9: #{convnet_forward.6} parent=0 // pred_fallthru
    _
  // Predicated region
  $region10: #{convnet_forward.6} parent=0 // pred_check
    _
  $region11: #{convnet_forward.6} parent=0 // pred_check_branch
    %13 = sbr.rel (0) target = $region13
  $region12: #{convnet_forward.6} parent=0 // pred_region
    _
  $region13: #{convnet_forward.6} parent=0 // pred_fallthru
    _
  %p15 = scmp.eq.s32.totalorder 0, 0
  // Predicated region
  $region14: #{convnet_forward.6} parent=0 // pred_check
    %p16 = pneg %p15
  $region15: #{convnet_forward.6} parent=0 // pred_check_branch
    %18 = sbr.rel (%p16) target = $region17
  $region16: #{convnet_forward.6} parent=0 // pred_region
    %19 = vst [vmem:[#allocation2] sm:$0xff] 0.0
    %20 = vst [vmem:[#allocation2 + $0x8] sm:$0xff] 0.0
    %21 = vst [vmem:[#allocation2 + $0x10] sm:$0xff] 0.0
    %22 = vst [vmem:[#allocation2 + $0x18] sm:$0xff] 0.0
    %23 = vst [vmem:[#allocation2 + $0x20] sm:$0xff] 0.0
    %24 = vst [vmem:[#allocation2 + $0x28] sm:$0xff] 0.0
    %25 = vst [vmem:[#allocation2 + $0x30] sm:$0xff] 0.0
    %26 = vst [vmem:[#allocation2 + $0x38] sm:$0xff] 0.0
    %27 = vst [vmem:[#allocation2 + $0x40] sm:$0xff] 0.0
    %28 = vst [vmem:[#allocation2 + $0x48] sm:$0xff] 0.0
    %29 = vst [vmem:[#allocation2 + $0x50] sm:$0xff] 0.0
    %30 = vst [vmem:[#allocation2 + $0x58] sm:$0xff] 0.0
    %31 = vst [vmem:[#allocation2 + $0x60] sm:$0xff] 0.0
  $region17: #{convnet_forward.6} parent=0 // pred_fallthru
    _
  %v32 = vld [vmem:[#allocation2] sm:$0xff]
  %v33 = vld [vmem:[#allocation2 + $0x8] sm:$0xff]
  %v34 = vld [vmem:[#allocation2 + $0x10] sm:$0xff]
  %v35 = vld [vmem:[#allocation2 + $0x18] sm:$0xff]
  %v36 = vld [vmem:[#allocation2 + $0x20] sm:$0xff]
  %v37 = vld [vmem:[#allocation2 + $0x28] sm:$0xff]
  %v38 = vld [vmem:[#allocation2 + $0x30] sm:$0xff]
  %v39 = vld [vmem:[#allocation2 + $0x38] sm:$0xff]
  %v40 = vld [vmem:[#allocation2 + $0x40] sm:$0xff]
  %v41 = vld [vmem:[#allocation2 + $0x48] sm:$0xff]
  %v42 = vld [vmem:[#allocation2 + $0x50] sm:$0xff]
  %v43 = vld [vmem:[#allocation2 + $0x58] sm:$0xff]
  %v44 = vld [vmem:[#allocation2 + $0x60] sm:$0xff]
  %v45 = vld [vmem:[%s0] sm:$0xff]
  %v46 = vld [vmem:[%s0 + $0x8] sm:$0xff]
  %v47 = vld [vmem:[%s0 + $0x10] sm:$0xff]
  %v48 = vld [vmem:[%s0 + $0x18] sm:$0xff]
  %v49 = vld [vmem:[%s0 + $0x20] sm:$0xff]
  %v50 = vld [vmem:[%s0 + $0x28] sm:$0xff]
  %v51 = vld [vmem:[%s0 + $0x30] sm:$0xff]
  %v52 = vld [vmem:[%s0 + $0x38] sm:$0xff]
  %v53 = vld [vmem:[%s0 + $0x40] sm:$0xff]
  %v54 = vld [vmem:[%s0 + $0x48] sm:$0xff]
  %v55 = vld [vmem:[%s0 + $0x50] sm:$0xff]
  %v56 = vld [vmem:[%s0 + $0x58] sm:$0xff]
  %v57 = vld [vmem:[%s0 + $0x60] sm:$0xff]
  %v58 = vld [vmem:[%s0 + $0x68] sm:$0xff]
  %v59 = vld [vmem:[%s0 + $0x70] sm:$0xff]
  %v60 = vld [vmem:[%s0 + $0x78] sm:$0xff]
  %v61 = vld [vmem:[%s0 + $0x80] sm:$0xff]
  %v62 = vld [vmem:[%s0 + $0x88] sm:$0xff]
  %v63 = vld [vmem:[%s0 + $0x90] sm:$0xff]
  %v64 = vld [vmem:[%s0 + $0x98] sm:$0xff]
  %v65 = vld [vmem:[%s0 + $0xa0] sm:$0xff]
  %v66 = vld [vmem:[%s0 + $0xa8] sm:$0xff]
  %v67 = vld [vmem:[%s0 + $0xb0] sm:$0xff]
  %v68 = vld [vmem:[%s0 + $0xb8] sm:$0xff]
  %v69 = vld [vmem:[%s0 + $0xc0] sm:$0xff]
  %v70 = vld [vmem:[%s0 + $0xc8] sm:$0xff]
  %v71 = vld [vmem:[%s1] sm:$0xf]
  %v72 = vld [vmem:[%s1 + $0x4] sm:$0xf]
  %v73 = vld [vmem:[%s1 + $0x8] sm:$0xf]
  %v74 = vld [vmem:[%s1 + $0xc] sm:$0xf]
  %v75 = vld [vmem:[%s1 + $0x10] sm:$0xf]
  %v76 = vld [vmem:[%s1 + $0x14] sm:$0xf]
  %v77 = vld [vmem:[%s1 + $0x18] sm:$0xf]
  %v78 = vld [vmem:[%s1 + $0x1c] sm:$0xf]
  %v79 = vld [vmem:[%s1 + $0x20] sm:$0xf]
  %v80 = vld [vmem:[%s1 + $0x24] sm:$0xf]
  %v81 = vld [vmem:[%s1 + $0x28] sm:$0xf]
  %v82 = vld [vmem:[%s1 + $0x2c] sm:$0xf]
  %v83 = vld [vmem:[%s1 + $0x30] sm:$0xf]
  %v84 = vld [vmem:[%s1 + $0x34] sm:$0xf]
  %v85 = vld [vmem:[%s1 + $0x38] sm:$0xf]
  %v86 = vld [vmem:[%s1 + $0x3c] sm:$0xf]
  %v87 = vld [vmem:[%s1 + $0x40] sm:$0xf]
  %v88 = vld [vmem:[%s1 + $0x44] sm:$0xf]
  %v89 = vld [vmem:[%s1 + $0x48] sm:$0xf]
  %v90 = vld [vmem:[%s1 + $0x4c] sm:$0xf]
  %v91 = vld [vmem:[%s1 + $0x50] sm:$0xf]
  %v92 = vld [vmem:[%s1 + $0x54] sm:$0xf]
  %v93 = vld [vmem:[%s1 + $0x58] sm:$0xf]
  %v94 = vld [vmem:[%s1 + $0x5c] sm:$0xf]
  %v95 = vld [vmem:[%s1 + $0x60] sm:$0xf]
  %v96 = vld [vmem:[%s1 + $0x64] sm:$0xf]
  %v97 = vld [vmem:[%s1 + $0x68] sm:$0xf]
  %v98 = vld [vmem:[%s1 + $0x6c] sm:$0xf]
  %v99 = vld [vmem:[%s1 + $0x70] sm:$0xf]
  %v100 = vld [vmem:[%s1 + $0x74] sm:$0xf]
  %v101 = vld [vmem:[%s1 + $0x78] sm:$0xf]
  %v102 = vld [vmem:[%s1 + $0x7c] sm:$0xf]
  %v103 = vld [vmem:[%s1 + $0x80] sm:$0xf]
  %v104 = vld [vmem:[%s1 + $0x84] sm:$0xf]
  %v105 = vld [vmem:[%s1 + $0x88] sm:$0xf]
  %v106 = vld [vmem:[%s1 + $0x8c] sm:$0xf]
  %v107 = vld [vmem:[%s1 + $0x90] sm:$0xf]
  %v108 = vld [vmem:[%s1 + $0x94] sm:$0xf]
  %v109 = vld [vmem:[%s1 + $0x98] sm:$0xf]
  %v110 = vld [vmem:[%s1 + $0x9c] sm:$0xf]
  %v111 = vld [vmem:[%s1 + $0xa0] sm:$0xf]
  %v112 = vld [vmem:[%s1 + $0xa4] sm:$0xf]
  %v113 = vld [vmem:[%s1 + $0xa8] sm:$0xf]
  %v114 = vld [vmem:[%s1 + $0xac] sm:$0xf]
  %v115 = vld [vmem:[%s1 + $0xb0] sm:$0xf]
  %v116 = vld [vmem:[%s1 + $0xb4] sm:$0xf]
  %v117 = vld [vmem:[%s1 + $0xb8] sm:$0xf]
  %v118 = vld [vmem:[%s1 + $0xbc] sm:$0xf]
  %v119 = vld [vmem:[%s1 + $0xc0] sm:$0xf]
  %v120 = vld [vmem:[%s1 + $0xc4] sm:$0xf]
  %v121 = vld [vmem:[%s1 + $0xc8] sm:$0xf]
  %v122 = vld [vmem:[%s1 + $0xcc] sm:$0xf]
  %v123 = vld [vmem:[%s1 + $0xd0] sm:$0xf]
  %v124 = vld [vmem:[%s1 + $0xd4] sm:$0xf]
  %v125 = vld [vmem:[%s1 + $0xd8] sm:$0xf]
  %v126 = vld [vmem:[%s1 + $0xdc] sm:$0xf]
  %v127 = vld [vmem:[%s1 + $0xe0] sm:$0xf]
  %v128 = vld [vmem:[%s1 + $0xe4] sm:$0xf]
  %v129 = vld [vmem:[%s1 + $0xe8] sm:$0xf]
  %v130 = vld [vmem:[%s1 + $0xec] sm:$0xf]
  %v131 = vld [vmem:[%s1 + $0xf0] sm:$0xf]
  %v132 = vld [vmem:[%s1 + $0xf4] sm:$0xf]
  %v133 = vld [vmem:[%s1 + $0xf8] sm:$0xf]
  %v134 = vld [vmem:[%s1 + $0xfc] sm:$0xf]
  %v161 = vunpack.c.l.b16 %v45
  %v162 = vunpack.c.h.b16 %v45
  %v163 = vunpack.c.l.b16 %v46
  %v164 = vunpack.c.h.b16 %v46
  %v165 = vunpack.c.l.b16 %v47
  %v166 = vunpack.c.h.b16 %v47
  %v167 = vunpack.c.l.b16 %v48
  %v168 = vunpack.c.h.b16 %v48
  %v169 = vunpack.c.l.b16 %v49
  %v170 = vunpack.c.h.b16 %v49
  %v171 = vunpack.c.l.b16 %v50
  %v172 = vunpack.c.h.b16 %v50
  %v173 = vunpack.c.l.b16 %v51
  %v174 = vunpack.c.h.b16 %v51
  %v175 = vunpack.c.l.b16 %v52
  %v176 = vunpack.c.h.b16 %v52
  %v177 = vunpack.c.l.b16 %v53
  %v178 = vunpack.c.h.b16 %v53
  %v179 = vunpack.c.l.b16 %v54
  %v180 = vunpack.c.h.b16 %v54
  %v181 = vunpack.c.l.b16 %v55
  %v182 = vunpack.c.h.b16 %v55
  %v183 = vunpack.c.l.b16 %v56
  %v184 = vunpack.c.h.b16 %v56
  %v185 = vunpack.c.l.b16 %v57
  %v186 = vunpack.c.h.b16 %v57
  %v187 = vunpack.c.l.b16 %v58
  %v188 = vunpack.c.h.b16 %v58
  %v189 = vunpack.c.l.b16 %v59
  %v190 = vunpack.c.h.b16 %v59
  %v191 = vunpack.c.l.b16 %v60
  %v192 = vunpack.c.h.b16 %v60
  %v193 = vunpack.c.l.b16 %v61
  %v194 = vunpack.c.h.b16 %v61
  %v195 = vunpack.c.l.b16 %v62
  %v196 = vunpack.c.h.b16 %v62
  %v197 = vunpack.c.l.b16 %v63
  %v198 = vunpack.c.h.b16 %v63
  %v199 = vunpack.c.l.b16 %v64
  %v200 = vunpack.c.h.b16 %v64
  %v201 = vunpack.c.l.b16 %v65
  %v202 = vunpack.c.h.b16 %v65
  %v203 = vunpack.c.l.b16 %v66
  %v204 = vunpack.c.h.b16 %v66
  %v205 = vunpack.c.l.b16 %v67
  %v206 = vunpack.c.h.b16 %v67
  %v207 = vunpack.c.l.b16 %v68
  %v208 = vunpack.c.h.b16 %v68
  %v209 = vunpack.c.l.b16 %v69
  %v210 = vunpack.c.h.b16 %v69
  %v211 = vunpack.c.l.b16 %v70
  %v212 = vunpack.c.h.b16 %v70
  %v213 = vpack.c.b16 %v165, %v161
  %v214 = vpack.c.b16 %v166, %v162
  %v215 = vpack.c.b16 %v167, %v163
  %v216 = vpack.c.b16 %v168, %v164
  %v217 = vpack.c.b16 %v173, %v169
  %v218 = vpack.c.b16 %v174, %v170
  %v219 = vpack.c.b16 %v175, %v171
  %v220 = vpack.c.b16 %v176, %v172
  %v221 = vpack.c.b16 %v181, %v177
  %v222 = vpack.c.b16 %v182, %v178
  %v223 = vpack.c.b16 %v183, %v179
  %v224 = vpack.c.b16 %v184, %v180
  %v225 = vpack.c.b16 %v189, %v185
  %v226 = vpack.c.b16 %v190, %v186
  %v227 = vpack.c.b16 %v191, %v187
  %v228 = vpack.c.b16 %v192, %v188
  %v229 = vpack.c.b16 %v197, %v193
  %v230 = vpack.c.b16 %v198, %v194
  %v231 = vpack.c.b16 %v199, %v195
  %v232 = vpack.c.b16 %v200, %v196
  %v233 = vpack.c.b16 %v205, %v201
  %v234 = vpack.c.b16 %v206, %v202
  %v235 = vpack.c.b16 %v207, %v203
  %v236 = vpack.c.b16 %v208, %v204
  %v237 = vpack.c.b16 %v209, %v209
  %v238 = vpack.c.b16 %v210, %v210
  %v239 = vpack.c.b16 %v211, %v211
  %v240 = vpack.c.b16 %v212, %v212
  %v333 = vunpack.c.l.b16 %v71
  %v334 = vunpack.c.l.b16 %v72
  %v335 = vunpack.c.l.b16 %v73
  %v336 = vunpack.c.l.b16 %v74
  %v337 = vunpack.c.l.b16 %v75
  %v338 = vunpack.c.l.b16 %v76
  %v339 = vunpack.c.l.b16 %v77
  %v340 = vunpack.c.l.b16 %v78
  %v341 = vunpack.c.l.b16 %v79
  %v342 = vunpack.c.l.b16 %v80
  %v343 = vunpack.c.l.b16 %v81
  %v344 = vunpack.c.l.b16 %v82
  %v345 = vunpack.c.l.b16 %v83
  %v346 = vunpack.c.l.b16 %v84
  %v347 = vunpack.c.l.b16 %v85
  %v348 = vunpack.c.l.b16 %v86
  %v349 = vunpack.c.l.b16 %v87
  %v350 = vunpack.c.l.b16 %v88
  %v351 = vunpack.c.l.b16 %v89
  %v352 = vunpack.c.l.b16 %v90
  %v353 = vunpack.c.l.b16 %v91
  %v354 = vunpack.c.l.b16 %v92
  %v355 = vunpack.c.l.b16 %v93
  %v356 = vunpack.c.l.b16 %v94
  %v357 = vunpack.c.l.b16 %v95
  %v358 = vunpack.c.l.b16 %v96
  %v359 = vunpack.c.l.b16 %v97
  %v360 = vunpack.c.l.b16 %v98
  %v361 = vunpack.c.l.b16 %v99
  %v362 = vunpack.c.l.b16 %v100
  %v363 = vunpack.c.l.b16 %v101
  %v364 = vunpack.c.l.b16 %v102
  %v365 = vunpack.c.l.b16 %v103
  %v366 = vunpack.c.l.b16 %v104
  %v367 = vunpack.c.l.b16 %v105
  %v368 = vunpack.c.l.b16 %v106
  %v369 = vunpack.c.l.b16 %v107
  %v370 = vunpack.c.l.b16 %v108
  %v371 = vunpack.c.l.b16 %v109
  %v372 = vunpack.c.l.b16 %v110
  %v373 = vunpack.c.l.b16 %v111
  %v374 = vunpack.c.l.b16 %v112
  %v375 = vunpack.c.l.b16 %v113
  %v376 = vunpack.c.l.b16 %v114
  %v377 = vunpack.c.l.b16 %v115
  %v378 = vunpack.c.l.b16 %v116
  %v379 = vunpack.c.l.b16 %v117
  %v380 = vunpack.c.l.b16 %v118
  %v381 = vunpack.c.l.b16 %v119
  %v382 = vunpack.c.l.b16 %v120
  %v383 = vunpack.c.l.b16 %v121
  %v384 = vunpack.c.l.b16 %v122
  %v385 = vunpack.c.l.b16 %v123
  %v386 = vunpack.c.l.b16 %v124
  %v387 = vunpack.c.l.b16 %v125
  %v388 = vunpack.c.l.b16 %v126
  %v389 = vunpack.c.l.b16 %v127
  %v390 = vunpack.c.l.b16 %v128
  %v391 = vunpack.c.l.b16 %v129
  %v392 = vunpack.c.l.b16 %v130
  %v393 = vunpack.c.l.b16 %v131
  %v394 = vunpack.c.l.b16 %v132
  %v395 = vunpack.c.l.b16 %v133
  %v396 = vunpack.c.l.b16 %v134
  %v397 = vpack.c.b16 %v334, %v333
  %v398 = vpack.c.b16 %v336, %v335
  %v399 = vpack.c.b16 %v338, %v337
  %v400 = vpack.c.b16 %v340, %v339
  %v401 = vpack.c.b16 %v342, %v341
  %v402 = vpack.c.b16 %v344, %v343
  %v403 = vpack.c.b16 %v346, %v345
  %v404 = vpack.c.b16 %v348, %v347
  %v405 = vpack.c.b16 %v350, %v349
  %v406 = vpack.c.b16 %v352, %v351
  %v407 = vpack.c.b16 %v354, %v353
  %v408 = vpack.c.b16 %v356, %v355
  %v409 = vpack.c.b16 %v358, %v357
  %v410 = vpack.c.b16 %v360, %v359
  %v411 = vpack.c.b16 %v362, %v361
  %v412 = vpack.c.b16 %v364, %v363
  %v413 = vpack.c.b16 %v366, %v365
  %v414 = vpack.c.b16 %v368, %v367
  %v415 = vpack.c.b16 %v370, %v369
  %v416 = vpack.c.b16 %v372, %v371
  %v417 = vpack.c.b16 %v374, %v373
  %v418 = vpack.c.b16 %v376, %v375
  %v419 = vpack.c.b16 %v378, %v377
  %v420 = vpack.c.b16 %v380, %v379
  %v421 = vpack.c.b16 %v382, %v381
  %v422 = vpack.c.b16 %v384, %v383
  %v423 = vpack.c.b16 %v386, %v385
  %v424 = vpack.c.b16 %v388, %v387
  %v425 = vpack.c.b16 %v390, %v389
  %v426 = vpack.c.b16 %v392, %v391
  %v427 = vpack.c.b16 %v394, %v393
  %v428 = vpack.c.b16 %v396, %v395
  %461 = vmatprep.subr.bf16.mxu0 0
  %462 = vmatpush1.bf16.msra.mxu0 %v404
  %463 = vmatprep.subr.bf16.mxu0 0
  %464 = vmatpush1.bf16.msra.mxu0 %v403
  %465 = vmatprep.subr.bf16.mxu0 0
  %466 = vmatpush1.bf16.msra.mxu0 %v402
  %467 = vmatprep.subr.bf16.mxu0 0
  %468 = vmatpush1.bf16.msra.mxu0 %v401
  %469 = vmatprep.subr.bf16.mxu0 0
  %470 = vmatpush1.bf16.msra.mxu0 %v400
  %471 = vmatprep.subr.bf16.mxu0 0
  %472 = vmatpush1.bf16.msra.mxu0 %v399
  %473 = vmatprep.subr.bf16.mxu0 0
  %474 = vmatpush1.bf16.msra.mxu0 %v398
  %475 = vmatprep.subr.bf16.mxu0 0
  %476 = vmatpush1.bf16.msra.mxu0 %v397
  %477 = vmatprep.subr.bf16.mxu0 0
  %478 = vmatpush2.bf16.msra.mxu0 %v412
  %479 = vmatprep.subr.bf16.mxu0 0
  %480 = vmatpush2.bf16.msra.mxu0 %v411
  %481 = vmatprep.subr.bf16.mxu0 0
  %482 = vmatpush2.bf16.msra.mxu0 %v410
  %483 = vmatprep.subr.bf16.mxu0 0
  %484 = vmatpush2.bf16.msra.mxu0 %v409
  %485 = vmatprep.subr.bf16.mxu0 0
  %486 = vmatpush2.bf16.msra.mxu0 %v408
  %487 = vmatprep.subr.bf16.mxu0 0
  %488 = vmatpush2.bf16.msra.mxu0 %v407
  %489 = vmatprep.subr.bf16.mxu0 0
  %490 = vmatpush2.bf16.msra.mxu0 %v406
  %491 = vmatprep.subr.bf16.mxu0 0
  %492 = vmatpush2.bf16.msra.mxu0 %v405
  %493 = vmatprep.mubr.bf16.mxu0 %v214
  %494 = vmatmul.mubr.bf16.gmra.mxu0 %v213
  %v495 = vpop.f32.mrf.mxu0
  %v496 = vadd.f32 0.0, %v495
  %v497 = vpop.f32.mrf.mxu0
  %v498 = vpop.f32.mrf.mxu0
  %v499 = vadd.f32 0.0, %v498
  %v500 = vpop.f32.mrf.mxu0
  %501 = vmatprep.mubr.bf16.mxu0 %v218
  %502 = vmatmul.mubr.bf16.gmra.mxu0 %v217
  %v503 = vpop.f32.mrf.mxu0
  %v504 = vadd.f32 0.0, %v503
  %v505 = vpop.f32.mrf.mxu0
  %v506 = vpop.f32.mrf.mxu0
  %v507 = vadd.f32 0.0, %v506
  %v508 = vpop.f32.mrf.mxu0
  %509 = vmatprep.mubr.bf16.mxu0 %v222
  %510 = vmatmul.mubr.bf16.gmra.mxu0 %v221
  %v511 = vpop.f32.mrf.mxu0
  %v512 = vadd.f32 0.0, %v511
  %v513 = vpop.f32.mrf.mxu0
  %v514 = vpop.f32.mrf.mxu0
  %v515 = vadd.f32 0.0, %v514
  %v516 = vpop.f32.mrf.mxu0
  %517 = vmatprep.mubr.bf16.mxu0 %v226
  %518 = vmatmul.mubr.bf16.gmra.mxu0 %v225
  %v519 = vpop.f32.mrf.mxu0
  %v520 = vadd.f32 0.0, %v519
  %v521 = vpop.f32.mrf.mxu0
  %v522 = vpop.f32.mrf.mxu0
  %v523 = vadd.f32 0.0, %v522
  %v524 = vpop.f32.mrf.mxu0
  %525 = vmatprep.mubr.bf16.mxu0 %v230
  %526 = vmatmul.mubr.bf16.gmra.mxu0 %v229
  %v527 = vpop.f32.mrf.mxu0
  %v528 = vadd.f32 0.0, %v527
  %v529 = vpop.f32.mrf.mxu0
  %v530 = vpop.f32.mrf.mxu0
  %v531 = vadd.f32 0.0, %v530
  %v532 = vpop.f32.mrf.mxu0
  %533 = vmatprep.mubr.bf16.mxu0 %v234
  %534 = vmatmul.mubr.bf16.gmra.mxu0 %v233
  %v535 = vpop.f32.mrf.mxu0
  %v536 = vadd.f32 0.0, %v535
  %v537 = vpop.f32.mrf.mxu0
  %v538 = vpop.f32.mrf.mxu0
  %v539 = vadd.f32 0.0, %v538
  %v540 = vpop.f32.mrf.mxu0
  %541 = vmatprep.mubr.bf16.mxu0 %v238
  %542 = vmatmul.mubr.bf16.gmra.mxu0 %v237
  %v543 = vpop.f32.mrf.mxu0
  %v544 = vadd.f32 0.0, %v543
  %v545 = vpop.f32.mrf.mxu0
  %v546 = vpop.f32.mrf.mxu0
  %v547 = vpop.f32.mrf.mxu0
  %548 = vdwg.mxu0
  %549 = vmatprep.subr.bf16.mxu0 0
  %550 = vmatpush1.bf16.msra.mxu0 %v420
  %551 = vmatprep.subr.bf16.mxu0 0
  %552 = vmatpush1.bf16.msra.mxu0 %v419
  %553 = vmatprep.subr.bf16.mxu0 0
  %554 = vmatpush1.bf16.msra.mxu0 %v418
  %555 = vmatprep.subr.bf16.mxu0 0
  %556 = vmatpush1.bf16.msra.mxu0 %v417
  %557 = vmatprep.subr.bf16.mxu0 0
  %558 = vmatpush1.bf16.msra.mxu0 %v416
  %559 = vmatprep.subr.bf16.mxu0 0
  %560 = vmatpush1.bf16.msra.mxu0 %v415
  %561 = vmatprep.subr.bf16.mxu0 0
  %562 = vmatpush1.bf16.msra.mxu0 %v414
  %563 = vmatprep.subr.bf16.mxu0 0
  %564 = vmatpush1.bf16.msra.mxu0 %v413
  %565 = vmatprep.subr.bf16.mxu0 0
  %566 = vmatpush2.bf16.msra.mxu0 %v428
  %567 = vmatprep.subr.bf16.mxu0 0
  %568 = vmatpush2.bf16.msra.mxu0 %v427
  %569 = vmatprep.subr.bf16.mxu0 0
  %570 = vmatpush2.bf16.msra.mxu0 %v426
  %571 = vmatprep.subr.bf16.mxu0 0
  %572 = vmatpush2.bf16.msra.mxu0 %v425
  %573 = vmatprep.subr.bf16.mxu0 0
  %574 = vmatpush2.bf16.msra.mxu0 %v424
  %575 = vmatprep.subr.bf16.mxu0 0
  %576 = vmatpush2.bf16.msra.mxu0 %v423
  %577 = vmatprep.subr.bf16.mxu0 0
  %578 = vmatpush2.bf16.msra.mxu0 %v422
  %579 = vmatprep.subr.bf16.mxu0 0
  %580 = vmatpush2.bf16.msra.mxu0 %v421
  %581 = vmatprep.mubr.bf16.mxu0 %v216
  %582 = vmatmul.mubr.bf16.gmra.mxu0 %v215
  %v583 = vpop.f32.mrf.mxu0
  %v584 = vadd.f32 %v496, %v583
  %v585 = vpop.f32.mrf.mxu0
  %v586 = vpop.f32.mrf.mxu0
  %v587 = vadd.f32 %v499, %v586
  %v588 = vpop.f32.mrf.mxu0
  %589 = vmatprep.mubr.bf16.mxu0 %v220
  %590 = vmatmul.mubr.bf16.gmra.mxu0 %v219
  %v591 = vpop.f32.mrf.mxu0
  %v592 = vadd.f32 %v504, %v591
  %v593 = vpop.f32.mrf.mxu0
  %v594 = vpop.f32.mrf.mxu0
  %v595 = vadd.f32 %v507, %v594
  %v596 = vpop.f32.mrf.mxu0
  %597 = vmatprep.mubr.bf16.mxu0 %v224
  %598 = vmatmul.mubr.bf16.gmra.mxu0 %v223
  %v599 = vpop.f32.mrf.mxu0
  %v600 = vadd.f32 %v512, %v599
  %v601 = vpop.f32.mrf.mxu0
  %v602 = vpop.f32.mrf.mxu0
  %v603 = vadd.f32 %v515, %v602
  %v604 = vpop.f32.mrf.mxu0
  %605 = vmatprep.mubr.bf16.mxu0 %v228
  %606 = vmatmul.mubr.bf16.gmra.mxu0 %v227
  %v607 = vpop.f32.mrf.mxu0
  %v608 = vadd.f32 %v520, %v607
  %v609 = vpop.f32.mrf.mxu0
  %v610 = vpop.f32.mrf.mxu0
  %v611 = vadd.f32 %v523, %v610
  %v612 = vpop.f32.mrf.mxu0
  %613 = vmatprep.mubr.bf16.mxu0 %v232
  %614 = vmatmul.mubr.bf16.gmra.mxu0 %v231
  %v615 = vpop.f32.mrf.mxu0
  %v616 = vadd.f32 %v528, %v615
  %v617 = vpop.f32.mrf.mxu0
  %v618 = vpop.f32.mrf.mxu0
  %v619 = vadd.f32 %v531, %v618
  %v620 = vpop.f32.mrf.mxu0
  %621 = vmatprep.mubr.bf16.mxu0 %v236
  %622 = vmatmul.mubr.bf16.gmra.mxu0 %v235
  %v623 = vpop.f32.mrf.mxu0
  %v624 = vadd.f32 %v536, %v623
  %v625 = vpop.f32.mrf.mxu0
  %v626 = vpop.f32.mrf.mxu0
  %v627 = vadd.f32 %v539, %v626
  %v628 = vpop.f32.mrf.mxu0
  %629 = vmatprep.mubr.bf16.mxu0 %v240
  %630 = vmatmul.mubr.bf16.gmra.mxu0 %v239
  %v631 = vpop.f32.mrf.mxu0
  %v632 = vadd.f32 %v544, %v631
  %v633 = vpop.f32.mrf.mxu0
  %v634 = vpop.f32.mrf.mxu0
  %v635 = vpop.f32.mrf.mxu0
  %636 = vdwg.mxu0
  %v637 = vadd.f32 %v32, %v584
  %v638 = vadd.f32 %v33, %v587
  %v639 = vadd.f32 %v34, %v592
  %v640 = vadd.f32 %v35, %v595
  %v641 = vadd.f32 %v36, %v600
  %v642 = vadd.f32 %v37, %v603
  %v643 = vadd.f32 %v38, %v608
  %v644 = vadd.f32 %v39, %v611
  %v645 = vadd.f32 %v40, %v616
  %v646 = vadd.f32 %v41, %v619
  %v647 = vadd.f32 %v42, %v624
  %v648 = vadd.f32 %v43, %v627
  %v649 = vadd.f32 %v44, %v632
  %650 = vst [vmem:[#allocation2] sm:$0xff] %v637
  %651 = vst [vmem:[#allocation2 + $0x8] sm:$0xff] %v638
  %652 = vst [vmem:[#allocation2 + $0x10] sm:$0xff] %v639
  %653 = vst [vmem:[#allocation2 + $0x18] sm:$0xff] %v640
  %654 = vst [vmem:[#allocation2 + $0x20] sm:$0xff] %v641
  %655 = vst [vmem:[#allocation2 + $0x28] sm:$0xff] %v642
  %656 = vst [vmem:[#allocation2 + $0x30] sm:$0xff] %v643
  %657 = vst [vmem:[#allocation2 + $0x38] sm:$0xff] %v644
  %658 = vst [vmem:[#allocation2 + $0x40] sm:$0xff] %v645
  %659 = vst [vmem:[#allocation2 + $0x48] sm:$0xff] %v646
  %660 = vst [vmem:[#allocation2 + $0x50] sm:$0xff] %v647
  %661 = vst [vmem:[#allocation2 + $0x58] sm:$0xff] %v648
  %662 = vst [vmem:[#allocation2 + $0x60] sm:$0xff] %v649
  // Predicated region
  $region18: #{convnet_forward.6} parent=0 // pred_check
    %p663 = pneg %p15
  $region19: #{convnet_forward.6} parent=0 // pred_check_branch
    %665 = sbr.rel (%p663) target = $region21
  $region20: #{convnet_forward.6} parent=0 // pred_region
    %v666 = vld [vmem:[#allocation2] sm:$0xff]
    %v667 = vld [vmem:[#allocation2 + $0x8] sm:$0xff]
    %v668 = vld [vmem:[#allocation2 + $0x10] sm:$0xff]
    %v669 = vld [vmem:[#allocation2 + $0x18] sm:$0xff]
    %v670 = vld [vmem:[#allocation2 + $0x20] sm:$0xff]
    %v671 = vld [vmem:[#allocation2 + $0x28] sm:$0xff]
    %v672 = vld [vmem:[#allocation2 + $0x30] sm:$0xff]
    %v673 = vld [vmem:[#allocation2 + $0x38] sm:$0xff]
    %v674 = vld [vmem:[#allocation2 + $0x40] sm:$0xff]
    %v675 = vld [vmem:[#allocation2 + $0x48] sm:$0xff]
    %v676 = vld [vmem:[#allocation2 + $0x50] sm:$0xff]
    %v677 = vld [vmem:[#allocation2 + $0x58] sm:$0xff]
    %v678 = vld [vmem:[#allocation2 + $0x60] sm:$0xff]
    %v679 = vld [vmem:[%s2] sm:$0x1]
    %v681 = vlaneseq
    %v682 = vshrl.u32 %v681, 7
    %v683 = vsub.s32 0, %v682
    %v684 = vrot.slane %v679, %v683
    %v686 = vadd.f32 %v666, %v684
    %v687 = vadd.f32 %v667, %v684
    %v688 = vadd.f32 %v668, %v684
    %v689 = vadd.f32 %v669, %v684
    %v690 = vadd.f32 %v670, %v684
    %v691 = vadd.f32 %v671, %v684
    %v692 = vadd.f32 %v672, %v684
    %v693 = vadd.f32 %v673, %v684
    %v694 = vadd.f32 %v674, %v684
    %v695 = vadd.f32 %v675, %v684
    %v696 = vadd.f32 %v676, %v684
    %v697 = vadd.f32 %v677, %v684
    %v698 = vadd.f32 %v678, %v684
    %v699 = vmax.f32 %v686, 0.0
    %v700 = vmax.f32 %v687, 0.0
    %v701 = vmax.f32 %v688, 0.0
    %v702 = vmax.f32 %v689, 0.0
    %v703 = vmax.f32 %v690, 0.0
    %v704 = vmax.f32 %v691, 0.0
    %v705 = vmax.f32 %v692, 0.0
    %v706 = vmax.f32 %v693, 0.0
    %v707 = vmax.f32 %v694, 0.0
    %v708 = vmax.f32 %v695, 0.0
    %v709 = vmax.f32 %v696, 0.0
    %v710 = vmax.f32 %v697, 0.0
    %v711 = vmax.f32 %v698, 0.0
    %v712 = vpack.c.bf16 %v700, %v699
    %v713 = vpack.c.bf16 %v702, %v701
    %v714 = vpack.c.bf16 %v704, %v703
    %v715 = vpack.c.bf16 %v706, %v705
    %v716 = vpack.c.bf16 %v708, %v707
    %v717 = vpack.c.bf16 %v710, %v709
    %v718 = vpack.c.bf16 %v711, %v711
    %v726 = vunpack.c.l.b16 %v712
    %v727 = vunpack.c.h.b16 %v712
    %v728 = vunpack.c.l.b16 %v713
    %v729 = vunpack.c.h.b16 %v713
    %v730 = vunpack.c.l.b16 %v714
    %v731 = vunpack.c.h.b16 %v714
    %v732 = vunpack.c.l.b16 %v715
    %v733 = vunpack.c.h.b16 %v715
    %v734 = vunpack.c.l.b16 %v716
    %v735 = vunpack.c.h.b16 %v716
    %v736 = vunpack.c.l.b16 %v717
    %v737 = vunpack.c.h.b16 %v717
    %v738 = vunpack.c.l.b16 %v718
    %v739 = vpack.c.b16 %v726, %v726
    %v740 = vpack.c.b16 %v727, %v727
    %v741 = vpack.c.b16 %v728, %v728
    %v742 = vpack.c.b16 %v729, %v729
    %v743 = vpack.c.b16 %v730, %v730
    %v744 = vpack.c.b16 %v731, %v731
    %v745 = vpack.c.b16 %v732, %v732
    %v746 = vpack.c.b16 %v733, %v733
    %v747 = vpack.c.b16 %v734, %v734
    %v748 = vpack.c.b16 %v735, %v735
    %v749 = vpack.c.b16 %v736, %v736
    %v750 = vpack.c.b16 %v737, %v737
    %v751 = vpack.c.b16 %v738, %v738
    %765 = vst [vmem:[%s3] sm:$0xf] %v739
    %766 = vst [vmem:[%s3 + $0x4] sm:$0xf] %v740
    %767 = vst [vmem:[%s3 + $0x8] sm:$0xf] %v741
    %768 = vst [vmem:[%s3 + $0xc] sm:$0xf] %v742
    %769 = vst [vmem:[%s3 + $0x10] sm:$0xf] %v743
    %770 = vst [vmem:[%s3 + $0x14] sm:$0xf] %v744
    %771 = vst [vmem:[%s3 + $0x18] sm:$0xf] %v745
    %772 = vst [vmem:[%s3 + $0x1c] sm:$0xf] %v746
    %773 = vst [vmem:[%s3 + $0x20] sm:$0xf] %v747
    %774 = vst [vmem:[%s3 + $0x24] sm:$0xf] %v748
    %775 = vst [vmem:[%s3 + $0x28] sm:$0xf] %v749
    %776 = vst [vmem:[%s3 + $0x2c] sm:$0xf] %v750
    %777 = vst [vmem:[%s3 + $0x30] sm:$0xf] %v751
  $region21: #{convnet_forward.6} parent=0 // pred_fallthru
    _
  // Predicated region
  $region22: #{convnet_forward.6} parent=0 // pred_check
    _
  $region23: #{convnet_forward.6} parent=0 // pred_check_branch
    %779 = sbr.rel (0) target = $region25
  $region24: #{convnet_forward.6} parent=0 // pred_region
    _
  $region25: #{convnet_forward.6} parent=0 // pred_fallthru
    _
  // Predicated region
  $region26: #{convnet_forward.6} parent=0 // pred_check
    _
  $region27: #{convnet_forward.6} parent=0 // pred_check_branch
    %781 = sbr.rel (0) target = $region29
  $region28: #{convnet_forward.6} parent=0 // pred_region
    _
  $region29: #{convnet_forward.6} parent=0 // pred_fallthru
    _

// kernel: convnet_forward.7
$region0: #{convnet_forward.7}
  #allocation0 [shape = 'u32[]', space=smem, size = 0x4, offset = 0x4, fixed_abs, tag = 'smem constant byte address 0x4 - core index']
  #allocation1 [shape = 'u32[144,128]{1,0:T(1,128)}', space=vmem, size = 0x12000, scoped, tag = 'internal scratch']
  #allocation2 [shape = 'f32[8,128]{1,0:T(8,128)}', space=vmem, size = 0x1000, scoped, tag = 'scratch operand']
  %s0 = inlined_call_operand.vmem [shape: bf16[8,896], index: 0, kind: input, shape index: {}]
  %s1 = inlined_call_operand.vmem [shape: bf16[896,128], index: 1, kind: input, shape index: {}]
  %s2 = inlined_call_operand.vmem [shape: f32[1,128], index: 2, kind: input, shape index: {}]
  %s3 = inlined_call_operand.vmem [shape: bf16[8,128], index: 3, kind: output, shape index: {}]
  %s4 = sld [smem:[#allocation0]]
  $region30: #{convnet_forward.7} parent=0
    _
  %s6 = ssub.s32 1, %s4
  %s7 = scalar_select 0, %s6, %s4
  // Predicated region
  $region2: #{convnet_forward.7} parent=0 // pred_check
    _
  $region3: #{convnet_forward.7} parent=0 // pred_check_branch
    %9 = sbr.rel (0) target = $region5
  $region4: #{convnet_forward.7} parent=0 // pred_region
    _
  $region5: #{convnet_forward.7} parent=0 // pred_fallthru
    _
  // Predicated region
  $region6: #{convnet_forward.7} parent=0 // pred_check
    _
  $region7: #{convnet_forward.7} parent=0 // pred_check_branch
    %11 = sbr.rel (0) target = $region9
  $region8: #{convnet_forward.7} parent=0 // pred_region
    _
  $region9: #{convnet_forward.7} parent=0 // pred_fallthru
    _
  // Predicated region
  $region10: #{convnet_forward.7} parent=0 // pred_check
    _
  $region11: #{convnet_forward.7} parent=0 // pred_check_branch
    %13 = sbr.rel (0) target = $region13
  $region12: #{convnet_forward.7} parent=0 // pred_region
    _
  $region13: #{convnet_forward.7} parent=0 // pred_fallthru
    _
  %p15 = scmp.eq.s32.totalorder 0, 0
  // Predicated region
  $region14: #{convnet_forward.7} parent=0 // pred_check
    %p16 = pneg %p15
  $region15: #{convnet_forward.7} parent=0 // pred_check_branch
    %18 = sbr.rel (%p16) target = $region17
  $region16: #{convnet_forward.7} parent=0 // pred_region
    %19 = vst [vmem:[#allocation2] sm:$0xff] 0.0
  $region17: #{convnet_forward.7} parent=0 // pred_fallthru
    _
  %v20 = vld [vmem:[#allocation2] sm:$0xff]
  %v21 = vld [vmem:[%s0] sm:$0xff]
  %v22 = vld [vmem:[%s0 + $0x8] sm:$0xff]
  %v23 = vld [vmem:[%s0 + $0x10] sm:$0xff]
  %v24 = vld [vmem:[%s0 + $0x18] sm:$0xf]
  %v25 = vld [vmem:[%s1] sm:$0xf]
  %v26 = vld [vmem:[%s1 + $0x4] sm:$0xf]
  %v27 = vld [vmem:[%s1 + $0x8] sm:$0xf]
  %v28 = vld [vmem:[%s1 + $0xc] sm:$0xf]
  %v29 = vld [vmem:[%s1 + $0x10] sm:$0xf]
  %v30 = vld [vmem:[%s1 + $0x14] sm:$0xf]
  %v31 = vld [vmem:[%s1 + $0x18] sm:$0xf]
  %v32 = vld [vmem:[%s1 + $0x1c] sm:$0xf]
  %v33 = vld [vmem:[%s1 + $0x20] sm:$0xf]
  %v34 = vld [vmem:[%s1 + $0x24] sm:$0xf]
  %v35 = vld [vmem:[%s1 + $0x28] sm:$0xf]
  %v36 = vld [vmem:[%s1 + $0x2c] sm:$0xf]
  %v37 = vld [vmem:[%s1 + $0x30] sm:$0xf]
  %v38 = vld [vmem:[%s1 + $0x34] sm:$0xf]
  %v39 = vld [vmem:[%s1 + $0x38] sm:$0xf]
  %v40 = vld [vmem:[%s1 + $0x3c] sm:$0xf]
  %v41 = vld [vmem:[%s1 + $0x40] sm:$0xf]
  %v42 = vld [vmem:[%s1 + $0x44] sm:$0xf]
  %v43 = vld [vmem:[%s1 + $0x48] sm:$0xf]
  %v44 = vld [vmem:[%s1 + $0x4c] sm:$0xf]
  %v45 = vld [vmem:[%s1 + $0x50] sm:$0xf]
  %v46 = vld [vmem:[%s1 + $0x54] sm:$0xf]
  %v47 = vld [vmem:[%s1 + $0x58] sm:$0xf]
  %v48 = vld [vmem:[%s1 + $0x5c] sm:$0xf]
  %v49 = vld [vmem:[%s1 + $0x60] sm:$0xf]
  %v50 = vld [vmem:[%s1 + $0x64] sm:$0xf]
  %v51 = vld [vmem:[%s1 + $0x68] sm:$0xf]
  %v52 = vld [vmem:[%s1 + $0x6c] sm:$0xf]
  %v53 = vld [vmem:[%s1 + $0x70] sm:$0xf]
  %v54 = vld [vmem:[%s1 + $0x74] sm:$0xf]
  %v55 = vld [vmem:[%s1 + $0x78] sm:$0xf]
  %v56 = vld [vmem:[%s1 + $0x7c] sm:$0xf]
  %v57 = vld [vmem:[%s1 + $0x80] sm:$0xf]
  %v58 = vld [vmem:[%s1 + $0x84] sm:$0xf]
  %v59 = vld [vmem:[%s1 + $0x88] sm:$0xf]
  %v60 = vld [vmem:[%s1 + $0x8c] sm:$0xf]
  %v61 = vld [vmem:[%s1 + $0x90] sm:$0xf]
  %v62 = vld [vmem:[%s1 + $0x94] sm:$0xf]
  %v63 = vld [vmem:[%s1 + $0x98] sm:$0xf]
  %v64 = vld [vmem:[%s1 + $0x9c] sm:$0xf]
  %v65 = vld [vmem:[%s1 + $0xa0] sm:$0xf]
  %v66 = vld [vmem:[%s1 + $0xa4] sm:$0xf]
  %v67 = vld [vmem:[%s1 + $0xa8] sm:$0xf]
  %v68 = vld [vmem:[%s1 + $0xac] sm:$0xf]
  %v69 = vld [vmem:[%s1 + $0xb0] sm:$0xf]
  %v70 = vld [vmem:[%s1 + $0xb4] sm:$0xf]
  %v71 = vld [vmem:[%s1 + $0xb8] sm:$0xf]
  %v72 = vld [vmem:[%s1 + $0xbc] sm:$0xf]
  %v73 = vld [vmem:[%s1 + $0xc0] sm:$0xf]
  %v74 = vld [vmem:[%s1 + $0xc4] sm:$0xf]
  %v75 = vld [vmem:[%s1 + $0xc8] sm:$0xf]
  %v76 = vld [vmem:[%s1 + $0xcc] sm:$0xf]
  %v77 = vld [vmem:[%s1 + $0xd0] sm:$0xf]
  %v78 = vld [vmem:[%s1 + $0xd4] sm:$0xf]
  %v79 = vld [vmem:[%s1 + $0xd8] sm:$0xf]
  %v80 = vld [vmem:[%s1 + $0xdc] sm:$0xf]
  %v81 = vld [vmem:[%s1 + $0xe0] sm:$0xf]
  %v82 = vld [vmem:[%s1 + $0xe4] sm:$0xf]
  %v83 = vld [vmem:[%s1 + $0xe8] sm:$0xf]
  %v84 = vld [vmem:[%s1 + $0xec] sm:$0xf]
  %v85 = vld [vmem:[%s1 + $0xf0] sm:$0xf]
  %v86 = vld [vmem:[%s1 + $0xf4] sm:$0xf]
  %v87 = vld [vmem:[%s1 + $0xf8] sm:$0xf]
  %v88 = vld [vmem:[%s1 + $0xfc] sm:$0xf]
  %v89 = vld [vmem:[%s1 + $0x100] sm:$0xf]
  %v90 = vld [vmem:[%s1 + $0x104] sm:$0xf]
  %v91 = vld [vmem:[%s1 + $0x108] sm:$0xf]
  %v92 = vld [vmem:[%s1 + $0x10c] sm:$0xf]
  %v93 = vld [vmem:[%s1 + $0x110] sm:$0xf]
  %v94 = vld [vmem:[%s1 + $0x114] sm:$0xf]
  %v95 = vld [vmem:[%s1 + $0x118] sm:$0xf]
  %v96 = vld [vmem:[%s1 + $0x11c] sm:$0xf]
  %v97 = vld [vmem:[%s1 + $0x120] sm:$0xf]
  %v98 = vld [vmem:[%s1 + $0x124] sm:$0xf]
  %v99 = vld [vmem:[%s1 + $0x128] sm:$0xf]
  %v100 = vld [vmem:[%s1 + $0x12c] sm:$0xf]
  %v101 = vld [vmem:[%s1 + $0x130] sm:$0xf]
  %v102 = vld [vmem:[%s1 + $0x134] sm:$0xf]
  %v103 = vld [vmem:[%s1 + $0x138] sm:$0xf]
  %v104 = vld [vmem:[%s1 + $0x13c] sm:$0xf]
  %v105 = vld [vmem:[%s1 + $0x140] sm:$0xf]
  %v106 = vld [vmem:[%s1 + $0x144] sm:$0xf]
  %v107 = vld [vmem:[%s1 + $0x148] sm:$0xf]
  %v108 = vld [vmem:[%s1 + $0x14c] sm:$0xf]
  %v109 = vld [vmem:[%s1 + $0x150] sm:$0xf]
  %v110 = vld [vmem:[%s1 + $0x154] sm:$0xf]
  %v111 = vld [vmem:[%s1 + $0x158] sm:$0xf]
  %v112 = vld [vmem:[%s1 + $0x15c] sm:$0xf]
  %v113 = vld [vmem:[%s1 + $0x160] sm:$0xf]
  %v114 = vld [vmem:[%s1 + $0x164] sm:$0xf]
  %v115 = vld [vmem:[%s1 + $0x168] sm:$0xf]
  %v116 = vld [vmem:[%s1 + $0x16c] sm:$0xf]
  %v117 = vld [vmem:[%s1 + $0x170] sm:$0xf]
  %v118 = vld [vmem:[%s1 + $0x174] sm:$0xf]
  %v119 = vld [vmem:[%s1 + $0x178] sm:$0xf]
  %v120 = vld [vmem:[%s1 + $0x17c] sm:$0xf]
  %v121 = vld [vmem:[%s1 + $0x180] sm:$0xf]
  %v122 = vld [vmem:[%s1 + $0x184] sm:$0xf]
  %v123 = vld [vmem:[%s1 + $0x188] sm:$0xf]
  %v124 = vld [vmem:[%s1 + $0x18c] sm:$0xf]
  %v125 = vld [vmem:[%s1 + $0x190] sm:$0xf]
  %v126 = vld [vmem:[%s1 + $0x194] sm:$0xf]
  %v127 = vld [vmem:[%s1 + $0x198] sm:$0xf]
  %v128 = vld [vmem:[%s1 + $0x19c] sm:$0xf]
  %v129 = vld [vmem:[%s1 + $0x1a0] sm:$0xf]
  %v130 = vld [vmem:[%s1 + $0x1a4] sm:$0xf]
  %v131 = vld [vmem:[%s1 + $0x1a8] sm:$0xf]
  %v132 = vld [vmem:[%s1 + $0x1ac] sm:$0xf]
  %v133 = vld [vmem:[%s1 + $0x1b0] sm:$0xf]
  %v134 = vld [vmem:[%s1 + $0x1b4] sm:$0xf]
  %v135 = vld [vmem:[%s1 + $0x1b8] sm:$0xf]
  %v136 = vld [vmem:[%s1 + $0x1bc] sm:$0xf]
  %v141 = vunpack.c.l.b16 %v21
  %v142 = vunpack.c.h.b16 %v21
  %v143 = vunpack.c.l.b16 %v22
  %v144 = vunpack.c.h.b16 %v22
  %v145 = vunpack.c.l.b16 %v23
  %v146 = vunpack.c.h.b16 %v23
  %v147 = vunpack.c.l.b16 %v24
  %v148 = vpack.c.b16 %v141, %v141
  %v149 = vpack.c.b16 %v142, %v142
  %v150 = vpack.c.b16 %v143, %v143
  %v151 = vpack.c.b16 %v144, %v144
  %v152 = vpack.c.b16 %v145, %v145
  %v153 = vpack.c.b16 %v146, %v146
  %v154 = vpack.c.b16 %v147, %v147
  %v274 = vunpack.c.l.b16 %v25
  %v275 = vunpack.c.l.b16 %v26
  %v276 = vunpack.c.l.b16 %v27
  %v277 = vunpack.c.l.b16 %v28
  %v278 = vunpack.c.l.b16 %v29
  %v279 = vunpack.c.l.b16 %v30
  %v280 = vunpack.c.l.b16 %v31
  %v281 = vunpack.c.l.b16 %v32
  %v282 = vunpack.c.l.b16 %v33
  %v283 = vunpack.c.l.b16 %v34
  %v284 = vunpack.c.l.b16 %v35
  %v285 = vunpack.c.l.b16 %v36
  %v286 = vunpack.c.l.b16 %v37
  %v287 = vunpack.c.l.b16 %v38
  %v288 = vunpack.c.l.b16 %v39
  %v289 = vunpack.c.l.b16 %v40
  %v290 = vunpack.c.l.b16 %v41
  %v291 = vunpack.c.l.b16 %v42
  %v292 = vunpack.c.l.b16 %v43
  %v293 = vunpack.c.l.b16 %v44
  %v294 = vunpack.c.l.b16 %v45
  %v295 = vunpack.c.l.b16 %v46
  %v296 = vunpack.c.l.b16 %v47
  %v297 = vunpack.c.l.b16 %v48
  %v298 = vunpack.c.l.b16 %v49
  %v299 = vunpack.c.l.b16 %v50
  %v300 = vunpack.c.l.b16 %v51
  %v301 = vunpack.c.l.b16 %v52
  %v302 = vunpack.c.l.b16 %v53
  %v303 = vunpack.c.l.b16 %v54
  %v304 = vunpack.c.l.b16 %v55
  %v305 = vunpack.c.l.b16 %v56
  %v306 = vunpack.c.l.b16 %v57
  %v307 = vunpack.c.l.b16 %v58
  %v308 = vunpack.c.l.b16 %v59
  %v309 = vunpack.c.l.b16 %v60
  %v310 = vunpack.c.l.b16 %v61
  %v311 = vunpack.c.l.b16 %v62
  %v312 = vunpack.c.l.b16 %v63
  %v313 = vunpack.c.l.b16 %v64
  %v314 = vunpack.c.l.b16 %v65
  %v315 = vunpack.c.l.b16 %v66
  %v316 = vunpack.c.l.b16 %v67
  %v317 = vunpack.c.l.b16 %v68
  %v318 = vunpack.c.l.b16 %v69
  %v319 = vunpack.c.l.b16 %v70
  %v320 = vunpack.c.l.b16 %v71
  %v321 = vunpack.c.l.b16 %v72
  %v322 = vunpack.c.l.b16 %v73
  %v323 = vunpack.c.l.b16 %v74
  %v324 = vunpack.c.l.b16 %v75
  %v325 = vunpack.c.l.b16 %v76
  %v326 = vunpack.c.l.b16 %v77
  %v327 = vunpack.c.l.b16 %v78
  %v328 = vunpack.c.l.b16 %v79
  %v329 = vunpack.c.l.b16 %v80
  %v330 = vunpack.c.l.b16 %v81
  %v331 = vunpack.c.l.b16 %v82
  %v332 = vunpack.c.l.b16 %v83
  %v333 = vunpack.c.l.b16 %v84
  %v334 = vunpack.c.l.b16 %v85
  %v335 = vunpack.c.l.b16 %v86
  %v336 = vunpack.c.l.b16 %v87
  %v337 = vunpack.c.l.b16 %v88
  %v338 = vunpack.c.l.b16 %v89
  %v339 = vunpack.c.l.b16 %v90
  %v340 = vunpack.c.l.b16 %v91
  %v341 = vunpack.c.l.b16 %v92
  %v342 = vunpack.c.l.b16 %v93
  %v343 = vunpack.c.l.b16 %v94
  %v344 = vunpack.c.l.b16 %v95
  %v345 = vunpack.c.l.b16 %v96
  %v346 = vunpack.c.l.b16 %v97
  %v347 = vunpack.c.l.b16 %v98
  %v348 = vunpack.c.l.b16 %v99
  %v349 = vunpack.c.l.b16 %v100
  %v350 = vunpack.c.l.b16 %v101
  %v351 = vunpack.c.l.b16 %v102
  %v352 = vunpack.c.l.b16 %v103
  %v353 = vunpack.c.l.b16 %v104
  %v354 = vunpack.c.l.b16 %v105
  %v355 = vunpack.c.l.b16 %v106
  %v356 = vunpack.c.l.b16 %v107
  %v357 = vunpack.c.l.b16 %v108
  %v358 = vunpack.c.l.b16 %v109
  %v359 = vunpack.c.l.b16 %v110
  %v360 = vunpack.c.l.b16 %v111
  %v361 = vunpack.c.l.b16 %v112
  %v362 = vunpack.c.l.b16 %v113
  %v363 = vunpack.c.l.b16 %v114
  %v364 = vunpack.c.l.b16 %v115
  %v365 = vunpack.c.l.b16 %v116
  %v366 = vunpack.c.l.b16 %v117
  %v367 = vunpack.c.l.b16 %v118
  %v368 = vunpack.c.l.b16 %v119
  %v369 = vunpack.c.l.b16 %v120
  %v370 = vunpack.c.l.b16 %v121
  %v371 = vunpack.c.l.b16 %v122
  %v372 = vunpack.c.l.b16 %v123
  %v373 = vunpack.c.l.b16 %v124
  %v374 = vunpack.c.l.b16 %v125
  %v375 = vunpack.c.l.b16 %v126
  %v376 = vunpack.c.l.b16 %v127
  %v377 = vunpack.c.l.b16 %v128
  %v378 = vunpack.c.l.b16 %v129
  %v379 = vunpack.c.l.b16 %v130
  %v380 = vunpack.c.l.b16 %v131
  %v381 = vunpack.c.l.b16 %v132
  %v382 = vunpack.c.l.b16 %v133
  %v383 = vunpack.c.l.b16 %v134
  %v384 = vunpack.c.l.b16 %v135
  %v385 = vunpack.c.l.b16 %v136
  %v386 = vpack.c.b16 %v275, %v274
  %v387 = vpack.c.b16 %v277, %v276
  %v388 = vpack.c.b16 %v279, %v278
  %v389 = vpack.c.b16 %v281, %v280
  %v390 = vpack.c.b16 %v283, %v282
  %v391 = vpack.c.b16 %v285, %v284
  %v392 = vpack.c.b16 %v287, %v286
  %v393 = vpack.c.b16 %v289, %v288
  %v394 = vpack.c.b16 %v291, %v290
  %v395 = vpack.c.b16 %v293, %v292
  %v396 = vpack.c.b16 %v295, %v294
  %v397 = vpack.c.b16 %v297, %v296
  %v398 = vpack.c.b16 %v299, %v298
  %v399 = vpack.c.b16 %v301, %v300
  %v400 = vpack.c.b16 %v303, %v302
  %v401 = vpack.c.b16 %v305, %v304
  %v402 = vpack.c.b16 %v307, %v306
  %v403 = vpack.c.b16 %v309, %v308
  %v404 = vpack.c.b16 %v311, %v310
  %v405 = vpack.c.b16 %v313, %v312
  %v406 = vpack.c.b16 %v315, %v314
  %v407 = vpack.c.b16 %v317, %v316
  %v408 = vpack.c.b16 %v319, %v318
  %v409 = vpack.c.b16 %v321, %v320
  %v410 = vpack.c.b16 %v323, %v322
  %v411 = vpack.c.b16 %v325, %v324
  %v412 = vpack.c.b16 %v327, %v326
  %v413 = vpack.c.b16 %v329, %v328
  %v414 = vpack.c.b16 %v331, %v330
  %v415 = vpack.c.b16 %v333, %v332
  %v416 = vpack.c.b16 %v335, %v334
  %v417 = vpack.c.b16 %v337, %v336
  %v418 = vpack.c.b16 %v339, %v338
  %v419 = vpack.c.b16 %v341, %v340
  %v420 = vpack.c.b16 %v343, %v342
  %v421 = vpack.c.b16 %v345, %v344
  %v422 = vpack.c.b16 %v347, %v346
  %v423 = vpack.c.b16 %v349, %v348
  %v424 = vpack.c.b16 %v351, %v350
  %v425 = vpack.c.b16 %v353, %v352
  %v426 = vpack.c.b16 %v355, %v354
  %v427 = vpack.c.b16 %v357, %v356
  %v428 = vpack.c.b16 %v359, %v358
  %v429 = vpack.c.b16 %v361, %v360
  %v430 = vpack.c.b16 %v363, %v362
  %v431 = vpack.c.b16 %v365, %v364
  %v432 = vpack.c.b16 %v367, %v366
  %v433 = vpack.c.b16 %v369, %v368
  %v434 = vpack.c.b16 %v371, %v370
  %v435 = vpack.c.b16 %v373, %v372
  %v436 = vpack.c.b16 %v375, %v374
  %v437 = vpack.c.b16 %v377, %v376
  %v438 = vpack.c.b16 %v379, %v378
  %v439 = vpack.c.b16 %v381, %v380
  %v440 = vpack.c.b16 %v383, %v382
  %v441 = vpack.c.b16 %v385, %v384
  %498 = vmatprep.subr.bf16.mxu0 0
  %499 = vmatpush1.bf16.msra.mxu0 %v393
  %500 = vmatprep.subr.bf16.mxu0 0
  %501 = vmatpush1.bf16.msra.mxu0 %v392
  %502 = vmatprep.subr.bf16.mxu0 0
  %503 = vmatpush1.bf16.msra.mxu0 %v391
  %504 = vmatprep.subr.bf16.mxu0 0
  %505 = vmatpush1.bf16.msra.mxu0 %v390
  %506 = vmatprep.subr.bf16.mxu0 0
  %507 = vmatpush1.bf16.msra.mxu0 %v389
  %508 = vmatprep.subr.bf16.mxu0 0
  %509 = vmatpush1.bf16.msra.mxu0 %v388
  %510 = vmatprep.subr.bf16.mxu0 0
  %511 = vmatpush1.bf16.msra.mxu0 %v387
  %512 = vmatprep.subr.bf16.mxu0 0
  %513 = vmatpush1.bf16.msra.mxu0 %v386
  %514 = vmatprep.subr.bf16.mxu0 0
  %515 = vmatpush2.bf16.msra.mxu0 %v401
  %516 = vmatprep.subr.bf16.mxu0 0
  %517 = vmatpush2.bf16.msra.mxu0 %v400
  %518 = vmatprep.subr.bf16.mxu0 0
  %519 = vmatpush2.bf16.msra.mxu0 %v399
  %520 = vmatprep.subr.bf16.mxu0 0
  %521 = vmatpush2.bf16.msra.mxu0 %v398
  %522 = vmatprep.subr.bf16.mxu0 0
  %523 = vmatpush2.bf16.msra.mxu0 %v397
  %524 = vmatprep.subr.bf16.mxu0 0
  %525 = vmatpush2.bf16.msra.mxu0 %v396
  %526 = vmatprep.subr.bf16.mxu0 0
  %527 = vmatpush2.bf16.msra.mxu0 %v395
  %528 = vmatprep.subr.bf16.mxu0 0
  %529 = vmatpush2.bf16.msra.mxu0 %v394
  %530 = vmatprep.mubr.bf16.mxu0 %v149
  %531 = vmatmul.mubr.bf16.gmra.mxu0 %v148
  %v532 = vpop.f32.mrf.mxu0
  %v533 = vadd.f32 0.0, %v532
  %v534 = vpop.f32.mrf.mxu0
  %v535 = vpop.f32.mrf.mxu0
  %v536 = vpop.f32.mrf.mxu0
  %537 = vdwg.mxu0
  %538 = vmatprep.subr.bf16.mxu0 0
  %539 = vmatpush1.bf16.msra.mxu0 %v409
  %540 = vmatprep.subr.bf16.mxu0 0
  %541 = vmatpush1.bf16.msra.mxu0 %v408
  %542 = vmatprep.subr.bf16.mxu0 0
  %543 = vmatpush1.bf16.msra.mxu0 %v407
  %544 = vmatprep.subr.bf16.mxu0 0
  %545 = vmatpush1.bf16.msra.mxu0 %v406
  %546 = vmatprep.subr.bf16.mxu0 0
  %547 = vmatpush1.bf16.msra.mxu0 %v405
  %548 = vmatprep.subr.bf16.mxu0 0
  %549 = vmatpush1.bf16.msra.mxu0 %v404
  %550 = vmatprep.subr.bf16.mxu0 0
  %551 = vmatpush1.bf16.msra.mxu0 %v403
  %552 = vmatprep.subr.bf16.mxu0 0
  %553 = vmatpush1.bf16.msra.mxu0 %v402
  %554 = vmatprep.subr.bf16.mxu0 0
  %555 = vmatpush2.bf16.msra.mxu0 %v417
  %556 = vmatprep.subr.bf16.mxu0 0
  %557 = vmatpush2.bf16.msra.mxu0 %v416
  %558 = vmatprep.subr.bf16.mxu0 0
  %559 = vmatpush2.bf16.msra.mxu0 %v415
  %560 = vmatprep.subr.bf16.mxu0 0
  %561 = vmatpush2.bf16.msra.mxu0 %v414
  %562 = vmatprep.subr.bf16.mxu0 0
  %563 = vmatpush2.bf16.msra.mxu0 %v413
  %564 = vmatprep.subr.bf16.mxu0 0
  %565 = vmatpush2.bf16.msra.mxu0 %v412
  %566 = vmatprep.subr.bf16.mxu0 0
  %567 = vmatpush2.bf16.msra.mxu0 %v411
  %568 = vmatprep.subr.bf16.mxu0 0
  %569 = vmatpush2.bf16.msra.mxu0 %v410
  %570 = vmatprep.mubr.bf16.mxu0 %v151
  %571 = vmatmul.mubr.bf16.gmra.mxu0 %v150
  %v572 = vpop.f32.mrf.mxu0
  %v573 = vadd.f32 %v533, %v572
  %v574 = vpop.f32.mrf.mxu0
  %v575 = vpop.f32.mrf.mxu0
  %v576 = vpop.f32.mrf.mxu0
  %577 = vdwg.mxu0
  %578 = vmatprep.subr.bf16.mxu0 0
  %579 = vmatpush1.bf16.msra.mxu0 %v425
  %580 = vmatprep.subr.bf16.mxu0 0
  %581 = vmatpush1.bf16.msra.mxu0 %v424
  %582 = vmatprep.subr.bf16.mxu0 0
  %583 = vmatpush1.bf16.msra.mxu0 %v423
  %584 = vmatprep.subr.bf16.mxu0 0
  %585 = vmatpush1.bf16.msra.mxu0 %v422
  %586 = vmatprep.subr.bf16.mxu0 0
  %587 = vmatpush1.bf16.msra.mxu0 %v421
  %588 = vmatprep.subr.bf16.mxu0 0
  %589 = vmatpush1.bf16.msra.mxu0 %v420
  %590 = vmatprep.subr.bf16.mxu0 0
  %591 = vmatpush1.bf16.msra.mxu0 %v419
  %592 = vmatprep.subr.bf16.mxu0 0
  %593 = vmatpush1.bf16.msra.mxu0 %v418
  %594 = vmatprep.subr.bf16.mxu0 0
  %595 = vmatpush2.bf16.msra.mxu0 %v433
  %596 = vmatprep.subr.bf16.mxu0 0
  %597 = vmatpush2.bf16.msra.mxu0 %v432
  %598 = vmatprep.subr.bf16.mxu0 0
  %599 = vmatpush2.bf16.msra.mxu0 %v431
  %600 = vmatprep.subr.bf16.mxu0 0
  %601 = vmatpush2.bf16.msra.mxu0 %v430
  %602 = vmatprep.subr.bf16.mxu0 0
  %603 = vmatpush2.bf16.msra.mxu0 %v429
  %604 = vmatprep.subr.bf16.mxu0 0
  %605 = vmatpush2.bf16.msra.mxu0 %v428
  %606 = vmatprep.subr.bf16.mxu0 0
  %607 = vmatpush2.bf16.msra.mxu0 %v427
  %608 = vmatprep.subr.bf16.mxu0 0
  %609 = vmatpush2.bf16.msra.mxu0 %v426
  %610 = vmatprep.mubr.bf16.mxu0 %v153
  %611 = vmatmul.mubr.bf16.gmra.mxu0 %v152
  %v612 = vpop.f32.mrf.mxu0
  %v613 = vadd.f32 %v573, %v612
  %v614 = vpop.f32.mrf.mxu0
  %v615 = vpop.f32.mrf.mxu0
  %v616 = vpop.f32.mrf.mxu0
  %617 = vdwg.mxu0
  %618 = vmatprep.subr.bf16.mxu0 0
  %619 = vmatpush1.bf16.msra.mxu0 %v441
  %620 = vmatprep.subr.bf16.mxu0 0
  %621 = vmatpush1.bf16.msra.mxu0 %v440
  %622 = vmatprep.subr.bf16.mxu0 0
  %623 = vmatpush1.bf16.msra.mxu0 %v439
  %624 = vmatprep.subr.bf16.mxu0 0
  %625 = vmatpush1.bf16.msra.mxu0 %v438
  %626 = vmatprep.subr.bf16.mxu0 0
  %627 = vmatpush1.bf16.msra.mxu0 %v437
  %628 = vmatprep.subr.bf16.mxu0 0
  %629 = vmatpush1.bf16.msra.mxu0 %v436
  %630 = vmatprep.subr.bf16.mxu0 0
  %631 = vmatpush1.bf16.msra.mxu0 %v435
  %632 = vmatprep.subr.bf16.mxu0 0
  %633 = vmatpush1.bf16.msra.mxu0 %v434
  %634 = vmatprep.subr.bf16.mxu0 0
  %635 = vmatpush2.bf16.msra.mxu0 0
  %636 = vmatprep.subr.bf16.mxu0 0
  %637 = vmatpush2.bf16.msra.mxu0 0
  %638 = vmatprep.subr.bf16.mxu0 0
  %639 = vmatpush2.bf16.msra.mxu0 0
  %640 = vmatprep.subr.bf16.mxu0 0
  %641 = vmatpush2.bf16.msra.mxu0 0
  %642 = vmatprep.subr.bf16.mxu0 0
  %643 = vmatpush2.bf16.msra.mxu0 0
  %644 = vmatprep.subr.bf16.mxu0 0
  %645 = vmatpush2.bf16.msra.mxu0 0
  %646 = vmatprep.subr.bf16.mxu0 0
  %647 = vmatpush2.bf16.msra.mxu0 0
  %648 = vmatprep.subr.bf16.mxu0 0
  %649 = vmatpush2.bf16.msra.mxu0 0
  %650 = vmatprep.mubr.bf16.mxu0 0
  %651 = vmatmul.mubr.bf16.gmra.mxu0 %v154
  %v652 = vpop.f32.mrf.mxu0
  %v653 = vadd.f32 %v613, %v652
  %v654 = vpop.f32.mrf.mxu0
  %v655 = vpop.f32.mrf.mxu0
  %v656 = vpop.f32.mrf.mxu0
  %657 = vdwg.mxu0
  %v658 = vadd.f32 %v20, %v653
  %659 = vst [vmem:[#allocation2] sm:$0xff] %v658
  // Predicated region
  $region18: #{convnet_forward.7} parent=0 // pred_check
    %p660 = pneg %p15
  $region19: #{convnet_forward.7} parent=0 // pred_check_branch
    %662 = sbr.rel (%p660) target = $region21
  $region20: #{convnet_forward.7} parent=0 // pred_region
    %v663 = vld [vmem:[#allocation2] sm:$0xff]
    %v664 = vld [vmem:[%s2] sm:$0x1]
    %v666 = vlaneseq
    %v667 = vshrl.u32 %v666, 7
    %v668 = vsub.s32 0, %v667
    %v669 = vrot.slane %v664, %v668
    %v671 = vadd.f32 %v663, %v669
    %v672 = vmax.f32 %v671, 0.0
    %v673 = vpack.c.bf16 %v672, %v672
    %674 = vst [vmem:[%s3] sm:$0xf] %v673
  $region21: #{convnet_forward.7} parent=0 // pred_fallthru
    _
  // Predicated region
  $region22: #{convnet_forward.7} parent=0 // pred_check
    _
  $region23: #{convnet_forward.7} parent=0 // pred_check_branch
    %676 = sbr.rel (0) target = $region25
  $region24: #{convnet_forward.7} parent=0 // pred_region
    _
  $region25: #{convnet_forward.7} parent=0 // pred_fallthru
    _
  // Predicated region
  $region26: #{convnet_forward.7} parent=0 // pred_check
    _
  $region27: #{convnet_forward.7} parent=0 // pred_check_branch
    %678 = sbr.rel (0) target = $region29
  $region28: #{convnet_forward.7} parent=0 // pred_region
    _
  $region29: #{convnet_forward.7} parent=0 // pred_fallthru
    _

// kernel: convnet_forward.8
$region0: #{convnet_forward.8}
  #allocation0 [shape = 'u32[]', space=smem, size = 0x4, offset = 0x4, fixed_abs, tag = 'smem constant byte address 0x4 - core index']
  #allocation1 [shape = 'u32[144,128]{1,0:T(1,128)}', space=vmem, size = 0x12000, scoped, tag = 'internal scratch']
  #allocation2 [shape = 'f32[8,512]{1,0:T(8,128)}', space=vmem, size = 0x4000, scoped, tag = 'scratch operand']
  %s0 = inlined_call_operand.vmem [shape: bf16[8,128], index: 0, kind: input, shape index: {}]
  %s1 = inlined_call_operand.vmem [shape: bf16[128,512], index: 1, kind: input, shape index: {}]
  %s2 = inlined_call_operand.vmem [shape: f32[1,512], index: 2, kind: input, shape index: {}]
  %s3 = inlined_call_operand.vmem [shape: bf16[8,512], index: 3, kind: output, shape index: {}]
  %s4 = sld [smem:[#allocation0]]
  $region30: #{convnet_forward.8} parent=0
    _
  %s6 = ssub.s32 1, %s4
  %s7 = scalar_select 0, %s6, %s4
  // Predicated region
  $region2: #{convnet_forward.8} parent=0 // pred_check
    _
  $region3: #{convnet_forward.8} parent=0 // pred_check_branch
    %9 = sbr.rel (0) target = $region5
  $region4: #{convnet_forward.8} parent=0 // pred_region
    _
  $region5: #{convnet_forward.8} parent=0 // pred_fallthru
    _
  // Predicated region
  $region6: #{convnet_forward.8} parent=0 // pred_check
    _
  $region7: #{convnet_forward.8} parent=0 // pred_check_branch
    %11 = sbr.rel (0) target = $region9
  $region8: #{convnet_forward.8} parent=0 // pred_region
    _
  $region9: #{convnet_forward.8} parent=0 // pred_fallthru
    _
  // Predicated region
  $region10: #{convnet_forward.8} parent=0 // pred_check
    _
  $region11: #{convnet_forward.8} parent=0 // pred_check_branch
    %13 = sbr.rel (0) target = $region13
  $region12: #{convnet_forward.8} parent=0 // pred_region
    _
  $region13: #{convnet_forward.8} parent=0 // pred_fallthru
    _
  %p15 = scmp.eq.s32.totalorder 0, 0
  // Predicated region
  $region14: #{convnet_forward.8} parent=0 // pred_check
    %p16 = pneg %p15
  $region15: #{convnet_forward.8} parent=0 // pred_check_branch
    %18 = sbr.rel (%p16) target = $region17
  $region16: #{convnet_forward.8} parent=0 // pred_region
    %19 = vst [vmem:[#allocation2] sm:$0xff] 0.0
    %20 = vst [vmem:[#allocation2 + $0x8] sm:$0xff] 0.0
    %21 = vst [vmem:[#allocation2 + $0x10] sm:$0xff] 0.0
    %22 = vst [vmem:[#allocation2 + $0x18] sm:$0xff] 0.0
  $region17: #{convnet_forward.8} parent=0 // pred_fallthru
    _
  %v23 = vld [vmem:[#allocation2] sm:$0xff]
  %v24 = vld [vmem:[#allocation2 + $0x8] sm:$0xff]
  %v25 = vld [vmem:[#allocation2 + $0x10] sm:$0xff]
  %v26 = vld [vmem:[#allocation2 + $0x18] sm:$0xff]
  %v27 = vld [vmem:[%s0] sm:$0xf]
  %v28 = vld [vmem:[%s1] sm:$0xff]
  %v29 = vld [vmem:[%s1 + $0x8] sm:$0xff]
  %v30 = vld [vmem:[%s1 + $0x10] sm:$0xff]
  %v31 = vld [vmem:[%s1 + $0x18] sm:$0xff]
  %v32 = vld [vmem:[%s1 + $0x20] sm:$0xff]
  %v33 = vld [vmem:[%s1 + $0x28] sm:$0xff]
  %v34 = vld [vmem:[%s1 + $0x30] sm:$0xff]
  %v35 = vld [vmem:[%s1 + $0x38] sm:$0xff]
  %v36 = vld [vmem:[%s1 + $0x40] sm:$0xff]
  %v37 = vld [vmem:[%s1 + $0x48] sm:$0xff]
  %v38 = vld [vmem:[%s1 + $0x50] sm:$0xff]
  %v39 = vld [vmem:[%s1 + $0x58] sm:$0xff]
  %v40 = vld [vmem:[%s1 + $0x60] sm:$0xff]
  %v41 = vld [vmem:[%s1 + $0x68] sm:$0xff]
  %v42 = vld [vmem:[%s1 + $0x70] sm:$0xff]
  %v43 = vld [vmem:[%s1 + $0x78] sm:$0xff]
  %v44 = vld [vmem:[%s1 + $0x80] sm:$0xff]
  %v45 = vld [vmem:[%s1 + $0x88] sm:$0xff]
  %v46 = vld [vmem:[%s1 + $0x90] sm:$0xff]
  %v47 = vld [vmem:[%s1 + $0x98] sm:$0xff]
  %v48 = vld [vmem:[%s1 + $0xa0] sm:$0xff]
  %v49 = vld [vmem:[%s1 + $0xa8] sm:$0xff]
  %v50 = vld [vmem:[%s1 + $0xb0] sm:$0xff]
  %v51 = vld [vmem:[%s1 + $0xb8] sm:$0xff]
  %v52 = vld [vmem:[%s1 + $0xc0] sm:$0xff]
  %v53 = vld [vmem:[%s1 + $0xc8] sm:$0xff]
  %v54 = vld [vmem:[%s1 + $0xd0] sm:$0xff]
  %v55 = vld [vmem:[%s1 + $0xd8] sm:$0xff]
  %v56 = vld [vmem:[%s1 + $0xe0] sm:$0xff]
  %v57 = vld [vmem:[%s1 + $0xe8] sm:$0xff]
  %v58 = vld [vmem:[%s1 + $0xf0] sm:$0xff]
  %v59 = vld [vmem:[%s1 + $0xf8] sm:$0xff]
  %v92 = vunpack.c.l.b16 %v28
  %v93 = vunpack.c.h.b16 %v28
  %v94 = vunpack.c.l.b16 %v29
  %v95 = vunpack.c.h.b16 %v29
  %v96 = vunpack.c.l.b16 %v30
  %v97 = vunpack.c.h.b16 %v30
  %v98 = vunpack.c.l.b16 %v31
  %v99 = vunpack.c.h.b16 %v31
  %v100 = vunpack.c.l.b16 %v32
  %v101 = vunpack.c.h.b16 %v32
  %v102 = vunpack.c.l.b16 %v33
  %v103 = vunpack.c.h.b16 %v33
  %v104 = vunpack.c.l.b16 %v34
  %v105 = vunpack.c.h.b16 %v34
  %v106 = vunpack.c.l.b16 %v35
  %v107 = vunpack.c.h.b16 %v35
  %v108 = vunpack.c.l.b16 %v36
  %v109 = vunpack.c.h.b16 %v36
  %v110 = vunpack.c.l.b16 %v37
  %v111 = vunpack.c.h.b16 %v37
  %v112 = vunpack.c.l.b16 %v38
  %v113 = vunpack.c.h.b16 %v38
  %v114 = vunpack.c.l.b16 %v39
  %v115 = vunpack.c.h.b16 %v39
  %v116 = vunpack.c.l.b16 %v40
  %v117 = vunpack.c.h.b16 %v40
  %v118 = vunpack.c.l.b16 %v41
  %v119 = vunpack.c.h.b16 %v41
  %v120 = vunpack.c.l.b16 %v42
  %v121 = vunpack.c.h.b16 %v42
  %v122 = vunpack.c.l.b16 %v43
  %v123 = vunpack.c.h.b16 %v43
  %v124 = vunpack.c.l.b16 %v44
  %v125 = vunpack.c.h.b16 %v44
  %v126 = vunpack.c.l.b16 %v45
  %v127 = vunpack.c.h.b16 %v45
  %v128 = vunpack.c.l.b16 %v46
  %v129 = vunpack.c.h.b16 %v46
  %v130 = vunpack.c.l.b16 %v47
  %v131 = vunpack.c.h.b16 %v47
  %v132 = vunpack.c.l.b16 %v48
  %v133 = vunpack.c.h.b16 %v48
  %v134 = vunpack.c.l.b16 %v49
  %v135 = vunpack.c.h.b16 %v49
  %v136 = vunpack.c.l.b16 %v50
  %v137 = vunpack.c.h.b16 %v50
  %v138 = vunpack.c.l.b16 %v51
  %v139 = vunpack.c.h.b16 %v51
  %v140 = vunpack.c.l.b16 %v52
  %v141 = vunpack.c.h.b16 %v52
  %v142 = vunpack.c.l.b16 %v53
  %v143 = vunpack.c.h.b16 %v53
  %v144 = vunpack.c.l.b16 %v54
  %v145 = vunpack.c.h.b16 %v54
  %v146 = vunpack.c.l.b16 %v55
  %v147 = vunpack.c.h.b16 %v55
  %v148 = vunpack.c.l.b16 %v56
  %v149 = vunpack.c.h.b16 %v56
  %v150 = vunpack.c.l.b16 %v57
  %v151 = vunpack.c.h.b16 %v57
  %v152 = vunpack.c.l.b16 %v58
  %v153 = vunpack.c.h.b16 %v58
  %v154 = vunpack.c.l.b16 %v59
  %v155 = vunpack.c.h.b16 %v59
  %v156 = vpack.c.b16 %v96, %v92
  %v157 = vpack.c.b16 %v97, %v93
  %v158 = vpack.c.b16 %v98, %v94
  %v159 = vpack.c.b16 %v99, %v95
  %v160 = vpack.c.b16 %v104, %v100
  %v161 = vpack.c.b16 %v105, %v101
  %v162 = vpack.c.b16 %v106, %v102
  %v163 = vpack.c.b16 %v107, %v103
  %v164 = vpack.c.b16 %v112, %v108
  %v165 = vpack.c.b16 %v113, %v109
  %v166 = vpack.c.b16 %v114, %v110
  %v167 = vpack.c.b16 %v115, %v111
  %v168 = vpack.c.b16 %v120, %v116
  %v169 = vpack.c.b16 %v121, %v117
  %v170 = vpack.c.b16 %v122, %v118
  %v171 = vpack.c.b16 %v123, %v119
  %v172 = vpack.c.b16 %v128, %v124
  %v173 = vpack.c.b16 %v129, %v125
  %v174 = vpack.c.b16 %v130, %v126
  %v175 = vpack.c.b16 %v131, %v127
  %v176 = vpack.c.b16 %v136, %v132
  %v177 = vpack.c.b16 %v137, %v133
  %v178 = vpack.c.b16 %v138, %v134
  %v179 = vpack.c.b16 %v139, %v135
  %v180 = vpack.c.b16 %v144, %v140
  %v181 = vpack.c.b16 %v145, %v141
  %v182 = vpack.c.b16 %v146, %v142
  %v183 = vpack.c.b16 %v147, %v143
  %v184 = vpack.c.b16 %v152, %v148
  %v185 = vpack.c.b16 %v153, %v149
  %v186 = vpack.c.b16 %v154, %v150
  %v187 = vpack.c.b16 %v155, %v151
  %220 = vmatprep.subr.bf16.mxu0 %v185
  %221 = vmatpush1.bf16.msra.mxu0 %v184
  %222 = vmatprep.subr.bf16.mxu0 %v181
  %223 = vmatpush1.bf16.msra.mxu0 %v180
  %224 = vmatprep.subr.bf16.mxu0 %v177
  %225 = vmatpush1.bf16.msra.mxu0 %v176
  %226 = vmatprep.subr.bf16.mxu0 %v173
  %227 = vmatpush1.bf16.msra.mxu0 %v172
  %228 = vmatprep.subr.bf16.mxu0 %v169
  %229 = vmatpush1.bf16.msra.mxu0 %v168
  %230 = vmatprep.subr.bf16.mxu0 %v165
  %231 = vmatpush1.bf16.msra.mxu0 %v164
  %232 = vmatprep.subr.bf16.mxu0 %v161
  %233 = vmatpush1.bf16.msra.mxu0 %v160
  %234 = vmatprep.subr.bf16.mxu0 %v157
  %235 = vmatpush1.bf16.msra.mxu0 %v156
  %236 = vmatprep.subr.bf16.mxu0 0
  %237 = vmatpush2.bf16.msra.mxu0 0
  %238 = vmatprep.subr.bf16.mxu0 0
  %239 = vmatpush2.bf16.msra.mxu0 0
  %240 = vmatprep.subr.bf16.mxu0 0
  %241 = vmatpush2.bf16.msra.mxu0 0
  %242 = vmatprep.subr.bf16.mxu0 0
  %243 = vmatpush2.bf16.msra.mxu0 0
  %244 = vmatprep.subr.bf16.mxu0 0
  %245 = vmatpush2.bf16.msra.mxu0 0
  %246 = vmatprep.subr.bf16.mxu0 0
  %247 = vmatpush2.bf16.msra.mxu0 0
  %248 = vmatprep.subr.bf16.mxu0 0
  %249 = vmatpush2.bf16.msra.mxu0 0
  %250 = vmatprep.subr.bf16.mxu0 0
  %251 = vmatpush2.bf16.msra.mxu0 0
  %252 = vmatprep.mubr.bf16.mxu0 0
  %253 = vmatmul.mubr.bf16.gmra.mxu0 %v27
  %v254 = vpop.f32.mrf.mxu0
  %v255 = vadd.f32 0.0, %v254
  %v256 = vpop.f32.mrf.mxu0
  %v257 = vadd.f32 0.0, %v256
  %v258 = vpop.f32.mrf.mxu0
  %v259 = vpop.f32.mrf.mxu0
  %260 = vdwg.mxu0
  %261 = vmatprep.subr.bf16.mxu0 %v187
  %262 = vmatpush1.bf16.msra.mxu0 %v186
  %263 = vmatprep.subr.bf16.mxu0 %v183
  %264 = vmatpush1.bf16.msra.mxu0 %v182
  %265 = vmatprep.subr.bf16.mxu0 %v179
  %266 = vmatpush1.bf16.msra.mxu0 %v178
  %267 = vmatprep.subr.bf16.mxu0 %v175
  %268 = vmatpush1.bf16.msra.mxu0 %v174
  %269 = vmatprep.subr.bf16.mxu0 %v171
  %270 = vmatpush1.bf16.msra.mxu0 %v170
  %271 = vmatprep.subr.bf16.mxu0 %v167
  %272 = vmatpush1.bf16.msra.mxu0 %v166
  %273 = vmatprep.subr.bf16.mxu0 %v163
  %274 = vmatpush1.bf16.msra.mxu0 %v162
  %275 = vmatprep.subr.bf16.mxu0 %v159
  %276 = vmatpush1.bf16.msra.mxu0 %v158
  %277 = vmatprep.subr.bf16.mxu0 0
  %278 = vmatpush2.bf16.msra.mxu0 0
  %279 = vmatprep.subr.bf16.mxu0 0
  %280 = vmatpush2.bf16.msra.mxu0 0
  %281 = vmatprep.subr.bf16.mxu0 0
  %282 = vmatpush2.bf16.msra.mxu0 0
  %283 = vmatprep.subr.bf16.mxu0 0
  %284 = vmatpush2.bf16.msra.mxu0 0
  %285 = vmatprep.subr.bf16.mxu0 0
  %286 = vmatpush2.bf16.msra.mxu0 0
  %287 = vmatprep.subr.bf16.mxu0 0
  %288 = vmatpush2.bf16.msra.mxu0 0
  %289 = vmatprep.subr.bf16.mxu0 0
  %290 = vmatpush2.bf16.msra.mxu0 0
  %291 = vmatprep.subr.bf16.mxu0 0
  %292 = vmatpush2.bf16.msra.mxu0 0
  %293 = vmatprep.mubr.bf16.mxu0 0
  %294 = vmatmul.mubr.bf16.gmra.mxu0 %v27
  %v295 = vpop.f32.mrf.mxu0
  %v296 = vadd.f32 0.0, %v295
  %v297 = vpop.f32.mrf.mxu0
  %v298 = vadd.f32 0.0, %v297
  %v299 = vpop.f32.mrf.mxu0
  %v300 = vpop.f32.mrf.mxu0
  %301 = vdwg.mxu0
  %v302 = vadd.f32 %v23, %v255
  %v303 = vadd.f32 %v24, %v257
  %v304 = vadd.f32 %v25, %v296
  %v305 = vadd.f32 %v26, %v298
  %306 = vst [vmem:[#allocation2] sm:$0xff] %v302
  %307 = vst [vmem:[#allocation2 + $0x8] sm:$0xff] %v303
  %308 = vst [vmem:[#allocation2 + $0x10] sm:$0xff] %v304
  %309 = vst [vmem:[#allocation2 + $0x18] sm:$0xff] %v305
  // Predicated region
  $region18: #{convnet_forward.8} parent=0 // pred_check
    %p310 = pneg %p15
  $region19: #{convnet_forward.8} parent=0 // pred_check_branch
    %312 = sbr.rel (%p310) target = $region21
  $region20: #{convnet_forward.8} parent=0 // pred_region
    %v313 = vld [vmem:[#allocation2] sm:$0xff]
    %v314 = vld [vmem:[#allocation2 + $0x8] sm:$0xff]
    %v315 = vld [vmem:[#allocation2 + $0x10] sm:$0xff]
    %v316 = vld [vmem:[#allocation2 + $0x18] sm:$0xff]
    %v317 = vld [vmem:[%s2] sm:$0xf]
    %v319 = vlaneseq
    %v320 = vshrl.u32 %v319, 7
    %v321 = vsub.s32 0, %v320
    %v322 = vrot.slane %v317, %v321
    %v323 = vlaneseq
    %v324 = vshrl.u32 %v323, 7
    %v325 = vsub.s32 1, %v324
    %v326 = vrot.slane %v317, %v325
    %v327 = vlaneseq
    %v328 = vshrl.u32 %v327, 7
    %v329 = vsub.s32 2, %v328
    %v330 = vrot.slane %v317, %v329
    %v331 = vlaneseq
    %v332 = vshrl.u32 %v331, 7
    %v333 = vsub.s32 3, %v332
    %v334 = vrot.slane %v317, %v333
    %v339 = vadd.f32 %v313, %v322
    %v340 = vadd.f32 %v314, %v326
    %v341 = vadd.f32 %v315, %v330
    %v342 = vadd.f32 %v316, %v334
    %v343 = vmax.f32 %v339, 0.0
    %v344 = vmax.f32 %v340, 0.0
    %v345 = vmax.f32 %v341, 0.0
    %v346 = vmax.f32 %v342, 0.0
    %v347 = vpack.c.bf16 %v343, %v343
    %v348 = vpack.c.bf16 %v344, %v344
    %v349 = vpack.c.bf16 %v345, %v345
    %v350 = vpack.c.bf16 %v346, %v346
    %v355 = vunpack.c.l.b16 %v347
    %v356 = vunpack.c.l.b16 %v348
    %v357 = vunpack.c.l.b16 %v349
    %v358 = vunpack.c.l.b16 %v350
    %v359 = vpack.c.b16 %v356, %v355
    %v360 = vpack.c.b16 %v358, %v357
    %363 = vst [vmem:[%s3] sm:$0xff] %v359
    %364 = vst [vmem:[%s3 + $0x8] sm:$0xff] %v360
  $region21: #{convnet_forward.8} parent=0 // pred_fallthru
    _
  // Predicated region
  $region22: #{convnet_forward.8} parent=0 // pred_check
    _
  $region23: #{convnet_forward.8} parent=0 // pred_check_branch
    %366 = sbr.rel (0) target = $region25
  $region24: #{convnet_forward.8} parent=0 // pred_region
    _
  $region25: #{convnet_forward.8} parent=0 // pred_fallthru
    _
  // Predicated region
  $region26: #{convnet_forward.8} parent=0 // pred_check
    _
  $region27: #{convnet_forward.8} parent=0 // pred_check_branch
    %368 = sbr.rel (0) target = $region29
  $region28: #{convnet_forward.8} parent=0 // pred_region
    _
  $region29: #{convnet_forward.8} parent=0 // pred_fallthru
    _

// kernel: convnet_forward.9
$region0: #{convnet_forward.9}
  #allocation0 [shape = 'u32[]', space=smem, size = 0x4, offset = 0x4, fixed_abs, tag = 'smem constant byte address 0x4 - core index']
  #allocation1 [shape = 'u32[144,128]{1,0:T(1,128)}', space=vmem, size = 0x12000, scoped, tag = 'internal scratch']
  #allocation2 [shape = 'f32[8,128]{1,0:T(8,128)}', space=vmem, size = 0x1000, scoped, tag = 'scratch operand']
  %s0 = inlined_call_operand.vmem [shape: bf16[8,512], index: 0, kind: input, shape index: {}]
  %s1 = inlined_call_operand.vmem [shape: bf16[512,128], index: 1, kind: input, shape index: {}]
  %s2 = inlined_call_operand.vmem [shape: f32[1,128], index: 2, kind: input, shape index: {}]
  %s3 = inlined_call_operand.vmem [shape: f32[8,128], index: 3, kind: output, shape index: {}]
  %s4 = sld [smem:[#allocation0]]
  $region30: #{convnet_forward.9} parent=0
    _
  %s6 = ssub.s32 1, %s4
  %s7 = scalar_select 0, %s6, %s4
  // Predicated region
  $region2: #{convnet_forward.9} parent=0 // pred_check
    _
  $region3: #{convnet_forward.9} parent=0 // pred_check_branch
    %9 = sbr.rel (0) target = $region5
  $region4: #{convnet_forward.9} parent=0 // pred_region
    _
  $region5: #{convnet_forward.9} parent=0 // pred_fallthru
    _
  // Predicated region
  $region6: #{convnet_forward.9} parent=0 // pred_check
    _
  $region7: #{convnet_forward.9} parent=0 // pred_check_branch
    %11 = sbr.rel (0) target = $region9
  $region8: #{convnet_forward.9} parent=0 // pred_region
    _
  $region9: #{convnet_forward.9} parent=0 // pred_fallthru
    _
  // Predicated region
  $region10: #{convnet_forward.9} parent=0 // pred_check
    _
  $region11: #{convnet_forward.9} parent=0 // pred_check_branch
    %13 = sbr.rel (0) target = $region13
  $region12: #{convnet_forward.9} parent=0 // pred_region
    _
  $region13: #{convnet_forward.9} parent=0 // pred_fallthru
    _
  %p15 = scmp.eq.s32.totalorder 0, 0
  // Predicated region
  $region14: #{convnet_forward.9} parent=0 // pred_check
    %p16 = pneg %p15
  $region15: #{convnet_forward.9} parent=0 // pred_check_branch
    %18 = sbr.rel (%p16) target = $region17
  $region16: #{convnet_forward.9} parent=0 // pred_region
    %19 = vst [vmem:[#allocation2] sm:$0xff] 0.0
  $region17: #{convnet_forward.9} parent=0 // pred_fallthru
    _
  %v20 = vld [vmem:[#allocation2] sm:$0xff]
  %v21 = vld [vmem:[%s0] sm:$0xff]
  %v22 = vld [vmem:[%s0 + $0x8] sm:$0xff]
  %v23 = vld [vmem:[%s1] sm:$0xf]
  %v24 = vld [vmem:[%s1 + $0x4] sm:$0xf]
  %v25 = vld [vmem:[%s1 + $0x8] sm:$0xf]
  %v26 = vld [vmem:[%s1 + $0xc] sm:$0xf]
  %v27 = vld [vmem:[%s1 + $0x10] sm:$0xf]
  %v28 = vld [vmem:[%s1 + $0x14] sm:$0xf]
  %v29 = vld [vmem:[%s1 + $0x18] sm:$0xf]
  %v30 = vld [vmem:[%s1 + $0x1c] sm:$0xf]
  %v31 = vld [vmem:[%s1 + $0x20] sm:$0xf]
  %v32 = vld [vmem:[%s1 + $0x24] sm:$0xf]
  %v33 = vld [vmem:[%s1 + $0x28] sm:$0xf]
  %v34 = vld [vmem:[%s1 + $0x2c] sm:$0xf]
  %v35 = vld [vmem:[%s1 + $0x30] sm:$0xf]
  %v36 = vld [vmem:[%s1 + $0x34] sm:$0xf]
  %v37 = vld [vmem:[%s1 + $0x38] sm:$0xf]
  %v38 = vld [vmem:[%s1 + $0x3c] sm:$0xf]
  %v39 = vld [vmem:[%s1 + $0x40] sm:$0xf]
  %v40 = vld [vmem:[%s1 + $0x44] sm:$0xf]
  %v41 = vld [vmem:[%s1 + $0x48] sm:$0xf]
  %v42 = vld [vmem:[%s1 + $0x4c] sm:$0xf]
  %v43 = vld [vmem:[%s1 + $0x50] sm:$0xf]
  %v44 = vld [vmem:[%s1 + $0x54] sm:$0xf]
  %v45 = vld [vmem:[%s1 + $0x58] sm:$0xf]
  %v46 = vld [vmem:[%s1 + $0x5c] sm:$0xf]
  %v47 = vld [vmem:[%s1 + $0x60] sm:$0xf]
  %v48 = vld [vmem:[%s1 + $0x64] sm:$0xf]
  %v49 = vld [vmem:[%s1 + $0x68] sm:$0xf]
  %v50 = vld [vmem:[%s1 + $0x6c] sm:$0xf]
  %v51 = vld [vmem:[%s1 + $0x70] sm:$0xf]
  %v52 = vld [vmem:[%s1 + $0x74] sm:$0xf]
  %v53 = vld [vmem:[%s1 + $0x78] sm:$0xf]
  %v54 = vld [vmem:[%s1 + $0x7c] sm:$0xf]
  %v55 = vld [vmem:[%s1 + $0x80] sm:$0xf]
  %v56 = vld [vmem:[%s1 + $0x84] sm:$0xf]
  %v57 = vld [vmem:[%s1 + $0x88] sm:$0xf]
  %v58 = vld [vmem:[%s1 + $0x8c] sm:$0xf]
  %v59 = vld [vmem:[%s1 + $0x90] sm:$0xf]
  %v60 = vld [vmem:[%s1 + $0x94] sm:$0xf]
  %v61 = vld [vmem:[%s1 + $0x98] sm:$0xf]
  %v62 = vld [vmem:[%s1 + $0x9c] sm:$0xf]
  %v63 = vld [vmem:[%s1 + $0xa0] sm:$0xf]
  %v64 = vld [vmem:[%s1 + $0xa4] sm:$0xf]
  %v65 = vld [vmem:[%s1 + $0xa8] sm:$0xf]
  %v66 = vld [vmem:[%s1 + $0xac] sm:$0xf]
  %v67 = vld [vmem:[%s1 + $0xb0] sm:$0xf]
  %v68 = vld [vmem:[%s1 + $0xb4] sm:$0xf]
  %v69 = vld [vmem:[%s1 + $0xb8] sm:$0xf]
  %v70 = vld [vmem:[%s1 + $0xbc] sm:$0xf]
  %v71 = vld [vmem:[%s1 + $0xc0] sm:$0xf]
  %v72 = vld [vmem:[%s1 + $0xc4] sm:$0xf]
  %v73 = vld [vmem:[%s1 + $0xc8] sm:$0xf]
  %v74 = vld [vmem:[%s1 + $0xcc] sm:$0xf]
  %v75 = vld [vmem:[%s1 + $0xd0] sm:$0xf]
  %v76 = vld [vmem:[%s1 + $0xd4] sm:$0xf]
  %v77 = vld [vmem:[%s1 + $0xd8] sm:$0xf]
  %v78 = vld [vmem:[%s1 + $0xdc] sm:$0xf]
  %v79 = vld [vmem:[%s1 + $0xe0] sm:$0xf]
  %v80 = vld [vmem:[%s1 + $0xe4] sm:$0xf]
  %v81 = vld [vmem:[%s1 + $0xe8] sm:$0xf]
  %v82 = vld [vmem:[%s1 + $0xec] sm:$0xf]
  %v83 = vld [vmem:[%s1 + $0xf0] sm:$0xf]
  %v84 = vld [vmem:[%s1 + $0xf4] sm:$0xf]
  %v85 = vld [vmem:[%s1 + $0xf8] sm:$0xf]
  %v86 = vld [vmem:[%s1 + $0xfc] sm:$0xf]
  %v89 = vunpack.c.l.b16 %v21
  %v90 = vunpack.c.h.b16 %v21
  %v91 = vunpack.c.l.b16 %v22
  %v92 = vunpack.c.h.b16 %v22
  %v93 = vpack.c.b16 %v89, %v89
  %v94 = vpack.c.b16 %v90, %v90
  %v95 = vpack.c.b16 %v91, %v91
  %v96 = vpack.c.b16 %v92, %v92
  %v165 = vunpack.c.l.b16 %v23
  %v166 = vunpack.c.l.b16 %v24
  %v167 = vunpack.c.l.b16 %v25
  %v168 = vunpack.c.l.b16 %v26
  %v169 = vunpack.c.l.b16 %v27
  %v170 = vunpack.c.l.b16 %v28
  %v171 = vunpack.c.l.b16 %v29
  %v172 = vunpack.c.l.b16 %v30
  %v173 = vunpack.c.l.b16 %v31
  %v174 = vunpack.c.l.b16 %v32
  %v175 = vunpack.c.l.b16 %v33
  %v176 = vunpack.c.l.b16 %v34
  %v177 = vunpack.c.l.b16 %v35
  %v178 = vunpack.c.l.b16 %v36
  %v179 = vunpack.c.l.b16 %v37
  %v180 = vunpack.c.l.b16 %v38
  %v181 = vunpack.c.l.b16 %v39
  %v182 = vunpack.c.l.b16 %v40
  %v183 = vunpack.c.l.b16 %v41
  %v184 = vunpack.c.l.b16 %v42
  %v185 = vunpack.c.l.b16 %v43
  %v186 = vunpack.c.l.b16 %v44
  %v187 = vunpack.c.l.b16 %v45
  %v188 = vunpack.c.l.b16 %v46
  %v189 = vunpack.c.l.b16 %v47
  %v190 = vunpack.c.l.b16 %v48
  %v191 = vunpack.c.l.b16 %v49
  %v192 = vunpack.c.l.b16 %v50
  %v193 = vunpack.c.l.b16 %v51
  %v194 = vunpack.c.l.b16 %v52
  %v195 = vunpack.c.l.b16 %v53
  %v196 = vunpack.c.l.b16 %v54
  %v197 = vunpack.c.l.b16 %v55
  %v198 = vunpack.c.l.b16 %v56
  %v199 = vunpack.c.l.b16 %v57
  %v200 = vunpack.c.l.b16 %v58
  %v201 = vunpack.c.l.b16 %v59
  %v202 = vunpack.c.l.b16 %v60
  %v203 = vunpack.c.l.b16 %v61
  %v204 = vunpack.c.l.b16 %v62
  %v205 = vunpack.c.l.b16 %v63
  %v206 = vunpack.c.l.b16 %v64
  %v207 = vunpack.c.l.b16 %v65
  %v208 = vunpack.c.l.b16 %v66
  %v209 = vunpack.c.l.b16 %v67
  %v210 = vunpack.c.l.b16 %v68
  %v211 = vunpack.c.l.b16 %v69
  %v212 = vunpack.c.l.b16 %v70
  %v213 = vunpack.c.l.b16 %v71
  %v214 = vunpack.c.l.b16 %v72
  %v215 = vunpack.c.l.b16 %v73
  %v216 = vunpack.c.l.b16 %v74
  %v217 = vunpack.c.l.b16 %v75
  %v218 = vunpack.c.l.b16 %v76
  %v219 = vunpack.c.l.b16 %v77
  %v220 = vunpack.c.l.b16 %v78
  %v221 = vunpack.c.l.b16 %v79
  %v222 = vunpack.c.l.b16 %v80
  %v223 = vunpack.c.l.b16 %v81
  %v224 = vunpack.c.l.b16 %v82
  %v225 = vunpack.c.l.b16 %v83
  %v226 = vunpack.c.l.b16 %v84
  %v227 = vunpack.c.l.b16 %v85
  %v228 = vunpack.c.l.b16 %v86
  %v229 = vpack.c.b16 %v166, %v165
  %v230 = vpack.c.b16 %v168, %v167
  %v231 = vpack.c.b16 %v170, %v169
  %v232 = vpack.c.b16 %v172, %v171
  %v233 = vpack.c.b16 %v174, %v173
  %v234 = vpack.c.b16 %v176, %v175
  %v235 = vpack.c.b16 %v178, %v177
  %v236 = vpack.c.b16 %v180, %v179
  %v237 = vpack.c.b16 %v182, %v181
  %v238 = vpack.c.b16 %v184, %v183
  %v239 = vpack.c.b16 %v186, %v185
  %v240 = vpack.c.b16 %v188, %v187
  %v241 = vpack.c.b16 %v190, %v189
  %v242 = vpack.c.b16 %v192, %v191
  %v243 = vpack.c.b16 %v194, %v193
  %v244 = vpack.c.b16 %v196, %v195
  %v245 = vpack.c.b16 %v198, %v197
  %v246 = vpack.c.b16 %v200, %v199
  %v247 = vpack.c.b16 %v202, %v201
  %v248 = vpack.c.b16 %v204, %v203
  %v249 = vpack.c.b16 %v206, %v205
  %v250 = vpack.c.b16 %v208, %v207
  %v251 = vpack.c.b16 %v210, %v209
  %v252 = vpack.c.b16 %v212, %v211
  %v253 = vpack.c.b16 %v214, %v213
  %v254 = vpack.c.b16 %v216, %v215
  %v255 = vpack.c.b16 %v218, %v217
  %v256 = vpack.c.b16 %v220, %v219
  %v257 = vpack.c.b16 %v222, %v221
  %v258 = vpack.c.b16 %v224, %v223
  %v259 = vpack.c.b16 %v226, %v225
  %v260 = vpack.c.b16 %v228, %v227
  %293 = vmatprep.subr.bf16.mxu0 0
  %294 = vmatpush1.bf16.msra.mxu0 %v236
  %295 = vmatprep.subr.bf16.mxu0 0
  %296 = vmatpush1.bf16.msra.mxu0 %v235
  %297 = vmatprep.subr.bf16.mxu0 0
  %298 = vmatpush1.bf16.msra.mxu0 %v234
  %299 = vmatprep.subr.bf16.mxu0 0
  %300 = vmatpush1.bf16.msra.mxu0 %v233
  %301 = vmatprep.subr.bf16.mxu0 0
  %302 = vmatpush1.bf16.msra.mxu0 %v232
  %303 = vmatprep.subr.bf16.mxu0 0
  %304 = vmatpush1.bf16.msra.mxu0 %v231
  %305 = vmatprep.subr.bf16.mxu0 0
  %306 = vmatpush1.bf16.msra.mxu0 %v230
  %307 = vmatprep.subr.bf16.mxu0 0
  %308 = vmatpush1.bf16.msra.mxu0 %v229
  %309 = vmatprep.subr.bf16.mxu0 0
  %310 = vmatpush2.bf16.msra.mxu0 %v244
  %311 = vmatprep.subr.bf16.mxu0 0
  %312 = vmatpush2.bf16.msra.mxu0 %v243
  %313 = vmatprep.subr.bf16.mxu0 0
  %314 = vmatpush2.bf16.msra.mxu0 %v242
  %315 = vmatprep.subr.bf16.mxu0 0
  %316 = vmatpush2.bf16.msra.mxu0 %v241
  %317 = vmatprep.subr.bf16.mxu0 0
  %318 = vmatpush2.bf16.msra.mxu0 %v240
  %319 = vmatprep.subr.bf16.mxu0 0
  %320 = vmatpush2.bf16.msra.mxu0 %v239
  %321 = vmatprep.subr.bf16.mxu0 0
  %322 = vmatpush2.bf16.msra.mxu0 %v238
  %323 = vmatprep.subr.bf16.mxu0 0
  %324 = vmatpush2.bf16.msra.mxu0 %v237
  %325 = vmatprep.mubr.bf16.mxu0 %v94
  %326 = vmatmul.mubr.bf16.gmra.mxu0 %v93
  %v327 = vpop.f32.mrf.mxu0
  %v328 = vadd.f32 0.0, %v327
  %v329 = vpop.f32.mrf.mxu0
  %v330 = vpop.f32.mrf.mxu0
  %v331 = vpop.f32.mrf.mxu0
  %332 = vdwg.mxu0
  %333 = vmatprep.subr.bf16.mxu0 0
  %334 = vmatpush1.bf16.msra.mxu0 %v252
  %335 = vmatprep.subr.bf16.mxu0 0
  %336 = vmatpush1.bf16.msra.mxu0 %v251
  %337 = vmatprep.subr.bf16.mxu0 0
  %338 = vmatpush1.bf16.msra.mxu0 %v250
  %339 = vmatprep.subr.bf16.mxu0 0
  %340 = vmatpush1.bf16.msra.mxu0 %v249
  %341 = vmatprep.subr.bf16.mxu0 0
  %342 = vmatpush1.bf16.msra.mxu0 %v248
  %343 = vmatprep.subr.bf16.mxu0 0
  %344 = vmatpush1.bf16.msra.mxu0 %v247
  %345 = vmatprep.subr.bf16.mxu0 0
  %346 = vmatpush1.bf16.msra.mxu0 %v246
  %347 = vmatprep.subr.bf16.mxu0 0
  %348 = vmatpush1.bf16.msra.mxu0 %v245
  %349 = vmatprep.subr.bf16.mxu0 0
  %350 = vmatpush2.bf16.msra.mxu0 %v260
  %351 = vmatprep.subr.bf16.mxu0 0
  %352 = vmatpush2.bf16.msra.mxu0 %v259
  %353 = vmatprep.subr.bf16.mxu0 0
  %354 = vmatpush2.bf16.msra.mxu0 %v258
  %355 = vmatprep.subr.bf16.mxu0 0
  %356 = vmatpush2.bf16.msra.mxu0 %v257
  %357 = vmatprep.subr.bf16.mxu0 0
  %358 = vmatpush2.bf16.msra.mxu0 %v256
  %359 = vmatprep.subr.bf16.mxu0 0
  %360 = vmatpush2.bf16.msra.mxu0 %v255
  %361 = vmatprep.subr.bf16.mxu0 0
  %362 = vmatpush2.bf16.msra.mxu0 %v254
  %363 = vmatprep.subr.bf16.mxu0 0
  %364 = vmatpush2.bf16.msra.mxu0 %v253
  %365 = vmatprep.mubr.bf16.mxu0 %v96
  %366 = vmatmul.mubr.bf16.gmra.mxu0 %v95
  %v367 = vpop.f32.mrf.mxu0
  %v368 = vadd.f32 %v328, %v367
  %v369 = vpop.f32.mrf.mxu0
  %v370 = vpop.f32.mrf.mxu0
  %v371 = vpop.f32.mrf.mxu0
  %372 = vdwg.mxu0
  %v373 = vadd.f32 %v20, %v368
  %374 = vst [vmem:[#allocation2] sm:$0xff] %v373
  // Predicated region
  $region18: #{convnet_forward.9} parent=0 // pred_check
    %p375 = pneg %p15
  $region19: #{convnet_forward.9} parent=0 // pred_check_branch
    %377 = sbr.rel (%p375) target = $region21
  $region20: #{convnet_forward.9} parent=0 // pred_region
    %v378 = vld [vmem:[#allocation2] sm:$0xff]
    %v379 = vld [vmem:[%s2] sm:$0x1]
    %v381 = vlaneseq
    %v382 = vshrl.u32 %v381, 7
    %v383 = vsub.s32 0, %v382
    %v384 = vrot.slane %v379, %v383
    %v386 = vadd.f32 %v378, %v384
    %387 = vst [vmem:[%s3] sm:$0xff] %v386
  $region21: #{convnet_forward.9} parent=0 // pred_fallthru
    _
  // Predicated region
  $region22: #{convnet_forward.9} parent=0 // pred_check
    _
  $region23: #{convnet_forward.9} parent=0 // pred_check_branch
    %389 = sbr.rel (0) target = $region25
  $region24: #{convnet_forward.9} parent=0 // pred_region
    _
  $region25: #{convnet_forward.9} parent=0 // pred_fallthru
    _
  // Predicated region
  $region26: #{convnet_forward.9} parent=0 // pred_check
    _
  $region27: #{convnet_forward.9} parent=0 // pred_check_branch
    %391 = sbr.rel (0) target = $region29
  $region28: #{convnet_forward.9} parent=0 // pred_region
    _
  $region29: #{convnet_forward.9} parent=0 // pred_fallthru
    _

</llo_original>
